<compile_context>
chip_gen: v7x
topology: tpu7x:2x2x1
jax: 0.10.0
libtpu: 0.0.40
codegen_flags: <defaults>
</compile_context>

<pallas_src>
import functools

import jax
import jax.numpy as jnp
from jax.experimental import pallas as pl
from jax.experimental.pallas import tpu as pltpu

# encoder: ReLU after the first 3 Linears; decoder: ReLU after the first 3 Linears.
RELU_FLAGS = (True, True, True, False, True, True, True, False)


def _ae_fused_kernel(*refs, relu_flags, out_dims):
    """refs = (x, bias_cat, w0_hbm..w7_hbm, o, w0_vmem..w7_vmem, dma_sems)."""
    n = len(relu_flags)
    x_ref = refs[0]
    bias_ref = refs[1]
    w_hbm = refs[2:2 + n]
    o_ref = refs[2 + n]
    w_vmem = refs[3 + n:3 + 2 * n]
    sems = refs[3 + 2 * n]

    copies = [
        pltpu.make_async_copy(w_hbm[i], w_vmem[i], sems.at[i]) for i in range(n)
    ]

    # Depth-2 weight prefetch: layer i's matmul overlaps with DMAs i+1 / i+2.
    depth = min(2, n)
    for i in range(depth):
        copies[i].start()

    h = x_ref[...]                                   # f32 activations
    off = 0
    for i, relu in enumerate(relu_flags):
        copies[i].wait()                             # weight i is now in VMEM
        if i + depth < n:
            copies[i + depth].start()                # keep the pipeline full

        w = w_vmem[i][...]                           # bf16 (in, out)
        n_out = out_dims[i]
        b = bias_ref[:, off:off + n_out]             # f32 (1, n_out), 128-aligned
        off += n_out

        h = jnp.dot(h.astype(w.dtype), w,            # bf16 x bf16 -> f32 acc
                    preferred_element_type=jnp.float32) + b
        if relu:
            h = jnp.maximum(h, 0.0)

    o_ref[...] = h.astype(o_ref.dtype)


def ae_forward(x, params):
    """Full AE forward (encoder + decoder) as a single fused Pallas kernel.

    params: list of (w, b) with w shaped (in, out) (bf16 recommended), b (out,) f32.
    """
    relu_flags = RELU_FLAGS
    assert len(params) == len(relu_flags)

    B = x.shape[0]
    out_dims = tuple(int(w.shape[1]) for w, _ in params)
    out_dim = out_dims[-1]

    weights = [w for w, _ in params]
    # Single concatenated bias input (1, sum(out_dims)); offsets are multiples of 128.
    bias_cat = jnp.concatenate(
        [b.reshape(1, -1).astype(jnp.float32) for _, b in params], axis=1)

    vmem_spec = pl.BlockSpec(memory_space=pltpu.MemorySpace.VMEM)
    any_spec = pl.BlockSpec(memory_space=pl.ANY)     # weights stay in HBM; manual DMA

    kernel = functools.partial(
        _ae_fused_kernel, relu_flags=relu_flags, out_dims=out_dims)

    return pl.pallas_call(
        kernel,
        out_shape=jax.ShapeDtypeStruct((B, out_dim), x.dtype),
        in_specs=[vmem_spec, vmem_spec] + [any_spec] * len(weights),
        out_specs=vmem_spec,
        scratch_shapes=(
            [pltpu.VMEM(w.shape, w.dtype) for w in weights]       # per-layer weight slabs
            + [pltpu.SemaphoreType.DMA((len(weights),))]          # one DMA sem per layer
        ),
        compiler_params=pltpu.CompilerParams(
            vmem_limit_bytes=24 * 1024 * 1024,  # ~7 MiB actual; safe on v7x's 64 MiB VMEM
        ),
    )(x, bias_cat, *weights)


def init_ae_params(key, input_dim: int, embedding_dim: int,
                   weight_dtype=jnp.bfloat16):
    """Deterministic init of all 8 Linear layers (weights stored as (in, out))."""
    dims = [
        # encoder
        (input_dim, 512),
        (512, 512),
        (512, 2048),
        (2048, embedding_dim),
        # decoder
        (embedding_dim, 2048),
        (2048, 512),
        (512, 512),
        (512, input_dim),
    ]
    params = []
    for i, (fan_in, fan_out) in enumerate(dims):
        kw, kb = jax.random.split(jax.random.fold_in(key, i))
        bound = 1.0 / jnp.sqrt(fan_in)  # matches torch.nn.Linear default init range
        w = jax.random.uniform(kw, (fan_in, fan_out), jnp.float32, -bound, bound)
        b = jax.random.uniform(kb, (fan_out,), jnp.float32, -bound, bound)
        params.append((w.astype(weight_dtype), b))
    return params


if __name__ == "__main__":
    key = jax.random.PRNGKey(0)
    batch = 8            # matches the f32 sublane width; keeps (B, N) blocks aligned
    input_dim = 256
    embedding_dim = 128

    kx, kp = jax.random.split(key)
    x = jax.random.normal(kx, (batch, input_dim), jnp.float32)
    params = init_ae_params(kp, input_dim, embedding_dim, weight_dtype=jnp.bfloat16)

    out = jax.jit(ae_forward)(x, params)
    out = jax.block_until_ready(out)

    assert out.shape == (batch, input_dim)
    assert out.dtype == jnp.float32

    # Pure-JAX reference using the same mixed precision (bf16 weights/activations
    # into the dot, f32 accumulation + f32 bias/ReLU) as the kernel.
    ref = x
    for (w, b), relu in zip(params, RELU_FLAGS):
        ref = jnp.dot(ref.astype(w.dtype), w,
                      preferred_element_type=jnp.float32) + b.astype(jnp.float32)
        if relu:
            ref = jnp.maximum(ref, 0.0)
    assert jnp.allclose(out, ref, atol=1e-2, rtol=1e-2)

    print("KERNEL_OK")
</pallas_src>

<mosaic_0001>
module attributes {stable_mosaic.version = 11 : i64} {
  func.func @_ae_fused_kernel(%arg0: memref<8x256xf32, #tpu.memory_space<vmem>>, %arg1: memref<1x6528xf32, #tpu.memory_space<vmem>>, %arg2: memref<256x512xbf16, #tpu.memory_space<any>>, %arg3: memref<512x512xbf16, #tpu.memory_space<any>>, %arg4: memref<512x2048xbf16, #tpu.memory_space<any>>, %arg5: memref<2048x128xbf16, #tpu.memory_space<any>>, %arg6: memref<128x2048xbf16, #tpu.memory_space<any>>, %arg7: memref<2048x512xbf16, #tpu.memory_space<any>>, %arg8: memref<512x512xbf16, #tpu.memory_space<any>>, %arg9: memref<512x256xbf16, #tpu.memory_space<any>>, %arg10: memref<8x256xf32, #tpu.memory_space<vmem>>, %arg11: memref<256x512xbf16, #tpu.memory_space<vmem>>, %arg12: memref<512x512xbf16, #tpu.memory_space<vmem>>, %arg13: memref<512x2048xbf16, #tpu.memory_space<vmem>>, %arg14: memref<2048x128xbf16, #tpu.memory_space<vmem>>, %arg15: memref<128x2048xbf16, #tpu.memory_space<vmem>>, %arg16: memref<2048x512xbf16, #tpu.memory_space<vmem>>, %arg17: memref<512x512xbf16, #tpu.memory_space<vmem>>, %arg18: memref<512x256xbf16, #tpu.memory_space<vmem>>, %arg19: memref<8x!tpu.dma_semaphore, #tpu.memory_space<semaphore_mem>>) attributes {dimension_semantics = [], scalar_prefetch = 0 : i64, scratch_operands = 9 : i64, tpu.core_type = #tpu.core_type<tc>} {
    %c0_i32 = arith.constant 0 : i32
    %0 = tpu.memref_slice %arg19[%c0_i32] : memref<8x!tpu.dma_semaphore, #tpu.memory_space<semaphore_mem>> -> memref<1x!tpu.dma_semaphore, #tpu.memory_space<semaphore_mem>>
    %1 = tpu.memref_squeeze %0 : memref<1x!tpu.dma_semaphore, #tpu.memory_space<semaphore_mem>> -> memref<!tpu.dma_semaphore, #tpu.memory_space<semaphore_mem>>
    tpu.enqueue_dma source(%arg2 : memref<256x512xbf16, #tpu.memory_space<any>>) target(%arg11 : memref<256x512xbf16, #tpu.memory_space<vmem>>) target_semaphore(%1 : memref<!tpu.dma_semaphore, #tpu.memory_space<semaphore_mem>>)
    %c1_i32 = arith.constant 1 : i32
    %2 = tpu.memref_slice %arg19[%c1_i32] : memref<8x!tpu.dma_semaphore, #tpu.memory_space<semaphore_mem>> -> memref<1x!tpu.dma_semaphore, #tpu.memory_space<semaphore_mem>>
    %3 = tpu.memref_squeeze %2 : memref<1x!tpu.dma_semaphore, #tpu.memory_space<semaphore_mem>> -> memref<!tpu.dma_semaphore, #tpu.memory_space<semaphore_mem>>
    tpu.enqueue_dma source(%arg3 : memref<512x512xbf16, #tpu.memory_space<any>>) target(%arg12 : memref<512x512xbf16, #tpu.memory_space<vmem>>) target_semaphore(%3 : memref<!tpu.dma_semaphore, #tpu.memory_space<semaphore_mem>>)
    %c0 = arith.constant 0 : index
    %c0_0 = arith.constant 0 : index
    %4 = vector.load %arg0[%c0, %c0_0] : memref<8x256xf32, #tpu.memory_space<vmem>>, vector<8x256xf32>
    %c0_i32_1 = arith.constant 0 : i32
    %5 = tpu.memref_slice %arg19[%c0_i32_1] : memref<8x!tpu.dma_semaphore, #tpu.memory_space<semaphore_mem>> -> memref<1x!tpu.dma_semaphore, #tpu.memory_space<semaphore_mem>>
    %6 = tpu.memref_squeeze %5 : memref<1x!tpu.dma_semaphore, #tpu.memory_space<semaphore_mem>> -> memref<!tpu.dma_semaphore, #tpu.memory_space<semaphore_mem>>
    tpu.wait_dma2 semaphore(%6 : memref<!tpu.dma_semaphore, #tpu.memory_space<semaphore_mem>>) src(%arg2 : memref<256x512xbf16, #tpu.memory_space<any>>) dst(%arg11 : memref<256x512xbf16, #tpu.memory_space<vmem>>)
    %c2_i32 = arith.constant 2 : i32
    %7 = tpu.memref_slice %arg19[%c2_i32] : memref<8x!tpu.dma_semaphore, #tpu.memory_space<semaphore_mem>> -> memref<1x!tpu.dma_semaphore, #tpu.memory_space<semaphore_mem>>
    %8 = tpu.memref_squeeze %7 : memref<1x!tpu.dma_semaphore, #tpu.memory_space<semaphore_mem>> -> memref<!tpu.dma_semaphore, #tpu.memory_space<semaphore_mem>>
    tpu.enqueue_dma source(%arg4 : memref<512x2048xbf16, #tpu.memory_space<any>>) target(%arg13 : memref<512x2048xbf16, #tpu.memory_space<vmem>>) target_semaphore(%8 : memref<!tpu.dma_semaphore, #tpu.memory_space<semaphore_mem>>)
    %c0_2 = arith.constant 0 : index
    %c0_3 = arith.constant 0 : index
    %9 = vector.load %arg11[%c0_2, %c0_3] : memref<256x512xbf16, #tpu.memory_space<vmem>>, vector<256x512xbf16>
    %c0_4 = arith.constant 0 : index
    %c0_5 = arith.constant 0 : index
    %10 = vector.load %arg1[%c0_4, %c0_5] : memref<1x6528xf32, #tpu.memory_space<vmem>>, vector<1x512xf32>
    %11 = arith.truncf %4 : vector<8x256xf32> to vector<8x256xbf16>
    %cst = arith.constant dense<0.000000e+00> : vector<8x512xf32>
    %12 = tpu.matmul %11, %9, %cst {dimension_numbers = #tpu.dot_dimension_numbers<[1], [0], [0], [1], [0, 0, 1, 1], [], []>} : vector<8x256xbf16>, vector<256x512xbf16>, vector<8x512xf32> -> vector<8x512xf32>
    %13 = vector.broadcast %10 : vector<1x512xf32> to vector<8x512xf32>
    %14 = arith.addf %12, %13 : vector<8x512xf32>
    %cst_6 = arith.constant 0.000000e+00 : f32
    %15 = vector.broadcast %cst_6 : f32 to vector<8x512xf32>
    %16 = arith.maximumf %14, %15 : vector<8x512xf32>
    %c1_i32_7 = arith.constant 1 : i32
    %17 = tpu.memref_slice %arg19[%c1_i32_7] : memref<8x!tpu.dma_semaphore, #tpu.memory_space<semaphore_mem>> -> memref<1x!tpu.dma_semaphore, #tpu.memory_space<semaphore_mem>>
    %18 = tpu.memref_squeeze %17 : memref<1x!tpu.dma_semaphore, #tpu.memory_space<semaphore_mem>> -> memref<!tpu.dma_semaphore, #tpu.memory_space<semaphore_mem>>
    tpu.wait_dma2 semaphore(%18 : memref<!tpu.dma_semaphore, #tpu.memory_space<semaphore_mem>>) src(%arg3 : memref<512x512xbf16, #tpu.memory_space<any>>) dst(%arg12 : memref<512x512xbf16, #tpu.memory_space<vmem>>)
    %c3_i32 = arith.constant 3 : i32
    %19 = tpu.memref_slice %arg19[%c3_i32] : memref<8x!tpu.dma_semaphore, #tpu.memory_space<semaphore_mem>> -> memref<1x!tpu.dma_semaphore, #tpu.memory_space<semaphore_mem>>
    %20 = tpu.memref_squeeze %19 : memref<1x!tpu.dma_semaphore, #tpu.memory_space<semaphore_mem>> -> memref<!tpu.dma_semaphore, #tpu.memory_space<semaphore_mem>>
    tpu.enqueue_dma source(%arg5 : memref<2048x128xbf16, #tpu.memory_space<any>>) target(%arg14 : memref<2048x128xbf16, #tpu.memory_space<vmem>>) target_semaphore(%20 : memref<!tpu.dma_semaphore, #tpu.memory_space<semaphore_mem>>)
    %c0_8 = arith.constant 0 : index
    %c0_9 = arith.constant 0 : index
    %21 = vector.load %arg12[%c0_8, %c0_9] : memref<512x512xbf16, #tpu.memory_space<vmem>>, vector<512x512xbf16>
    %c0_10 = arith.constant 0 : index
    %c512 = arith.constant 512 : index
    %22 = vector.load %arg1[%c0_10, %c512] : memref<1x6528xf32, #tpu.memory_space<vmem>>, vector<1x512xf32>
    %23 = arith.truncf %16 : vector<8x512xf32> to vector<8x512xbf16>
    %cst_11 = arith.constant dense<0.000000e+00> : vector<8x512xf32>
    %24 = tpu.matmul %23, %21, %cst_11 {dimension_numbers = #tpu.dot_dimension_numbers<[1], [0], [0], [1], [0, 0, 1, 1], [], []>} : vector<8x512xbf16>, vector<512x512xbf16>, vector<8x512xf32> -> vector<8x512xf32>
    %25 = vector.broadcast %22 : vector<1x512xf32> to vector<8x512xf32>
    %26 = arith.addf %24, %25 : vector<8x512xf32>
    %cst_12 = arith.constant 0.000000e+00 : f32
    %27 = vector.broadcast %cst_12 : f32 to vector<8x512xf32>
    %28 = arith.maximumf %26, %27 : vector<8x512xf32>
    %c2_i32_13 = arith.constant 2 : i32
    %29 = tpu.memref_slice %arg19[%c2_i32_13] : memref<8x!tpu.dma_semaphore, #tpu.memory_space<semaphore_mem>> -> memref<1x!tpu.dma_semaphore, #tpu.memory_space<semaphore_mem>>
    %30 = tpu.memref_squeeze %29 : memref<1x!tpu.dma_semaphore, #tpu.memory_space<semaphore_mem>> -> memref<!tpu.dma_semaphore, #tpu.memory_space<semaphore_mem>>
    tpu.wait_dma2 semaphore(%30 : memref<!tpu.dma_semaphore, #tpu.memory_space<semaphore_mem>>) src(%arg4 : memref<512x2048xbf16, #tpu.memory_space<any>>) dst(%arg13 : memref<512x2048xbf16, #tpu.memory_space<vmem>>)
    %c4_i32 = arith.constant 4 : i32
    %31 = tpu.memref_slice %arg19[%c4_i32] : memref<8x!tpu.dma_semaphore, #tpu.memory_space<semaphore_mem>> -> memref<1x!tpu.dma_semaphore, #tpu.memory_space<semaphore_mem>>
    %32 = tpu.memref_squeeze %31 : memref<1x!tpu.dma_semaphore, #tpu.memory_space<semaphore_mem>> -> memref<!tpu.dma_semaphore, #tpu.memory_space<semaphore_mem>>
    tpu.enqueue_dma source(%arg6 : memref<128x2048xbf16, #tpu.memory_space<any>>) target(%arg15 : memref<128x2048xbf16, #tpu.memory_space<vmem>>) target_semaphore(%32 : memref<!tpu.dma_semaphore, #tpu.memory_space<semaphore_mem>>)
    %c0_14 = arith.constant 0 : index
    %c0_15 = arith.constant 0 : index
    %33 = vector.load %arg13[%c0_14, %c0_15] : memref<512x2048xbf16, #tpu.memory_space<vmem>>, vector<512x2048xbf16>
    %c0_16 = arith.constant 0 : index
    %c1024 = arith.constant 1024 : index
    %34 = vector.load %arg1[%c0_16, %c1024] : memref<1x6528xf32, #tpu.memory_space<vmem>>, vector<1x2048xf32>
    %35 = arith.truncf %28 : vector<8x512xf32> to vector<8x512xbf16>
    %cst_17 = arith.constant dense<0.000000e+00> : vector<8x2048xf32>
    %36 = tpu.matmul %35, %33, %cst_17 {dimension_numbers = #tpu.dot_dimension_numbers<[1], [0], [0], [1], [0, 0, 1, 1], [], []>} : vector<8x512xbf16>, vector<512x2048xbf16>, vector<8x2048xf32> -> vector<8x2048xf32>
    %37 = vector.broadcast %34 : vector<1x2048xf32> to vector<8x2048xf32>
    %38 = arith.addf %36, %37 : vector<8x2048xf32>
    %cst_18 = arith.constant 0.000000e+00 : f32
    %39 = vector.broadcast %cst_18 : f32 to vector<8x2048xf32>
    %40 = arith.maximumf %38, %39 : vector<8x2048xf32>
    %c3_i32_19 = arith.constant 3 : i32
    %41 = tpu.memref_slice %arg19[%c3_i32_19] : memref<8x!tpu.dma_semaphore, #tpu.memory_space<semaphore_mem>> -> memref<1x!tpu.dma_semaphore, #tpu.memory_space<semaphore_mem>>
    %42 = tpu.memref_squeeze %41 : memref<1x!tpu.dma_semaphore, #tpu.memory_space<semaphore_mem>> -> memref<!tpu.dma_semaphore, #tpu.memory_space<semaphore_mem>>
    tpu.wait_dma2 semaphore(%42 : memref<!tpu.dma_semaphore, #tpu.memory_space<semaphore_mem>>) src(%arg5 : memref<2048x128xbf16, #tpu.memory_space<any>>) dst(%arg14 : memref<2048x128xbf16, #tpu.memory_space<vmem>>)
    %c5_i32 = arith.constant 5 : i32
    %43 = tpu.memref_slice %arg19[%c5_i32] : memref<8x!tpu.dma_semaphore, #tpu.memory_space<semaphore_mem>> -> memref<1x!tpu.dma_semaphore, #tpu.memory_space<semaphore_mem>>
    %44 = tpu.memref_squeeze %43 : memref<1x!tpu.dma_semaphore, #tpu.memory_space<semaphore_mem>> -> memref<!tpu.dma_semaphore, #tpu.memory_space<semaphore_mem>>
    tpu.enqueue_dma source(%arg7 : memref<2048x512xbf16, #tpu.memory_space<any>>) target(%arg16 : memref<2048x512xbf16, #tpu.memory_space<vmem>>) target_semaphore(%44 : memref<!tpu.dma_semaphore, #tpu.memory_space<semaphore_mem>>)
    %c0_20 = arith.constant 0 : index
    %c0_21 = arith.constant 0 : index
    %45 = vector.load %arg14[%c0_20, %c0_21] : memref<2048x128xbf16, #tpu.memory_space<vmem>>, vector<2048x128xbf16>
    %c0_22 = arith.constant 0 : index
    %c3072 = arith.constant 3072 : index
    %46 = vector.load %arg1[%c0_22, %c3072] : memref<1x6528xf32, #tpu.memory_space<vmem>>, vector<1x128xf32>
    %47 = arith.truncf %40 : vector<8x2048xf32> to vector<8x2048xbf16>
    %cst_23 = arith.constant dense<0.000000e+00> : vector<8x128xf32>
    %48 = tpu.matmul %47, %45, %cst_23 {dimension_numbers = #tpu.dot_dimension_numbers<[1], [0], [0], [1], [0, 0, 1, 1], [], []>} : vector<8x2048xbf16>, vector<2048x128xbf16>, vector<8x128xf32> -> vector<8x128xf32>
    %49 = vector.broadcast %46 : vector<1x128xf32> to vector<8x128xf32>
    %50 = arith.addf %48, %49 : vector<8x128xf32>
    %c4_i32_24 = arith.constant 4 : i32
    %51 = tpu.memref_slice %arg19[%c4_i32_24] : memref<8x!tpu.dma_semaphore, #tpu.memory_space<semaphore_mem>> -> memref<1x!tpu.dma_semaphore, #tpu.memory_space<semaphore_mem>>
    %52 = tpu.memref_squeeze %51 : memref<1x!tpu.dma_semaphore, #tpu.memory_space<semaphore_mem>> -> memref<!tpu.dma_semaphore, #tpu.memory_space<semaphore_mem>>
    tpu.wait_dma2 semaphore(%52 : memref<!tpu.dma_semaphore, #tpu.memory_space<semaphore_mem>>) src(%arg6 : memref<128x2048xbf16, #tpu.memory_space<any>>) dst(%arg15 : memref<128x2048xbf16, #tpu.memory_space<vmem>>)
    %c6_i32 = arith.constant 6 : i32
    %53 = tpu.memref_slice %arg19[%c6_i32] : memref<8x!tpu.dma_semaphore, #tpu.memory_space<semaphore_mem>> -> memref<1x!tpu.dma_semaphore, #tpu.memory_space<semaphore_mem>>
    %54 = tpu.memref_squeeze %53 : memref<1x!tpu.dma_semaphore, #tpu.memory_space<semaphore_mem>> -> memref<!tpu.dma_semaphore, #tpu.memory_space<semaphore_mem>>
    tpu.enqueue_dma source(%arg8 : memref<512x512xbf16, #tpu.memory_space<any>>) target(%arg17 : memref<512x512xbf16, #tpu.memory_space<vmem>>) target_semaphore(%54 : memref<!tpu.dma_semaphore, #tpu.memory_space<semaphore_mem>>)
    %c0_25 = arith.constant 0 : index
    %c0_26 = arith.constant 0 : index
    %55 = vector.load %arg15[%c0_25, %c0_26] : memref<128x2048xbf16, #tpu.memory_space<vmem>>, vector<128x2048xbf16>
    %c0_27 = arith.constant 0 : index
    %c3200 = arith.constant 3200 : index
    %56 = vector.load %arg1[%c0_27, %c3200] : memref<1x6528xf32, #tpu.memory_space<vmem>>, vector<1x2048xf32>
    %57 = arith.truncf %50 : vector<8x128xf32> to vector<8x128xbf16>
    %cst_28 = arith.constant dense<0.000000e+00> : vector<8x2048xf32>
    %58 = tpu.matmul %57, %55, %cst_28 {dimension_numbers = #tpu.dot_dimension_numbers<[1], [0], [0], [1], [0, 0, 1, 1], [], []>} : vector<8x128xbf16>, vector<128x2048xbf16>, vector<8x2048xf32> -> vector<8x2048xf32>
    %59 = vector.broadcast %56 : vector<1x2048xf32> to vector<8x2048xf32>
    %60 = arith.addf %58, %59 : vector<8x2048xf32>
    %cst_29 = arith.constant 0.000000e+00 : f32
    %61 = vector.broadcast %cst_29 : f32 to vector<8x2048xf32>
    %62 = arith.maximumf %60, %61 : vector<8x2048xf32>
    %c5_i32_30 = arith.constant 5 : i32
    %63 = tpu.memref_slice %arg19[%c5_i32_30] : memref<8x!tpu.dma_semaphore, #tpu.memory_space<semaphore_mem>> -> memref<1x!tpu.dma_semaphore, #tpu.memory_space<semaphore_mem>>
    %64 = tpu.memref_squeeze %63 : memref<1x!tpu.dma_semaphore, #tpu.memory_space<semaphore_mem>> -> memref<!tpu.dma_semaphore, #tpu.memory_space<semaphore_mem>>
    tpu.wait_dma2 semaphore(%64 : memref<!tpu.dma_semaphore, #tpu.memory_space<semaphore_mem>>) src(%arg7 : memref<2048x512xbf16, #tpu.memory_space<any>>) dst(%arg16 : memref<2048x512xbf16, #tpu.memory_space<vmem>>)
    %c7_i32 = arith.constant 7 : i32
    %65 = tpu.memref_slice %arg19[%c7_i32] : memref<8x!tpu.dma_semaphore, #tpu.memory_space<semaphore_mem>> -> memref<1x!tpu.dma_semaphore, #tpu.memory_space<semaphore_mem>>
    %66 = tpu.memref_squeeze %65 : memref<1x!tpu.dma_semaphore, #tpu.memory_space<semaphore_mem>> -> memref<!tpu.dma_semaphore, #tpu.memory_space<semaphore_mem>>
    tpu.enqueue_dma source(%arg9 : memref<512x256xbf16, #tpu.memory_space<any>>) target(%arg18 : memref<512x256xbf16, #tpu.memory_space<vmem>>) target_semaphore(%66 : memref<!tpu.dma_semaphore, #tpu.memory_space<semaphore_mem>>)
    %c0_31 = arith.constant 0 : index
    %c0_32 = arith.constant 0 : index
    %67 = vector.load %arg16[%c0_31, %c0_32] : memref<2048x512xbf16, #tpu.memory_space<vmem>>, vector<2048x512xbf16>
    %c0_33 = arith.constant 0 : index
    %c5248 = arith.constant 5248 : index
    %68 = vector.load %arg1[%c0_33, %c5248] : memref<1x6528xf32, #tpu.memory_space<vmem>>, vector<1x512xf32>
    %69 = arith.truncf %62 : vector<8x2048xf32> to vector<8x2048xbf16>
    %cst_34 = arith.constant dense<0.000000e+00> : vector<8x512xf32>
    %70 = tpu.matmul %69, %67, %cst_34 {dimension_numbers = #tpu.dot_dimension_numbers<[1], [0], [0], [1], [0, 0, 1, 1], [], []>} : vector<8x2048xbf16>, vector<2048x512xbf16>, vector<8x512xf32> -> vector<8x512xf32>
    %71 = vector.broadcast %68 : vector<1x512xf32> to vector<8x512xf32>
    %72 = arith.addf %70, %71 : vector<8x512xf32>
    %cst_35 = arith.constant 0.000000e+00 : f32
    %73 = vector.broadcast %cst_35 : f32 to vector<8x512xf32>
    %74 = arith.maximumf %72, %73 : vector<8x512xf32>
    %c6_i32_36 = arith.constant 6 : i32
    %75 = tpu.memref_slice %arg19[%c6_i32_36] : memref<8x!tpu.dma_semaphore, #tpu.memory_space<semaphore_mem>> -> memref<1x!tpu.dma_semaphore, #tpu.memory_space<semaphore_mem>>
    %76 = tpu.memref_squeeze %75 : memref<1x!tpu.dma_semaphore, #tpu.memory_space<semaphore_mem>> -> memref<!tpu.dma_semaphore, #tpu.memory_space<semaphore_mem>>
    tpu.wait_dma2 semaphore(%76 : memref<!tpu.dma_semaphore, #tpu.memory_space<semaphore_mem>>) src(%arg8 : memref<512x512xbf16, #tpu.memory_space<any>>) dst(%arg17 : memref<512x512xbf16, #tpu.memory_space<vmem>>)
    %c0_37 = arith.constant 0 : index
    %c0_38 = arith.constant 0 : index
    %77 = vector.load %arg17[%c0_37, %c0_38] : memref<512x512xbf16, #tpu.memory_space<vmem>>, vector<512x512xbf16>
    %c0_39 = arith.constant 0 : index
    %c5760 = arith.constant 5760 : index
    %78 = vector.load %arg1[%c0_39, %c5760] : memref<1x6528xf32, #tpu.memory_space<vmem>>, vector<1x512xf32>
    %79 = arith.truncf %74 : vector<8x512xf32> to vector<8x512xbf16>
    %cst_40 = arith.constant dense<0.000000e+00> : vector<8x512xf32>
    %80 = tpu.matmul %79, %77, %cst_40 {dimension_numbers = #tpu.dot_dimension_numbers<[1], [0], [0], [1], [0, 0, 1, 1], [], []>} : vector<8x512xbf16>, vector<512x512xbf16>, vector<8x512xf32> -> vector<8x512xf32>
    %81 = vector.broadcast %78 : vector<1x512xf32> to vector<8x512xf32>
    %82 = arith.addf %80, %81 : vector<8x512xf32>
    %cst_41 = arith.constant 0.000000e+00 : f32
    %83 = vector.broadcast %cst_41 : f32 to vector<8x512xf32>
    %84 = arith.maximumf %82, %83 : vector<8x512xf32>
    %c7_i32_42 = arith.constant 7 : i32
    %85 = tpu.memref_slice %arg19[%c7_i32_42] : memref<8x!tpu.dma_semaphore, #tpu.memory_space<semaphore_mem>> -> memref<1x!tpu.dma_semaphore, #tpu.memory_space<semaphore_mem>>
    %86 = tpu.memref_squeeze %85 : memref<1x!tpu.dma_semaphore, #tpu.memory_space<semaphore_mem>> -> memref<!tpu.dma_semaphore, #tpu.memory_space<semaphore_mem>>
    tpu.wait_dma2 semaphore(%86 : memref<!tpu.dma_semaphore, #tpu.memory_space<semaphore_mem>>) src(%arg9 : memref<512x256xbf16, #tpu.memory_space<any>>) dst(%arg18 : memref<512x256xbf16, #tpu.memory_space<vmem>>)
    %c0_43 = arith.constant 0 : index
    %c0_44 = arith.constant 0 : index
    %87 = vector.load %arg18[%c0_43, %c0_44] : memref<512x256xbf16, #tpu.memory_space<vmem>>, vector<512x256xbf16>
    %c0_45 = arith.constant 0 : index
    %c6272 = arith.constant 6272 : index
    %88 = vector.load %arg1[%c0_45, %c6272] : memref<1x6528xf32, #tpu.memory_space<vmem>>, vector<1x256xf32>
    %89 = arith.truncf %84 : vector<8x512xf32> to vector<8x512xbf16>
    %cst_46 = arith.constant dense<0.000000e+00> : vector<8x256xf32>
    %90 = tpu.matmul %89, %87, %cst_46 {dimension_numbers = #tpu.dot_dimension_numbers<[1], [0], [0], [1], [0, 0, 1, 1], [], []>} : vector<8x512xbf16>, vector<512x256xbf16>, vector<8x256xf32> -> vector<8x256xf32>
    %91 = vector.broadcast %88 : vector<1x256xf32> to vector<8x256xf32>
    %92 = arith.addf %90, %91 : vector<8x256xf32>
    %c0_47 = arith.constant 0 : index
    %c0_48 = arith.constant 0 : index
    %93 = vector.load %arg10[%c0_47, %c0_48] : memref<8x256xf32, #tpu.memory_space<vmem>>, vector<8x256xf32>
    tpu.vector_store %arg10[%c0_47, %c0_48], %92 {strides = array<i32>} : memref<8x256xf32, #tpu.memory_space<vmem>>, vector<8x256xf32>,
    return
  }
}

</mosaic_0001>

<llo_original>
// kernel: ae_forward.1
$region0: #{ae_forward.1}
  #allocation0 [shape = 'u32[]', space=smem, size = 0x4, offset = 0x4, fixed_abs, tag = 'smem constant byte address 0x4 - core index']
  #allocation1 [shape = 'u32[144,128]{1,0:T(1,128)}', space=vmem, size = 0x12000, scoped, tag = 'internal scratch']
  #allocation2 [shape = 'bf16[256,512]{1,0:T(16,128)(2,1)}', space=vmem, size = 0x40000, scoped, tag = 'scratch operand']
  #allocation3 [shape = 'bf16[512,512]{1,0:T(16,128)(2,1)}', space=vmem, size = 0x80000, scoped, tag = 'scratch operand']
  #allocation4 [shape = 'bf16[512,2048]{1,0:T(16,128)(2,1)}', space=vmem, size = 0x200000, scoped, tag = 'scratch operand']
  #allocation5 [shape = 'bf16[2048,128]{1,0:T(16,128)(2,1)}', space=vmem, size = 0x80000, scoped, tag = 'scratch operand']
  #allocation6 [shape = 'bf16[128,2048]{1,0:T(16,128)(2,1)}', space=vmem, size = 0x80000, scoped, tag = 'scratch operand']
  #allocation7 [shape = 'bf16[2048,512]{1,0:T(16,128)(2,1)}', space=vmem, size = 0x200000, scoped, tag = 'scratch operand']
  #allocation8 [shape = 'bf16[512,512]{1,0:T(16,128)(2,1)}', space=vmem, size = 0x80000, scoped, tag = 'scratch operand']
  #allocation9 [shape = 'bf16[512,256]{1,0:T(16,128)(2,1)}', space=vmem, size = 0x40000, scoped, tag = 'scratch operand']
  #allocation10 [shape = 's32[8]{0}', space=sflag, size = 0x20, scoped, tag = 'scratch operand']
  #allocation15 [shape = 's32[]', space=sflag, size = 0x4, offset = 0, fixed_abs, tag = 'sflag constant byte address 0x0 - dummy sync flag']
  #allocation17 [shape = 's32[]', space=sflag, size = 0x4, offset = 0, fixed_abs, tag = 'sflag constant byte address 0x0 - dummy sync flag']
  #allocation19 [shape = 's32[]', space=sflag, size = 0x4, offset = 0, fixed_abs, tag = 'sflag constant byte address 0x0 - dummy sync flag']
  #allocation21 [shape = 's32[]', space=sflag, size = 0x4, offset = 0, fixed_abs, tag = 'sflag constant byte address 0x0 - dummy sync flag']
  #allocation22 [shape = 's32[]', space=sflag, size = 0x4, offset = 0, fixed_abs, tag = 'sflag constant byte address 0x0 - dummy sync flag']
  #allocation23 [shape = 'u32[]', space=smem, size = 0x4, offset = 0x44, fixed_abs, tag = 'smem constant byte address 0x44 - assertion arg 0']
  #allocation24 [shape = 'u32[]', space=smem, size = 0x4, offset = 0x48, fixed_abs, tag = 'smem constant byte address 0x48 - assertion arg 1']
  #allocation25 [shape = 's32[]', space=sflag, size = 0x4, offset = 0, fixed_abs, tag = 'sflag constant byte address 0x0 - dummy sync flag']
  #allocation27 [shape = 's32[]', space=sflag, size = 0x4, offset = 0, fixed_abs, tag = 'sflag constant byte address 0x0 - dummy sync flag']
  #allocation29 [shape = 's32[]', space=sflag, size = 0x4, offset = 0, fixed_abs, tag = 'sflag constant byte address 0x0 - dummy sync flag']
  #allocation31 [shape = 's32[]', space=sflag, size = 0x4, offset = 0, fixed_abs, tag = 'sflag constant byte address 0x0 - dummy sync flag']
  %s0 = inlined_call_operand.hbm [shape: f32[8,256], index: 0, kind: input, shape index: {}]
  %s1 = inlined_call_operand.vmem [shape: f32[1,6528], index: 1, kind: input, shape index: {}]
  %s2 = inlined_call_operand.hbm [shape: bf16[256,512], index: 2, kind: input, shape index: {}]
  %s3 = inlined_call_operand.hbm [shape: bf16[512,512], index: 3, kind: input, shape index: {}]
  %s4 = inlined_call_operand.hbm [shape: bf16[512,2048], index: 4, kind: input, shape index: {}]
  %s5 = inlined_call_operand.hbm [shape: bf16[2048,128], index: 5, kind: input, shape index: {}]
  %s6 = inlined_call_operand.hbm [shape: bf16[128,2048], index: 6, kind: input, shape index: {}]
  %s7 = inlined_call_operand.hbm [shape: bf16[2048,512], index: 7, kind: input, shape index: {}]
  %s8 = inlined_call_operand.hbm [shape: bf16[512,512], index: 8, kind: input, shape index: {}]
  %s9 = inlined_call_operand.hbm [shape: bf16[512,256], index: 9, kind: input, shape index: {}]
  %s10 = inlined_call_operand.hbm [shape: f32[8,256], index: 10, kind: output, shape index: {}]
  %s11 = sld [smem:[#allocation0]]
  $region26: #{ae_forward.1} parent=0
    _
  %s13 = ssub.s32 1, %s11
  %s14 = scalar_select 0, %s13, %s11
  $region1: #{ae_forward.1} parent=0
    #allocation11 [shape = 'u8[8192]{0}', space=vmem, size = 0x2000, scoped, tag = 'input window, operand 0, single buffered']
    #allocation12 [shape = 's32[1]{0}', space=sflag, size = 0x4, scoped, tag = 'scoped memory for ae_forward.1']
    #allocation13 [shape = 's32[1]{0}', space=sflag, size = 0x4, scoped, tag = 'scoped memory for ae_forward.1']
    #allocation14 [shape = 'u8[8192]{0}', space=vmem, size = 0x2000, scoped, tag = 'output window, operand 0, single buffered']
    #allocation16 [shape = 'u32[9]{0}', space=smem, size = 0x24, scoped, tag = 'DMA stride descriptor']
    #allocation18 [shape = 'u32[9]{0}', space=smem, size = 0x24, scoped, tag = 'DMA stride descriptor']
    #allocation20 [shape = 'u32[9]{0}', space=smem, size = 0x24, scoped, tag = 'DMA stride descriptor']
    #allocation26 [shape = 'u32[9]{0}', space=smem, size = 0x24, scoped, tag = 'DMA stride descriptor']
    #allocation28 [shape = 'u32[9]{0}', space=smem, size = 0x24, scoped, tag = 'DMA stride descriptor']
    #allocation30 [shape = 'u32[9]{0}', space=smem, size = 0x24, scoped, tag = 'DMA stride descriptor']
    #allocation32 [shape = 'u32[9]{0}', space=smem, size = 0x24, scoped, tag = 'DMA stride descriptor']
    %15 = vsyncpa [#allocation12], 0
    %16 = vsyncpa [#allocation13], 0
    // Predicated region
    $region2: #{ae_forward.1} parent=1 // pred_check
      _
    $region3: #{ae_forward.1} parent=1 // pred_check_branch
      %18 = sbr.rel (0) target = $region5
    $region4: #{ae_forward.1} parent=1 // pred_region
      %s20 = ssub.s32 256, 256
      %21 = vsyncadd [#allocation12], %s20
      %s23 = sshll.u32 [#allocation11], 4
      %s24 = int_to_ptr.vmem [resolvable:$true] %s23
      %26 = dma.hbm_to_vmem [thread:$0]  %s0, 256, %s24, [#allocation12]
    $region5: #{ae_forward.1} parent=1 // pred_fallthru
      _
    // Predicated region
    $region6: #{ae_forward.1} parent=1 // pred_check
      _
    $region7: #{ae_forward.1} parent=1 // pred_check_branch
      %28 = sbr.rel (0) target = $region9
    $region8: #{ae_forward.1} parent=1 // pred_region
      _
    $region9: #{ae_forward.1} parent=1 // pred_fallthru
      _
    // Predicated region
    $region10: #{ae_forward.1} parent=1 // pred_check
      _
    $region11: #{ae_forward.1} parent=1 // pred_check_branch
      %30 = sbr.rel (0) target = $region13
    $region12: #{ae_forward.1} parent=1 // pred_region
      %31 = dma.done [#allocation12], 256
    $region13: #{ae_forward.1} parent=1 // pred_fallthru
      _
    %s34 = sshll.u32 1, 14
    %s35 = sxor.u32 4294967295, %s34
    %s37 = sld [smem:[#allocation0]]
    %s38 = sadd.s32 2, %s37
    %s40 = sshll.u32 7, 26
    %s41 = sxor.u32 4294967295, %s40
    %s42 = sand.u32 0, %s41
    %s43 = sshll.u32 %s38, 26
    %s44 = sor.u32 %s42, %s43
    %s45 = sshll.u32 [#allocation2], 4
    %s46 = int_to_ptr.vmem [resolvable:$true] %s45
    %49 = sst [smem:[#allocation16]] 512
    %s50 = scalar_lea.smem [#allocation16], 1
    %51 = sst [smem:[%s50]] 512
    %s52 = scalar_lea.smem [#allocation16], 2
    %53 = sst [smem:[%s52]] 4
    %s54 = scalar_lea.smem [#allocation16], 3
    %55 = sst [smem:[%s54]] 64
    %s56 = scalar_lea.smem [#allocation16], 4
    %57 = sst [smem:[%s56]] 128
    %s58 = scalar_lea.smem [#allocation16], 5
    %59 = sst [smem:[%s58]] 2
    %s60 = scalar_lea.smem [#allocation16], 6
    %61 = sst [smem:[%s60]] 256
    %s62 = scalar_lea.smem [#allocation16], 7
    %63 = sst [smem:[%s62]] 64
    %s64 = scalar_lea.smem [#allocation16], 8
    %65 = sst [smem:[%s64]] 4
    %67 = dma.general %s2, 8192, %s46, [#allocation10], [#allocation15], [#allocation16], %s44, 0
    %s68 = scalar_lea.sflag [#allocation10], 1
    %s70 = sshll.u32 1, 14
    %s71 = sxor.u32 4294967295, %s70
    %s73 = sadd.s32 2, %s37
    %s75 = sshll.u32 7, 26
    %s76 = sxor.u32 4294967295, %s75
    %s77 = sand.u32 0, %s76
    %s78 = sshll.u32 %s73, 26
    %s79 = sor.u32 %s77, %s78
    %s80 = sshll.u32 [#allocation3], 4
    %s81 = int_to_ptr.vmem [resolvable:$true] %s80
    %84 = sst [smem:[#allocation18]] 512
    %s85 = scalar_lea.smem [#allocation18], 1
    %86 = sst [smem:[%s85]] 512
    %s87 = scalar_lea.smem [#allocation18], 2
    %88 = sst [smem:[%s87]] 4
    %s89 = scalar_lea.smem [#allocation18], 3
    %90 = sst [smem:[%s89]] 64
    %s91 = scalar_lea.smem [#allocation18], 4
    %92 = sst [smem:[%s91]] 128
    %s93 = scalar_lea.smem [#allocation18], 5
    %94 = sst [smem:[%s93]] 2
    %s95 = scalar_lea.smem [#allocation18], 6
    %96 = sst [smem:[%s95]] 256
    %s97 = scalar_lea.smem [#allocation18], 7
    %98 = sst [smem:[%s97]] 64
    %s99 = scalar_lea.smem [#allocation18], 8
    %100 = sst [smem:[%s99]] 4
    %102 = dma.general %s3, 16384, %s81, %s68, [#allocation17], [#allocation18], %s79, 0
    %v103 = vld [vmem:[#allocation11] sm:$0xff]
    %v104 = vld [vmem:[#allocation11 + $0x8] sm:$0xff]
    %s105 = smul.u32 4, 32
    %s106 = smul.u32 %s105, 4
    %s107 = sshll.u32 %s106, 4
    %108 = dma.done [#allocation10], %s107
    %s109 = scalar_lea.sflag [#allocation10], 2
    %s111 = sshll.u32 1, 14
    %s112 = sxor.u32 4294967295, %s111
    %s114 = sadd.s32 2, %s37
    %s116 = sshll.u32 7, 26
    %s117 = sxor.u32 4294967295, %s116
    %s118 = sand.u32 0, %s117
    %s119 = sshll.u32 %s114, 26
    %s120 = sor.u32 %s118, %s119
    %s121 = sshll.u32 [#allocation4], 4
    %s122 = int_to_ptr.vmem [resolvable:$true] %s121
    %125 = sst [smem:[#allocation20]] 2048
    %s126 = scalar_lea.smem [#allocation20], 1
    %127 = sst [smem:[%s126]] 2048
    %s128 = scalar_lea.smem [#allocation20], 2
    %129 = sst [smem:[%s128]] 16
    %s130 = scalar_lea.smem [#allocation20], 3
    %131 = sst [smem:[%s130]] 64
    %s132 = scalar_lea.smem [#allocation20], 4
    %133 = sst [smem:[%s132]] 128
    %s134 = scalar_lea.smem [#allocation20], 5
    %135 = sst [smem:[%s134]] 2
    %s136 = scalar_lea.smem [#allocation20], 6
    %137 = sst [smem:[%s136]] 1024
    %s138 = scalar_lea.smem [#allocation20], 7
    %139 = sst [smem:[%s138]] 64
    %s140 = scalar_lea.smem [#allocation20], 8
    %141 = sst [smem:[%s140]] 4
    %143 = dma.general %s4, 65536, %s122, %s109, [#allocation19], [#allocation20], %s120, 0
    %v144 = vld [vmem:[#allocation2] sm:$0xff]
    %v145 = vld [vmem:[#allocation2 + $0x8] sm:$0xff]
    %v146 = vld [vmem:[#allocation2 + $0x10] sm:$0xff]
    %v147 = vld [vmem:[#allocation2 + $0x18] sm:$0xff]
    %v148 = vld [vmem:[#allocation2 + $0x20] sm:$0xff]
    %v149 = vld [vmem:[#allocation2 + $0x28] sm:$0xff]
    %v150 = vld [vmem:[#allocation2 + $0x30] sm:$0xff]
    %v151 = vld [vmem:[#allocation2 + $0x38] sm:$0xff]
    %v152 = vld [vmem:[#allocation2 + $0x40] sm:$0xff]
    %v153 = vld [vmem:[#allocation2 + $0x48] sm:$0xff]
    %v154 = vld [vmem:[#allocation2 + $0x50] sm:$0xff]
    %v155 = vld [vmem:[#allocation2 + $0x58] sm:$0xff]
    %v156 = vld [vmem:[#allocation2 + $0x60] sm:$0xff]
    %v157 = vld [vmem:[#allocation2 + $0x68] sm:$0xff]
    %v158 = vld [vmem:[#allocation2 + $0x70] sm:$0xff]
    %v159 = vld [vmem:[#allocation2 + $0x78] sm:$0xff]
    %v160 = vld [vmem:[#allocation2 + $0x80] sm:$0xff]
    %v161 = vld [vmem:[#allocation2 + $0x88] sm:$0xff]
    %v162 = vld [vmem:[#allocation2 + $0x90] sm:$0xff]
    %v163 = vld [vmem:[#allocation2 + $0x98] sm:$0xff]
    %v164 = vld [vmem:[#allocation2 + $0xa0] sm:$0xff]
    %v165 = vld [vmem:[#allocation2 + $0xa8] sm:$0xff]
    %v166 = vld [vmem:[#allocation2 + $0xb0] sm:$0xff]
    %v167 = vld [vmem:[#allocation2 + $0xb8] sm:$0xff]
    %v168 = vld [vmem:[#allocation2 + $0xc0] sm:$0xff]
    %v169 = vld [vmem:[#allocation2 + $0xc8] sm:$0xff]
    %v170 = vld [vmem:[#allocation2 + $0xd0] sm:$0xff]
    %v171 = vld [vmem:[#allocation2 + $0xd8] sm:$0xff]
    %v172 = vld [vmem:[#allocation2 + $0xe0] sm:$0xff]
    %v173 = vld [vmem:[#allocation2 + $0xe8] sm:$0xff]
    %v174 = vld [vmem:[#allocation2 + $0xf0] sm:$0xff]
    %v175 = vld [vmem:[#allocation2 + $0xf8] sm:$0xff]
    %v176 = vld [vmem:[#allocation2 + $0x100] sm:$0xff]
    %v177 = vld [vmem:[#allocation2 + $0x108] sm:$0xff]
    %v178 = vld [vmem:[#allocation2 + $0x110] sm:$0xff]
    %v179 = vld [vmem:[#allocation2 + $0x118] sm:$0xff]
    %v180 = vld [vmem:[#allocation2 + $0x120] sm:$0xff]
    %v181 = vld [vmem:[#allocation2 + $0x128] sm:$0xff]
    %v182 = vld [vmem:[#allocation2 + $0x130] sm:$0xff]
    %v183 = vld [vmem:[#allocation2 + $0x138] sm:$0xff]
    %v184 = vld [vmem:[#allocation2 + $0x140] sm:$0xff]
    %v185 = vld [vmem:[#allocation2 + $0x148] sm:$0xff]
    %v186 = vld [vmem:[#allocation2 + $0x150] sm:$0xff]
    %v187 = vld [vmem:[#allocation2 + $0x158] sm:$0xff]
    %v188 = vld [vmem:[#allocation2 + $0x160] sm:$0xff]
    %v189 = vld [vmem:[#allocation2 + $0x168] sm:$0xff]
    %v190 = vld [vmem:[#allocation2 + $0x170] sm:$0xff]
    %v191 = vld [vmem:[#allocation2 + $0x178] sm:$0xff]
    %v192 = vld [vmem:[#allocation2 + $0x180] sm:$0xff]
    %v193 = vld [vmem:[#allocation2 + $0x188] sm:$0xff]
    %v194 = vld [vmem:[#allocation2 + $0x190] sm:$0xff]
    %v195 = vld [vmem:[#allocation2 + $0x198] sm:$0xff]
    %v196 = vld [vmem:[#allocation2 + $0x1a0] sm:$0xff]
    %v197 = vld [vmem:[#allocation2 + $0x1a8] sm:$0xff]
    %v198 = vld [vmem:[#allocation2 + $0x1b0] sm:$0xff]
    %v199 = vld [vmem:[#allocation2 + $0x1b8] sm:$0xff]
    %v200 = vld [vmem:[#allocation2 + $0x1c0] sm:$0xff]
    %v201 = vld [vmem:[#allocation2 + $0x1c8] sm:$0xff]
    %v202 = vld [vmem:[#allocation2 + $0x1d0] sm:$0xff]
    %v203 = vld [vmem:[#allocation2 + $0x1d8] sm:$0xff]
    %v204 = vld [vmem:[#allocation2 + $0x1e0] sm:$0xff]
    %v205 = vld [vmem:[#allocation2 + $0x1e8] sm:$0xff]
    %v206 = vld [vmem:[#allocation2 + $0x1f0] sm:$0xff]
    %v207 = vld [vmem:[#allocation2 + $0x1f8] sm:$0xff]
    %v208 = vld [vmem:[%s1] sm:$0xf]
    %v209 = vpack.c.bf16 %v103, %v103
    %v210 = vpack.c.bf16 %v104, %v104
    %v212 = vlaneseq
    %v213 = vshrl.u32 %v212, 7
    %v214 = vsub.s32 0, %v213
    %v215 = vrot.slane %v208, %v214
    %v216 = vlaneseq
    %v217 = vshrl.u32 %v216, 7
    %v218 = vsub.s32 1, %v217
    %v219 = vrot.slane %v208, %v218
    %v220 = vlaneseq
    %v221 = vshrl.u32 %v220, 7
    %v222 = vsub.s32 2, %v221
    %v223 = vrot.slane %v208, %v222
    %v224 = vlaneseq
    %v225 = vshrl.u32 %v224, 7
    %v226 = vsub.s32 3, %v225
    %v227 = vrot.slane %v208, %v226
    %232 = vmatprep.subr.bf16.mxu0 %v145
    %233 = vmatpush1.bf16.msra.mxu0 %v144
    %234 = vmatprep.subr.bf16.mxu0 %v149
    %235 = vmatpush1.bf16.msra.mxu0 %v148
    %236 = vmatprep.subr.bf16.mxu0 %v153
    %237 = vmatpush1.bf16.msra.mxu0 %v152
    %238 = vmatprep.subr.bf16.mxu0 %v157
    %239 = vmatpush1.bf16.msra.mxu0 %v156
    %240 = vmatprep.subr.bf16.mxu0 %v161
    %241 = vmatpush1.bf16.msra.mxu0 %v160
    %242 = vmatprep.subr.bf16.mxu0 %v165
    %243 = vmatpush1.bf16.msra.mxu0 %v164
    %244 = vmatprep.subr.bf16.mxu0 %v169
    %245 = vmatpush1.bf16.msra.mxu0 %v168
    %246 = vmatprep.subr.bf16.mxu0 %v173
    %247 = vmatpush1.bf16.msra.mxu0 %v172
    %248 = vmatprep.subr.bf16.mxu0 %v177
    %249 = vmatpush1.bf16.msra.mxu0 %v176
    %250 = vmatprep.subr.bf16.mxu0 %v181
    %251 = vmatpush1.bf16.msra.mxu0 %v180
    %252 = vmatprep.subr.bf16.mxu0 %v185
    %253 = vmatpush1.bf16.msra.mxu0 %v184
    %254 = vmatprep.subr.bf16.mxu0 %v189
    %255 = vmatpush1.bf16.msra.mxu0 %v188
    %256 = vmatprep.subr.bf16.mxu0 %v193
    %257 = vmatpush1.bf16.msra.mxu0 %v192
    %258 = vmatprep.subr.bf16.mxu0 %v197
    %259 = vmatpush1.bf16.msra.mxu0 %v196
    %260 = vmatprep.subr.bf16.mxu0 %v201
    %261 = vmatpush1.bf16.msra.mxu0 %v200
    %262 = vmatprep.subr.bf16.mxu0 %v205
    %263 = vmatpush1.bf16.msra.mxu0 %v204
    %264 = vmatprep.mubr.bf16.mxu0 %v210
    %265 = vmatmul.mubr.bf16.gmra.mrb[0].mxu0 %v209
    %v266 = vpop.f32.mrb[0].mxu0
    %v267 = vadd.f32 %v215, %v266
    %v268 = vpop.f32.mrb[0].mxu0
    %v269 = vadd.f32 %v219, %v268
    %v270 = vpop.f32.mrb[0].mxu0
    %v271 = vpop.f32.mrb[0].mxu0
    %272 = vdwg.mxu0
    %273 = vmatprep.subr.bf16.mxu0 %v147
    %274 = vmatpush1.bf16.msra.mxu0 %v146
    %275 = vmatprep.subr.bf16.mxu0 %v151
    %276 = vmatpush1.bf16.msra.mxu0 %v150
    %277 = vmatprep.subr.bf16.mxu0 %v155
    %278 = vmatpush1.bf16.msra.mxu0 %v154
    %279 = vmatprep.subr.bf16.mxu0 %v159
    %280 = vmatpush1.bf16.msra.mxu0 %v158
    %281 = vmatprep.subr.bf16.mxu0 %v163
    %282 = vmatpush1.bf16.msra.mxu0 %v162
    %283 = vmatprep.subr.bf16.mxu0 %v167
    %284 = vmatpush1.bf16.msra.mxu0 %v166
    %285 = vmatprep.subr.bf16.mxu0 %v171
    %286 = vmatpush1.bf16.msra.mxu0 %v170
    %287 = vmatprep.subr.bf16.mxu0 %v175
    %288 = vmatpush1.bf16.msra.mxu0 %v174
    %289 = vmatprep.subr.bf16.mxu0 %v179
    %290 = vmatpush1.bf16.msra.mxu0 %v178
    %291 = vmatprep.subr.bf16.mxu0 %v183
    %292 = vmatpush1.bf16.msra.mxu0 %v182
    %293 = vmatprep.subr.bf16.mxu0 %v187
    %294 = vmatpush1.bf16.msra.mxu0 %v186
    %295 = vmatprep.subr.bf16.mxu0 %v191
    %296 = vmatpush1.bf16.msra.mxu0 %v190
    %297 = vmatprep.subr.bf16.mxu0 %v195
    %298 = vmatpush1.bf16.msra.mxu0 %v194
    %299 = vmatprep.subr.bf16.mxu0 %v199
    %300 = vmatpush1.bf16.msra.mxu0 %v198
    %301 = vmatprep.subr.bf16.mxu0 %v203
    %302 = vmatpush1.bf16.msra.mxu0 %v202
    %303 = vmatprep.subr.bf16.mxu0 %v207
    %304 = vmatpush1.bf16.msra.mxu0 %v206
    %305 = vmatprep.mubr.bf16.mxu0 %v210
    %306 = vmatmul.mubr.bf16.gmra.mrb[0].mxu0 %v209
    %v307 = vpop.f32.mrb[0].mxu0
    %v308 = vadd.f32 %v223, %v307
    %v309 = vpop.f32.mrb[0].mxu0
    %v310 = vadd.f32 %v227, %v309
    %v311 = vpop.f32.mrb[0].mxu0
    %v312 = vpop.f32.mrb[0].mxu0
    %313 = vdwg.mxu0
    %v314 = vmax.f32 %v267, 0.0
    %v315 = vmax.f32 %v269, 0.0
    %v316 = vmax.f32 %v308, 0.0
    %v317 = vmax.f32 %v310, 0.0
    %s318 = smul.u32 4, 64
    %s319 = smul.u32 %s318, 4
    %s320 = sshll.u32 %s319, 4
    %321 = dma.done %s68, %s320
    %s322 = scalar_lea.sflag [#allocation10], 3
    // Predicated region
    $region14: #{ae_forward.1} parent=1 // pred_check
      _
    $region15: #{ae_forward.1} parent=1 // pred_check_branch
      %324 = sbr.rel target = $region17
    $region16: #{ae_forward.1} parent=1 // pred_region
      %325 = sst [smem:[#allocation23]] [#allocation22]
      %326 = sst [smem:[#allocation24]] [#allocation21]
    $region17: #{ae_forward.1} parent=1 // pred_fallthru
      _
    %328 = shalt.err (0)
    %s330 = sshll.u32 [#allocation5], 4
    %s331 = int_to_ptr.vmem [resolvable:$true] %s330
    %333 = dma.hbm_to_vmem [thread:$0]  %s5, 16384, %s331, %s322
    %v334 = vld [vmem:[#allocation3] sm:$0xff]
    %v335 = vld [vmem:[#allocation3 + $0x8] sm:$0xff]
    %v336 = vld [vmem:[#allocation3 + $0x10] sm:$0xff]
    %v337 = vld [vmem:[#allocation3 + $0x18] sm:$0xff]
    %v338 = vld [vmem:[#allocation3 + $0x20] sm:$0xff]
    %v339 = vld [vmem:[#allocation3 + $0x28] sm:$0xff]
    %v340 = vld [vmem:[#allocation3 + $0x30] sm:$0xff]
    %v341 = vld [vmem:[#allocation3 + $0x38] sm:$0xff]
    %v342 = vld [vmem:[#allocation3 + $0x40] sm:$0xff]
    %v343 = vld [vmem:[#allocation3 + $0x48] sm:$0xff]
    %v344 = vld [vmem:[#allocation3 + $0x50] sm:$0xff]
    %v345 = vld [vmem:[#allocation3 + $0x58] sm:$0xff]
    %v346 = vld [vmem:[#allocation3 + $0x60] sm:$0xff]
    %v347 = vld [vmem:[#allocation3 + $0x68] sm:$0xff]
    %v348 = vld [vmem:[#allocation3 + $0x70] sm:$0xff]
    %v349 = vld [vmem:[#allocation3 + $0x78] sm:$0xff]
    %v350 = vld [vmem:[#allocation3 + $0x80] sm:$0xff]
    %v351 = vld [vmem:[#allocation3 + $0x88] sm:$0xff]
    %v352 = vld [vmem:[#allocation3 + $0x90] sm:$0xff]
    %v353 = vld [vmem:[#allocation3 + $0x98] sm:$0xff]
    %v354 = vld [vmem:[#allocation3 + $0xa0] sm:$0xff]
    %v355 = vld [vmem:[#allocation3 + $0xa8] sm:$0xff]
    %v356 = vld [vmem:[#allocation3 + $0xb0] sm:$0xff]
    %v357 = vld [vmem:[#allocation3 + $0xb8] sm:$0xff]
    %v358 = vld [vmem:[#allocation3 + $0xc0] sm:$0xff]
    %v359 = vld [vmem:[#allocation3 + $0xc8] sm:$0xff]
    %v360 = vld [vmem:[#allocation3 + $0xd0] sm:$0xff]
    %v361 = vld [vmem:[#allocation3 + $0xd8] sm:$0xff]
    %v362 = vld [vmem:[#allocation3 + $0xe0] sm:$0xff]
    %v363 = vld [vmem:[#allocation3 + $0xe8] sm:$0xff]
    %v364 = vld [vmem:[#allocation3 + $0xf0] sm:$0xff]
    %v365 = vld [vmem:[#allocation3 + $0xf8] sm:$0xff]
    %v366 = vld [vmem:[#allocation3 + $0x100] sm:$0xff]
    %v367 = vld [vmem:[#allocation3 + $0x108] sm:$0xff]
    %v368 = vld [vmem:[#allocation3 + $0x110] sm:$0xff]
    %v369 = vld [vmem:[#allocation3 + $0x118] sm:$0xff]
    %v370 = vld [vmem:[#allocation3 + $0x120] sm:$0xff]
    %v371 = vld [vmem:[#allocation3 + $0x128] sm:$0xff]
    %v372 = vld [vmem:[#allocation3 + $0x130] sm:$0xff]
    %v373 = vld [vmem:[#allocation3 + $0x138] sm:$0xff]
    %v374 = vld [vmem:[#allocation3 + $0x140] sm:$0xff]
    %v375 = vld [vmem:[#allocation3 + $0x148] sm:$0xff]
    %v376 = vld [vmem:[#allocation3 + $0x150] sm:$0xff]
    %v377 = vld [vmem:[#allocation3 + $0x158] sm:$0xff]
    %v378 = vld [vmem:[#allocation3 + $0x160] sm:$0xff]
    %v379 = vld [vmem:[#allocation3 + $0x168] sm:$0xff]
    %v380 = vld [vmem:[#allocation3 + $0x170] sm:$0xff]
    %v381 = vld [vmem:[#allocation3 + $0x178] sm:$0xff]
    %v382 = vld [vmem:[#allocation3 + $0x180] sm:$0xff]
    %v383 = vld [vmem:[#allocation3 + $0x188] sm:$0xff]
    %v384 = vld [vmem:[#allocation3 + $0x190] sm:$0xff]
    %v385 = vld [vmem:[#allocation3 + $0x198] sm:$0xff]
    %v386 = vld [vmem:[#allocation3 + $0x1a0] sm:$0xff]
    %v387 = vld [vmem:[#allocation3 + $0x1a8] sm:$0xff]
    %v388 = vld [vmem:[#allocation3 + $0x1b0] sm:$0xff]
    %v389 = vld [vmem:[#allocation3 + $0x1b8] sm:$0xff]
    %v390 = vld [vmem:[#allocation3 + $0x1c0] sm:$0xff]
    %v391 = vld [vmem:[#allocation3 + $0x1c8] sm:$0xff]
    %v392 = vld [vmem:[#allocation3 + $0x1d0] sm:$0xff]
    %v393 = vld [vmem:[#allocation3 + $0x1d8] sm:$0xff]
    %v394 = vld [vmem:[#allocation3 + $0x1e0] sm:$0xff]
    %v395 = vld [vmem:[#allocation3 + $0x1e8] sm:$0xff]
    %v396 = vld [vmem:[#allocation3 + $0x1f0] sm:$0xff]
    %v397 = vld [vmem:[#allocation3 + $0x1f8] sm:$0xff]
    %v398 = vld [vmem:[#allocation3 + $0x200] sm:$0xff]
    %v399 = vld [vmem:[#allocation3 + $0x208] sm:$0xff]
    %v400 = vld [vmem:[#allocation3 + $0x210] sm:$0xff]
    %v401 = vld [vmem:[#allocation3 + $0x218] sm:$0xff]
    %v402 = vld [vmem:[#allocation3 + $0x220] sm:$0xff]
    %v403 = vld [vmem:[#allocation3 + $0x228] sm:$0xff]
    %v404 = vld [vmem:[#allocation3 + $0x230] sm:$0xff]
    %v405 = vld [vmem:[#allocation3 + $0x238] sm:$0xff]
    %v406 = vld [vmem:[#allocation3 + $0x240] sm:$0xff]
    %v407 = vld [vmem:[#allocation3 + $0x248] sm:$0xff]
    %v408 = vld [vmem:[#allocation3 + $0x250] sm:$0xff]
    %v409 = vld [vmem:[#allocation3 + $0x258] sm:$0xff]
    %v410 = vld [vmem:[#allocation3 + $0x260] sm:$0xff]
    %v411 = vld [vmem:[#allocation3 + $0x268] sm:$0xff]
    %v412 = vld [vmem:[#allocation3 + $0x270] sm:$0xff]
    %v413 = vld [vmem:[#allocation3 + $0x278] sm:$0xff]
    %v414 = vld [vmem:[#allocation3 + $0x280] sm:$0xff]
    %v415 = vld [vmem:[#allocation3 + $0x288] sm:$0xff]
    %v416 = vld [vmem:[#allocation3 + $0x290] sm:$0xff]
    %v417 = vld [vmem:[#allocation3 + $0x298] sm:$0xff]
    %v418 = vld [vmem:[#allocation3 + $0x2a0] sm:$0xff]
    %v419 = vld [vmem:[#allocation3 + $0x2a8] sm:$0xff]
    %v420 = vld [vmem:[#allocation3 + $0x2b0] sm:$0xff]
    %v421 = vld [vmem:[#allocation3 + $0x2b8] sm:$0xff]
    %v422 = vld [vmem:[#allocation3 + $0x2c0] sm:$0xff]
    %v423 = vld [vmem:[#allocation3 + $0x2c8] sm:$0xff]
    %v424 = vld [vmem:[#allocation3 + $0x2d0] sm:$0xff]
    %v425 = vld [vmem:[#allocation3 + $0x2d8] sm:$0xff]
    %v426 = vld [vmem:[#allocation3 + $0x2e0] sm:$0xff]
    %v427 = vld [vmem:[#allocation3 + $0x2e8] sm:$0xff]
    %v428 = vld [vmem:[#allocation3 + $0x2f0] sm:$0xff]
    %v429 = vld [vmem:[#allocation3 + $0x2f8] sm:$0xff]
    %v430 = vld [vmem:[#allocation3 + $0x300] sm:$0xff]
    %v431 = vld [vmem:[#allocation3 + $0x308] sm:$0xff]
    %v432 = vld [vmem:[#allocation3 + $0x310] sm:$0xff]
    %v433 = vld [vmem:[#allocation3 + $0x318] sm:$0xff]
    %v434 = vld [vmem:[#allocation3 + $0x320] sm:$0xff]
    %v435 = vld [vmem:[#allocation3 + $0x328] sm:$0xff]
    %v436 = vld [vmem:[#allocation3 + $0x330] sm:$0xff]
    %v437 = vld [vmem:[#allocation3 + $0x338] sm:$0xff]
    %v438 = vld [vmem:[#allocation3 + $0x340] sm:$0xff]
    %v439 = vld [vmem:[#allocation3 + $0x348] sm:$0xff]
    %v440 = vld [vmem:[#allocation3 + $0x350] sm:$0xff]
    %v441 = vld [vmem:[#allocation3 + $0x358] sm:$0xff]
    %v442 = vld [vmem:[#allocation3 + $0x360] sm:$0xff]
    %v443 = vld [vmem:[#allocation3 + $0x368] sm:$0xff]
    %v444 = vld [vmem:[#allocation3 + $0x370] sm:$0xff]
    %v445 = vld [vmem:[#allocation3 + $0x378] sm:$0xff]
    %v446 = vld [vmem:[#allocation3 + $0x380] sm:$0xff]
    %v447 = vld [vmem:[#allocation3 + $0x388] sm:$0xff]
    %v448 = vld [vmem:[#allocation3 + $0x390] sm:$0xff]
    %v449 = vld [vmem:[#allocation3 + $0x398] sm:$0xff]
    %v450 = vld [vmem:[#allocation3 + $0x3a0] sm:$0xff]
    %v451 = vld [vmem:[#allocation3 + $0x3a8] sm:$0xff]
    %v452 = vld [vmem:[#allocation3 + $0x3b0] sm:$0xff]
    %v453 = vld [vmem:[#allocation3 + $0x3b8] sm:$0xff]
    %v454 = vld [vmem:[#allocation3 + $0x3c0] sm:$0xff]
    %v455 = vld [vmem:[#allocation3 + $0x3c8] sm:$0xff]
    %v456 = vld [vmem:[#allocation3 + $0x3d0] sm:$0xff]
    %v457 = vld [vmem:[#allocation3 + $0x3d8] sm:$0xff]
    %v458 = vld [vmem:[#allocation3 + $0x3e0] sm:$0xff]
    %v459 = vld [vmem:[#allocation3 + $0x3e8] sm:$0xff]
    %v460 = vld [vmem:[#allocation3 + $0x3f0] sm:$0xff]
    %v461 = vld [vmem:[#allocation3 + $0x3f8] sm:$0xff]
    %v462 = vld [vmem:[%s1 + $0x4] sm:$0xf]
    %v463 = vpack.c.bf16 %v314, %v314
    %v464 = vpack.c.bf16 %v315, %v315
    %v465 = vpack.c.bf16 %v316, %v316
    %v466 = vpack.c.bf16 %v317, %v317
    %v468 = vlaneseq
    %v469 = vshrl.u32 %v468, 7
    %v470 = vsub.s32 0, %v469
    %v471 = vrot.slane %v462, %v470
    %v472 = vlaneseq
    %v473 = vshrl.u32 %v472, 7
    %v474 = vsub.s32 1, %v473
    %v475 = vrot.slane %v462, %v474
    %v476 = vlaneseq
    %v477 = vshrl.u32 %v476, 7
    %v478 = vsub.s32 2, %v477
    %v479 = vrot.slane %v462, %v478
    %v480 = vlaneseq
    %v481 = vshrl.u32 %v480, 7
    %v482 = vsub.s32 3, %v481
    %v483 = vrot.slane %v462, %v482
    %488 = vmatprep.subr.bf16.mxu0 %v335
    %489 = vmatpush1.bf16.msra.mxu0 %v334
    %490 = vmatprep.subr.bf16.mxu0 %v339
    %491 = vmatpush1.bf16.msra.mxu0 %v338
    %492 = vmatprep.subr.bf16.mxu0 %v343
    %493 = vmatpush1.bf16.msra.mxu0 %v342
    %494 = vmatprep.subr.bf16.mxu0 %v347
    %495 = vmatpush1.bf16.msra.mxu0 %v346
    %496 = vmatprep.subr.bf16.mxu0 %v351
    %497 = vmatpush1.bf16.msra.mxu0 %v350
    %498 = vmatprep.subr.bf16.mxu0 %v355
    %499 = vmatpush1.bf16.msra.mxu0 %v354
    %500 = vmatprep.subr.bf16.mxu0 %v359
    %501 = vmatpush1.bf16.msra.mxu0 %v358
    %502 = vmatprep.subr.bf16.mxu0 %v363
    %503 = vmatpush1.bf16.msra.mxu0 %v362
    %504 = vmatprep.subr.bf16.mxu0 %v367
    %505 = vmatpush1.bf16.msra.mxu0 %v366
    %506 = vmatprep.subr.bf16.mxu0 %v371
    %507 = vmatpush1.bf16.msra.mxu0 %v370
    %508 = vmatprep.subr.bf16.mxu0 %v375
    %509 = vmatpush1.bf16.msra.mxu0 %v374
    %510 = vmatprep.subr.bf16.mxu0 %v379
    %511 = vmatpush1.bf16.msra.mxu0 %v378
    %512 = vmatprep.subr.bf16.mxu0 %v383
    %513 = vmatpush1.bf16.msra.mxu0 %v382
    %514 = vmatprep.subr.bf16.mxu0 %v387
    %515 = vmatpush1.bf16.msra.mxu0 %v386
    %516 = vmatprep.subr.bf16.mxu0 %v391
    %517 = vmatpush1.bf16.msra.mxu0 %v390
    %518 = vmatprep.subr.bf16.mxu0 %v395
    %519 = vmatpush1.bf16.msra.mxu0 %v394
    %520 = vmatprep.mubr.bf16.mxu0 %v464
    %521 = vmatmul.mubr.bf16.gmra.mrb[0].mxu0 %v463
    %v522 = vpop.f32.mrb[0].mxu0
    %v523 = vadd.f32 %v471, %v522
    %v524 = vpop.f32.mrb[0].mxu0
    %v525 = vadd.f32 %v475, %v524
    %v526 = vpop.f32.mrb[0].mxu0
    %v527 = vpop.f32.mrb[0].mxu0
    %528 = vdwg.mxu0
    %529 = vmatprep.subr.bf16.mxu0 %v399
    %530 = vmatpush1.bf16.msra.mxu0 %v398
    %531 = vmatprep.subr.bf16.mxu0 %v403
    %532 = vmatpush1.bf16.msra.mxu0 %v402
    %533 = vmatprep.subr.bf16.mxu0 %v407
    %534 = vmatpush1.bf16.msra.mxu0 %v406
    %535 = vmatprep.subr.bf16.mxu0 %v411
    %536 = vmatpush1.bf16.msra.mxu0 %v410
    %537 = vmatprep.subr.bf16.mxu0 %v415
    %538 = vmatpush1.bf16.msra.mxu0 %v414
    %539 = vmatprep.subr.bf16.mxu0 %v419
    %540 = vmatpush1.bf16.msra.mxu0 %v418
    %541 = vmatprep.subr.bf16.mxu0 %v423
    %542 = vmatpush1.bf16.msra.mxu0 %v422
    %543 = vmatprep.subr.bf16.mxu0 %v427
    %544 = vmatpush1.bf16.msra.mxu0 %v426
    %545 = vmatprep.subr.bf16.mxu0 %v431
    %546 = vmatpush1.bf16.msra.mxu0 %v430
    %547 = vmatprep.subr.bf16.mxu0 %v435
    %548 = vmatpush1.bf16.msra.mxu0 %v434
    %549 = vmatprep.subr.bf16.mxu0 %v439
    %550 = vmatpush1.bf16.msra.mxu0 %v438
    %551 = vmatprep.subr.bf16.mxu0 %v443
    %552 = vmatpush1.bf16.msra.mxu0 %v442
    %553 = vmatprep.subr.bf16.mxu0 %v447
    %554 = vmatpush1.bf16.msra.mxu0 %v446
    %555 = vmatprep.subr.bf16.mxu0 %v451
    %556 = vmatpush1.bf16.msra.mxu0 %v450
    %557 = vmatprep.subr.bf16.mxu0 %v455
    %558 = vmatpush1.bf16.msra.mxu0 %v454
    %559 = vmatprep.subr.bf16.mxu0 %v459
    %560 = vmatpush1.bf16.msra.mxu0 %v458
    %561 = vmatprep.mubr.bf16.mxu0 %v466
    %562 = vmatmul.mubr.bf16.gmra.mrb[0].mxu0 %v465
    %v563 = vpop.f32.mrb[0].mxu0
    %v564 = vadd.f32 %v523, %v563
    %v565 = vpop.f32.mrb[0].mxu0
    %v566 = vadd.f32 %v525, %v565
    %v567 = vpop.f32.mrb[0].mxu0
    %v568 = vpop.f32.mrb[0].mxu0
    %569 = vdwg.mxu0
    %570 = vmatprep.subr.bf16.mxu0 %v337
    %571 = vmatpush1.bf16.msra.mxu0 %v336
    %572 = vmatprep.subr.bf16.mxu0 %v341
    %573 = vmatpush1.bf16.msra.mxu0 %v340
    %574 = vmatprep.subr.bf16.mxu0 %v345
    %575 = vmatpush1.bf16.msra.mxu0 %v344
    %576 = vmatprep.subr.bf16.mxu0 %v349
    %577 = vmatpush1.bf16.msra.mxu0 %v348
    %578 = vmatprep.subr.bf16.mxu0 %v353
    %579 = vmatpush1.bf16.msra.mxu0 %v352
    %580 = vmatprep.subr.bf16.mxu0 %v357
    %581 = vmatpush1.bf16.msra.mxu0 %v356
    %582 = vmatprep.subr.bf16.mxu0 %v361
    %583 = vmatpush1.bf16.msra.mxu0 %v360
    %584 = vmatprep.subr.bf16.mxu0 %v365
    %585 = vmatpush1.bf16.msra.mxu0 %v364
    %586 = vmatprep.subr.bf16.mxu0 %v369
    %587 = vmatpush1.bf16.msra.mxu0 %v368
    %588 = vmatprep.subr.bf16.mxu0 %v373
    %589 = vmatpush1.bf16.msra.mxu0 %v372
    %590 = vmatprep.subr.bf16.mxu0 %v377
    %591 = vmatpush1.bf16.msra.mxu0 %v376
    %592 = vmatprep.subr.bf16.mxu0 %v381
    %593 = vmatpush1.bf16.msra.mxu0 %v380
    %594 = vmatprep.subr.bf16.mxu0 %v385
    %595 = vmatpush1.bf16.msra.mxu0 %v384
    %596 = vmatprep.subr.bf16.mxu0 %v389
    %597 = vmatpush1.bf16.msra.mxu0 %v388
    %598 = vmatprep.subr.bf16.mxu0 %v393
    %599 = vmatpush1.bf16.msra.mxu0 %v392
    %600 = vmatprep.subr.bf16.mxu0 %v397
    %601 = vmatpush1.bf16.msra.mxu0 %v396
    %602 = vmatprep.mubr.bf16.mxu0 %v464
    %603 = vmatmul.mubr.bf16.gmra.mrb[0].mxu0 %v463
    %v604 = vpop.f32.mrb[0].mxu0
    %v605 = vadd.f32 %v479, %v604
    %v606 = vpop.f32.mrb[0].mxu0
    %v607 = vadd.f32 %v483, %v606
    %v608 = vpop.f32.mrb[0].mxu0
    %v609 = vpop.f32.mrb[0].mxu0
    %610 = vdwg.mxu0
    %611 = vmatprep.subr.bf16.mxu0 %v401
    %612 = vmatpush1.bf16.msra.mxu0 %v400
    %613 = vmatprep.subr.bf16.mxu0 %v405
    %614 = vmatpush1.bf16.msra.mxu0 %v404
    %615 = vmatprep.subr.bf16.mxu0 %v409
    %616 = vmatpush1.bf16.msra.mxu0 %v408
    %617 = vmatprep.subr.bf16.mxu0 %v413
    %618 = vmatpush1.bf16.msra.mxu0 %v412
    %619 = vmatprep.subr.bf16.mxu0 %v417
    %620 = vmatpush1.bf16.msra.mxu0 %v416
    %621 = vmatprep.subr.bf16.mxu0 %v421
    %622 = vmatpush1.bf16.msra.mxu0 %v420
    %623 = vmatprep.subr.bf16.mxu0 %v425
    %624 = vmatpush1.bf16.msra.mxu0 %v424
    %625 = vmatprep.subr.bf16.mxu0 %v429
    %626 = vmatpush1.bf16.msra.mxu0 %v428
    %627 = vmatprep.subr.bf16.mxu0 %v433
    %628 = vmatpush1.bf16.msra.mxu0 %v432
    %629 = vmatprep.subr.bf16.mxu0 %v437
    %630 = vmatpush1.bf16.msra.mxu0 %v436
    %631 = vmatprep.subr.bf16.mxu0 %v441
    %632 = vmatpush1.bf16.msra.mxu0 %v440
    %633 = vmatprep.subr.bf16.mxu0 %v445
    %634 = vmatpush1.bf16.msra.mxu0 %v444
    %635 = vmatprep.subr.bf16.mxu0 %v449
    %636 = vmatpush1.bf16.msra.mxu0 %v448
    %637 = vmatprep.subr.bf16.mxu0 %v453
    %638 = vmatpush1.bf16.msra.mxu0 %v452
    %639 = vmatprep.subr.bf16.mxu0 %v457
    %640 = vmatpush1.bf16.msra.mxu0 %v456
    %641 = vmatprep.subr.bf16.mxu0 %v461
    %642 = vmatpush1.bf16.msra.mxu0 %v460
    %643 = vmatprep.mubr.bf16.mxu0 %v466
    %644 = vmatmul.mubr.bf16.gmra.mrb[0].mxu0 %v465
    %v645 = vpop.f32.mrb[0].mxu0
    %v646 = vadd.f32 %v605, %v645
    %v647 = vpop.f32.mrb[0].mxu0
    %v648 = vadd.f32 %v607, %v647
    %v649 = vpop.f32.mrb[0].mxu0
    %v650 = vpop.f32.mrb[0].mxu0
    %651 = vdwg.mxu0
    %v652 = vmax.f32 %v564, 0.0
    %v653 = vmax.f32 %v566, 0.0
    %v654 = vmax.f32 %v646, 0.0
    %v655 = vmax.f32 %v648, 0.0
    %s656 = smul.u32 %s318, 16
    %s657 = sshll.u32 %s656, 4
    %658 = dma.done %s109, %s657
    %s659 = scalar_lea.sflag [#allocation10], 4
    %s661 = sshll.u32 1, 14
    %s662 = sxor.u32 4294967295, %s661
    %s664 = sadd.s32 2, %s37
    %s666 = sshll.u32 7, 26
    %s667 = sxor.u32 4294967295, %s666
    %s668 = sand.u32 0, %s667
    %s669 = sshll.u32 %s664, 26
    %s670 = sor.u32 %s668, %s669
    %s671 = sshll.u32 [#allocation6], 4
    %s672 = int_to_ptr.vmem [resolvable:$true] %s671
    %675 = sst [smem:[#allocation26]] 2048
    %s676 = scalar_lea.smem [#allocation26], 1
    %677 = sst [smem:[%s676]] 2048
    %s678 = scalar_lea.smem [#allocation26], 2
    %679 = sst [smem:[%s678]] 16
    %s680 = scalar_lea.smem [#allocation26], 3
    %681 = sst [smem:[%s680]] 64
    %s682 = scalar_lea.smem [#allocation26], 4
    %683 = sst [smem:[%s682]] 128
    %s684 = scalar_lea.smem [#allocation26], 5
    %685 = sst [smem:[%s684]] 2
    %s686 = scalar_lea.smem [#allocation26], 6
    %687 = sst [smem:[%s686]] 1024
    %s688 = scalar_lea.smem [#allocation26], 7
    %689 = sst [smem:[%s688]] 64
    %s690 = scalar_lea.smem [#allocation26], 8
    %691 = sst [smem:[%s690]] 4
    %693 = dma.general %s6, 16384, %s672, %s659, [#allocation25], [#allocation26], %s670, 0
    %v694 = vld [vmem:[#allocation4] sm:$0xff]
    %v695 = vld [vmem:[#allocation4 + $0x8] sm:$0xff]
    %v696 = vld [vmem:[#allocation4 + $0x10] sm:$0xff]
    %v697 = vld [vmem:[#allocation4 + $0x18] sm:$0xff]
    %v698 = vld [vmem:[#allocation4 + $0x20] sm:$0xff]
    %v699 = vld [vmem:[#allocation4 + $0x28] sm:$0xff]
    %v700 = vld [vmem:[#allocation4 + $0x30] sm:$0xff]
    %v701 = vld [vmem:[#allocation4 + $0x38] sm:$0xff]
    %v702 = vld [vmem:[#allocation4 + $0x40] sm:$0xff]
    %v703 = vld [vmem:[#allocation4 + $0x48] sm:$0xff]
    %v704 = vld [vmem:[#allocation4 + $0x50] sm:$0xff]
    %v705 = vld [vmem:[#allocation4 + $0x58] sm:$0xff]
    %v706 = vld [vmem:[#allocation4 + $0x60] sm:$0xff]
    %v707 = vld [vmem:[#allocation4 + $0x68] sm:$0xff]
    %v708 = vld [vmem:[#allocation4 + $0x70] sm:$0xff]
    %v709 = vld [vmem:[#allocation4 + $0x78] sm:$0xff]
    %v710 = vld [vmem:[#allocation4 + $0x80] sm:$0xff]
    %v711 = vld [vmem:[#allocation4 + $0x88] sm:$0xff]
    %v712 = vld [vmem:[#allocation4 + $0x90] sm:$0xff]
    %v713 = vld [vmem:[#allocation4 + $0x98] sm:$0xff]
    %v714 = vld [vmem:[#allocation4 + $0xa0] sm:$0xff]
    %v715 = vld [vmem:[#allocation4 + $0xa8] sm:$0xff]
    %v716 = vld [vmem:[#allocation4 + $0xb0] sm:$0xff]
    %v717 = vld [vmem:[#allocation4 + $0xb8] sm:$0xff]
    %v718 = vld [vmem:[#allocation4 + $0xc0] sm:$0xff]
    %v719 = vld [vmem:[#allocation4 + $0xc8] sm:$0xff]
    %v720 = vld [vmem:[#allocation4 + $0xd0] sm:$0xff]
    %v721 = vld [vmem:[#allocation4 + $0xd8] sm:$0xff]
    %v722 = vld [vmem:[#allocation4 + $0xe0] sm:$0xff]
    %v723 = vld [vmem:[#allocation4 + $0xe8] sm:$0xff]
    %v724 = vld [vmem:[#allocation4 + $0xf0] sm:$0xff]
    %v725 = vld [vmem:[#allocation4 + $0xf8] sm:$0xff]
    %v726 = vld [vmem:[#allocation4 + $0x100] sm:$0xff]
    %v727 = vld [vmem:[#allocation4 + $0x108] sm:$0xff]
    %v728 = vld [vmem:[#allocation4 + $0x110] sm:$0xff]
    %v729 = vld [vmem:[#allocation4 + $0x118] sm:$0xff]
    %v730 = vld [vmem:[#allocation4 + $0x120] sm:$0xff]
    %v731 = vld [vmem:[#allocation4 + $0x128] sm:$0xff]
    %v732 = vld [vmem:[#allocation4 + $0x130] sm:$0xff]
    %v733 = vld [vmem:[#allocation4 + $0x138] sm:$0xff]
    %v734 = vld [vmem:[#allocation4 + $0x140] sm:$0xff]
    %v735 = vld [vmem:[#allocation4 + $0x148] sm:$0xff]
    %v736 = vld [vmem:[#allocation4 + $0x150] sm:$0xff]
    %v737 = vld [vmem:[#allocation4 + $0x158] sm:$0xff]
    %v738 = vld [vmem:[#allocation4 + $0x160] sm:$0xff]
    %v739 = vld [vmem:[#allocation4 + $0x168] sm:$0xff]
    %v740 = vld [vmem:[#allocation4 + $0x170] sm:$0xff]
    %v741 = vld [vmem:[#allocation4 + $0x178] sm:$0xff]
    %v742 = vld [vmem:[#allocation4 + $0x180] sm:$0xff]
    %v743 = vld [vmem:[#allocation4 + $0x188] sm:$0xff]
    %v744 = vld [vmem:[#allocation4 + $0x190] sm:$0xff]
    %v745 = vld [vmem:[#allocation4 + $0x198] sm:$0xff]
    %v746 = vld [vmem:[#allocation4 + $0x1a0] sm:$0xff]
    %v747 = vld [vmem:[#allocation4 + $0x1a8] sm:$0xff]
    %v748 = vld [vmem:[#allocation4 + $0x1b0] sm:$0xff]
    %v749 = vld [vmem:[#allocation4 + $0x1b8] sm:$0xff]
    %v750 = vld [vmem:[#allocation4 + $0x1c0] sm:$0xff]
    %v751 = vld [vmem:[#allocation4 + $0x1c8] sm:$0xff]
    %v752 = vld [vmem:[#allocation4 + $0x1d0] sm:$0xff]
    %v753 = vld [vmem:[#allocation4 + $0x1d8] sm:$0xff]
    %v754 = vld [vmem:[#allocation4 + $0x1e0] sm:$0xff]
    %v755 = vld [vmem:[#allocation4 + $0x1e8] sm:$0xff]
    %v756 = vld [vmem:[#allocation4 + $0x1f0] sm:$0xff]
    %v757 = vld [vmem:[#allocation4 + $0x1f8] sm:$0xff]
    %v758 = vld [vmem:[#allocation4 + $0x200] sm:$0xff]
    %v759 = vld [vmem:[#allocation4 + $0x208] sm:$0xff]
    %v760 = vld [vmem:[#allocation4 + $0x210] sm:$0xff]
    %v761 = vld [vmem:[#allocation4 + $0x218] sm:$0xff]
    %v762 = vld [vmem:[#allocation4 + $0x220] sm:$0xff]
    %v763 = vld [vmem:[#allocation4 + $0x228] sm:$0xff]
    %v764 = vld [vmem:[#allocation4 + $0x230] sm:$0xff]
    %v765 = vld [vmem:[#allocation4 + $0x238] sm:$0xff]
    %v766 = vld [vmem:[#allocation4 + $0x240] sm:$0xff]
    %v767 = vld [vmem:[#allocation4 + $0x248] sm:$0xff]
    %v768 = vld [vmem:[#allocation4 + $0x250] sm:$0xff]
    %v769 = vld [vmem:[#allocation4 + $0x258] sm:$0xff]
    %v770 = vld [vmem:[#allocation4 + $0x260] sm:$0xff]
    %v771 = vld [vmem:[#allocation4 + $0x268] sm:$0xff]
    %v772 = vld [vmem:[#allocation4 + $0x270] sm:$0xff]
    %v773 = vld [vmem:[#allocation4 + $0x278] sm:$0xff]
    %v774 = vld [vmem:[#allocation4 + $0x280] sm:$0xff]
    %v775 = vld [vmem:[#allocation4 + $0x288] sm:$0xff]
    %v776 = vld [vmem:[#allocation4 + $0x290] sm:$0xff]
    %v777 = vld [vmem:[#allocation4 + $0x298] sm:$0xff]
    %v778 = vld [vmem:[#allocation4 + $0x2a0] sm:$0xff]
    %v779 = vld [vmem:[#allocation4 + $0x2a8] sm:$0xff]
    %v780 = vld [vmem:[#allocation4 + $0x2b0] sm:$0xff]
    %v781 = vld [vmem:[#allocation4 + $0x2b8] sm:$0xff]
    %v782 = vld [vmem:[#allocation4 + $0x2c0] sm:$0xff]
    %v783 = vld [vmem:[#allocation4 + $0x2c8] sm:$0xff]
    %v784 = vld [vmem:[#allocation4 + $0x2d0] sm:$0xff]
    %v785 = vld [vmem:[#allocation4 + $0x2d8] sm:$0xff]
    %v786 = vld [vmem:[#allocation4 + $0x2e0] sm:$0xff]
    %v787 = vld [vmem:[#allocation4 + $0x2e8] sm:$0xff]
    %v788 = vld [vmem:[#allocation4 + $0x2f0] sm:$0xff]
    %v789 = vld [vmem:[#allocation4 + $0x2f8] sm:$0xff]
    %v790 = vld [vmem:[#allocation4 + $0x300] sm:$0xff]
    %v791 = vld [vmem:[#allocation4 + $0x308] sm:$0xff]
    %v792 = vld [vmem:[#allocation4 + $0x310] sm:$0xff]
    %v793 = vld [vmem:[#allocation4 + $0x318] sm:$0xff]
    %v794 = vld [vmem:[#allocation4 + $0x320] sm:$0xff]
    %v795 = vld [vmem:[#allocation4 + $0x328] sm:$0xff]
    %v796 = vld [vmem:[#allocation4 + $0x330] sm:$0xff]
    %v797 = vld [vmem:[#allocation4 + $0x338] sm:$0xff]
    %v798 = vld [vmem:[#allocation4 + $0x340] sm:$0xff]
    %v799 = vld [vmem:[#allocation4 + $0x348] sm:$0xff]
    %v800 = vld [vmem:[#allocation4 + $0x350] sm:$0xff]
    %v801 = vld [vmem:[#allocation4 + $0x358] sm:$0xff]
    %v802 = vld [vmem:[#allocation4 + $0x360] sm:$0xff]
    %v803 = vld [vmem:[#allocation4 + $0x368] sm:$0xff]
    %v804 = vld [vmem:[#allocation4 + $0x370] sm:$0xff]
    %v805 = vld [vmem:[#allocation4 + $0x378] sm:$0xff]
    %v806 = vld [vmem:[#allocation4 + $0x380] sm:$0xff]
    %v807 = vld [vmem:[#allocation4 + $0x388] sm:$0xff]
    %v808 = vld [vmem:[#allocation4 + $0x390] sm:$0xff]
    %v809 = vld [vmem:[#allocation4 + $0x398] sm:$0xff]
    %v810 = vld [vmem:[#allocation4 + $0x3a0] sm:$0xff]
    %v811 = vld [vmem:[#allocation4 + $0x3a8] sm:$0xff]
    %v812 = vld [vmem:[#allocation4 + $0x3b0] sm:$0xff]
    %v813 = vld [vmem:[#allocation4 + $0x3b8] sm:$0xff]
    %v814 = vld [vmem:[#allocation4 + $0x3c0] sm:$0xff]
    %v815 = vld [vmem:[#allocation4 + $0x3c8] sm:$0xff]
    %v816 = vld [vmem:[#allocation4 + $0x3d0] sm:$0xff]
    %v817 = vld [vmem:[#allocation4 + $0x3d8] sm:$0xff]
    %v818 = vld [vmem:[#allocation4 + $0x3e0] sm:$0xff]
    %v819 = vld [vmem:[#allocation4 + $0x3e8] sm:$0xff]
    %v820 = vld [vmem:[#allocation4 + $0x3f0] sm:$0xff]
    %v821 = vld [vmem:[#allocation4 + $0x3f8] sm:$0xff]
    %v822 = vld [vmem:[#allocation4 + $0x400] sm:$0xff]
    %v823 = vld [vmem:[#allocation4 + $0x408] sm:$0xff]
    %v824 = vld [vmem:[#allocation4 + $0x410] sm:$0xff]
    %v825 = vld [vmem:[#allocation4 + $0x418] sm:$0xff]
    %v826 = vld [vmem:[#allocation4 + $0x420] sm:$0xff]
    %v827 = vld [vmem:[#allocation4 + $0x428] sm:$0xff]
    %v828 = vld [vmem:[#allocation4 + $0x430] sm:$0xff]
    %v829 = vld [vmem:[#allocation4 + $0x438] sm:$0xff]
    %v830 = vld [vmem:[#allocation4 + $0x440] sm:$0xff]
    %v831 = vld [vmem:[#allocation4 + $0x448] sm:$0xff]
    %v832 = vld [vmem:[#allocation4 + $0x450] sm:$0xff]
    %v833 = vld [vmem:[#allocation4 + $0x458] sm:$0xff]
    %v834 = vld [vmem:[#allocation4 + $0x460] sm:$0xff]
    %v835 = vld [vmem:[#allocation4 + $0x468] sm:$0xff]
    %v836 = vld [vmem:[#allocation4 + $0x470] sm:$0xff]
    %v837 = vld [vmem:[#allocation4 + $0x478] sm:$0xff]
    %v838 = vld [vmem:[#allocation4 + $0x480] sm:$0xff]
    %v839 = vld [vmem:[#allocation4 + $0x488] sm:$0xff]
    %v840 = vld [vmem:[#allocation4 + $0x490] sm:$0xff]
    %v841 = vld [vmem:[#allocation4 + $0x498] sm:$0xff]
    %v842 = vld [vmem:[#allocation4 + $0x4a0] sm:$0xff]
    %v843 = vld [vmem:[#allocation4 + $0x4a8] sm:$0xff]
    %v844 = vld [vmem:[#allocation4 + $0x4b0] sm:$0xff]
    %v845 = vld [vmem:[#allocation4 + $0x4b8] sm:$0xff]
    %v846 = vld [vmem:[#allocation4 + $0x4c0] sm:$0xff]
    %v847 = vld [vmem:[#allocation4 + $0x4c8] sm:$0xff]
    %v848 = vld [vmem:[#allocation4 + $0x4d0] sm:$0xff]
    %v849 = vld [vmem:[#allocation4 + $0x4d8] sm:$0xff]
    %v850 = vld [vmem:[#allocation4 + $0x4e0] sm:$0xff]
    %v851 = vld [vmem:[#allocation4 + $0x4e8] sm:$0xff]
    %v852 = vld [vmem:[#allocation4 + $0x4f0] sm:$0xff]
    %v853 = vld [vmem:[#allocation4 + $0x4f8] sm:$0xff]
    %v854 = vld [vmem:[#allocation4 + $0x500] sm:$0xff]
    %v855 = vld [vmem:[#allocation4 + $0x508] sm:$0xff]
    %v856 = vld [vmem:[#allocation4 + $0x510] sm:$0xff]
    %v857 = vld [vmem:[#allocation4 + $0x518] sm:$0xff]
    %v858 = vld [vmem:[#allocation4 + $0x520] sm:$0xff]
    %v859 = vld [vmem:[#allocation4 + $0x528] sm:$0xff]
    %v860 = vld [vmem:[#allocation4 + $0x530] sm:$0xff]
    %v861 = vld [vmem:[#allocation4 + $0x538] sm:$0xff]
    %v862 = vld [vmem:[#allocation4 + $0x540] sm:$0xff]
    %v863 = vld [vmem:[#allocation4 + $0x548] sm:$0xff]
    %v864 = vld [vmem:[#allocation4 + $0x550] sm:$0xff]
    %v865 = vld [vmem:[#allocation4 + $0x558] sm:$0xff]
    %v866 = vld [vmem:[#allocation4 + $0x560] sm:$0xff]
    %v867 = vld [vmem:[#allocation4 + $0x568] sm:$0xff]
    %v868 = vld [vmem:[#allocation4 + $0x570] sm:$0xff]
    %v869 = vld [vmem:[#allocation4 + $0x578] sm:$0xff]
    %v870 = vld [vmem:[#allocation4 + $0x580] sm:$0xff]
    %v871 = vld [vmem:[#allocation4 + $0x588] sm:$0xff]
    %v872 = vld [vmem:[#allocation4 + $0x590] sm:$0xff]
    %v873 = vld [vmem:[#allocation4 + $0x598] sm:$0xff]
    %v874 = vld [vmem:[#allocation4 + $0x5a0] sm:$0xff]
    %v875 = vld [vmem:[#allocation4 + $0x5a8] sm:$0xff]
    %v876 = vld [vmem:[#allocation4 + $0x5b0] sm:$0xff]
    %v877 = vld [vmem:[#allocation4 + $0x5b8] sm:$0xff]
    %v878 = vld [vmem:[#allocation4 + $0x5c0] sm:$0xff]
    %v879 = vld [vmem:[#allocation4 + $0x5c8] sm:$0xff]
    %v880 = vld [vmem:[#allocation4 + $0x5d0] sm:$0xff]
    %v881 = vld [vmem:[#allocation4 + $0x5d8] sm:$0xff]
    %v882 = vld [vmem:[#allocation4 + $0x5e0] sm:$0xff]
    %v883 = vld [vmem:[#allocation4 + $0x5e8] sm:$0xff]
    %v884 = vld [vmem:[#allocation4 + $0x5f0] sm:$0xff]
    %v885 = vld [vmem:[#allocation4 + $0x5f8] sm:$0xff]
    %v886 = vld [vmem:[#allocation4 + $0x600] sm:$0xff]
    %v887 = vld [vmem:[#allocation4 + $0x608] sm:$0xff]
    %v888 = vld [vmem:[#allocation4 + $0x610] sm:$0xff]
    %v889 = vld [vmem:[#allocation4 + $0x618] sm:$0xff]
    %v890 = vld [vmem:[#allocation4 + $0x620] sm:$0xff]
    %v891 = vld [vmem:[#allocation4 + $0x628] sm:$0xff]
    %v892 = vld [vmem:[#allocation4 + $0x630] sm:$0xff]
    %v893 = vld [vmem:[#allocation4 + $0x638] sm:$0xff]
    %v894 = vld [vmem:[#allocation4 + $0x640] sm:$0xff]
    %v895 = vld [vmem:[#allocation4 + $0x648] sm:$0xff]
    %v896 = vld [vmem:[#allocation4 + $0x650] sm:$0xff]
    %v897 = vld [vmem:[#allocation4 + $0x658] sm:$0xff]
    %v898 = vld [vmem:[#allocation4 + $0x660] sm:$0xff]
    %v899 = vld [vmem:[#allocation4 + $0x668] sm:$0xff]
    %v900 = vld [vmem:[#allocation4 + $0x670] sm:$0xff]
    %v901 = vld [vmem:[#allocation4 + $0x678] sm:$0xff]
    %v902 = vld [vmem:[#allocation4 + $0x680] sm:$0xff]
    %v903 = vld [vmem:[#allocation4 + $0x688] sm:$0xff]
    %v904 = vld [vmem:[#allocation4 + $0x690] sm:$0xff]
    %v905 = vld [vmem:[#allocation4 + $0x698] sm:$0xff]
    %v906 = vld [vmem:[#allocation4 + $0x6a0] sm:$0xff]
    %v907 = vld [vmem:[#allocation4 + $0x6a8] sm:$0xff]
    %v908 = vld [vmem:[#allocation4 + $0x6b0] sm:$0xff]
    %v909 = vld [vmem:[#allocation4 + $0x6b8] sm:$0xff]
    %v910 = vld [vmem:[#allocation4 + $0x6c0] sm:$0xff]
    %v911 = vld [vmem:[#allocation4 + $0x6c8] sm:$0xff]
    %v912 = vld [vmem:[#allocation4 + $0x6d0] sm:$0xff]
    %v913 = vld [vmem:[#allocation4 + $0x6d8] sm:$0xff]
    %v914 = vld [vmem:[#allocation4 + $0x6e0] sm:$0xff]
    %v915 = vld [vmem:[#allocation4 + $0x6e8] sm:$0xff]
    %v916 = vld [vmem:[#allocation4 + $0x6f0] sm:$0xff]
    %v917 = vld [vmem:[#allocation4 + $0x6f8] sm:$0xff]
    %v918 = vld [vmem:[#allocation4 + $0x700] sm:$0xff]
    %v919 = vld [vmem:[#allocation4 + $0x708] sm:$0xff]
    %v920 = vld [vmem:[#allocation4 + $0x710] sm:$0xff]
    %v921 = vld [vmem:[#allocation4 + $0x718] sm:$0xff]
    %v922 = vld [vmem:[#allocation4 + $0x720] sm:$0xff]
    %v923 = vld [vmem:[#allocation4 + $0x728] sm:$0xff]
    %v924 = vld [vmem:[#allocation4 + $0x730] sm:$0xff]
    %v925 = vld [vmem:[#allocation4 + $0x738] sm:$0xff]
    %v926 = vld [vmem:[#allocation4 + $0x740] sm:$0xff]
    %v927 = vld [vmem:[#allocation4 + $0x748] sm:$0xff]
    %v928 = vld [vmem:[#allocation4 + $0x750] sm:$0xff]
    %v929 = vld [vmem:[#allocation4 + $0x758] sm:$0xff]
    %v930 = vld [vmem:[#allocation4 + $0x760] sm:$0xff]
    %v931 = vld [vmem:[#allocation4 + $0x768] sm:$0xff]
    %v932 = vld [vmem:[#allocation4 + $0x770] sm:$0xff]
    %v933 = vld [vmem:[#allocation4 + $0x778] sm:$0xff]
    %v934 = vld [vmem:[#allocation4 + $0x780] sm:$0xff]
    %v935 = vld [vmem:[#allocation4 + $0x788] sm:$0xff]
    %v936 = vld [vmem:[#allocation4 + $0x790] sm:$0xff]
    %v937 = vld [vmem:[#allocation4 + $0x798] sm:$0xff]
    %v938 = vld [vmem:[#allocation4 + $0x7a0] sm:$0xff]
    %v939 = vld [vmem:[#allocation4 + $0x7a8] sm:$0xff]
    %v940 = vld [vmem:[#allocation4 + $0x7b0] sm:$0xff]
    %v941 = vld [vmem:[#allocation4 + $0x7b8] sm:$0xff]
    %v942 = vld [vmem:[#allocation4 + $0x7c0] sm:$0xff]
    %v943 = vld [vmem:[#allocation4 + $0x7c8] sm:$0xff]
    %v944 = vld [vmem:[#allocation4 + $0x7d0] sm:$0xff]
    %v945 = vld [vmem:[#allocation4 + $0x7d8] sm:$0xff]
    %v946 = vld [vmem:[#allocation4 + $0x7e0] sm:$0xff]
    %v947 = vld [vmem:[#allocation4 + $0x7e8] sm:$0xff]
    %v948 = vld [vmem:[#allocation4 + $0x7f0] sm:$0xff]
    %v949 = vld [vmem:[#allocation4 + $0x7f8] sm:$0xff]
    %v950 = vld [vmem:[#allocation4 + $0x800] sm:$0xff]
    %v951 = vld [vmem:[#allocation4 + $0x808] sm:$0xff]
    %v952 = vld [vmem:[#allocation4 + $0x810] sm:$0xff]
    %v953 = vld [vmem:[#allocation4 + $0x818] sm:$0xff]
    %v954 = vld [vmem:[#allocation4 + $0x820] sm:$0xff]
    %v955 = vld [vmem:[#allocation4 + $0x828] sm:$0xff]
    %v956 = vld [vmem:[#allocation4 + $0x830] sm:$0xff]
    %v957 = vld [vmem:[#allocation4 + $0x838] sm:$0xff]
    %v958 = vld [vmem:[#allocation4 + $0x840] sm:$0xff]
    %v959 = vld [vmem:[#allocation4 + $0x848] sm:$0xff]
    %v960 = vld [vmem:[#allocation4 + $0x850] sm:$0xff]
    %v961 = vld [vmem:[#allocation4 + $0x858] sm:$0xff]
    %v962 = vld [vmem:[#allocation4 + $0x860] sm:$0xff]
    %v963 = vld [vmem:[#allocation4 + $0x868] sm:$0xff]
    %v964 = vld [vmem:[#allocation4 + $0x870] sm:$0xff]
    %v965 = vld [vmem:[#allocation4 + $0x878] sm:$0xff]
    %v966 = vld [vmem:[#allocation4 + $0x880] sm:$0xff]
    %v967 = vld [vmem:[#allocation4 + $0x888] sm:$0xff]
    %v968 = vld [vmem:[#allocation4 + $0x890] sm:$0xff]
    %v969 = vld [vmem:[#allocation4 + $0x898] sm:$0xff]
    %v970 = vld [vmem:[#allocation4 + $0x8a0] sm:$0xff]
    %v971 = vld [vmem:[#allocation4 + $0x8a8] sm:$0xff]
    %v972 = vld [vmem:[#allocation4 + $0x8b0] sm:$0xff]
    %v973 = vld [vmem:[#allocation4 + $0x8b8] sm:$0xff]
    %v974 = vld [vmem:[#allocation4 + $0x8c0] sm:$0xff]
    %v975 = vld [vmem:[#allocation4 + $0x8c8] sm:$0xff]
    %v976 = vld [vmem:[#allocation4 + $0x8d0] sm:$0xff]
    %v977 = vld [vmem:[#allocation4 + $0x8d8] sm:$0xff]
    %v978 = vld [vmem:[#allocation4 + $0x8e0] sm:$0xff]
    %v979 = vld [vmem:[#allocation4 + $0x8e8] sm:$0xff]
    %v980 = vld [vmem:[#allocation4 + $0x8f0] sm:$0xff]
    %v981 = vld [vmem:[#allocation4 + $0x8f8] sm:$0xff]
    %v982 = vld [vmem:[#allocation4 + $0x900] sm:$0xff]
    %v983 = vld [vmem:[#allocation4 + $0x908] sm:$0xff]
    %v984 = vld [vmem:[#allocation4 + $0x910] sm:$0xff]
    %v985 = vld [vmem:[#allocation4 + $0x918] sm:$0xff]
    %v986 = vld [vmem:[#allocation4 + $0x920] sm:$0xff]
    %v987 = vld [vmem:[#allocation4 + $0x928] sm:$0xff]
    %v988 = vld [vmem:[#allocation4 + $0x930] sm:$0xff]
    %v989 = vld [vmem:[#allocation4 + $0x938] sm:$0xff]
    %v990 = vld [vmem:[#allocation4 + $0x940] sm:$0xff]
    %v991 = vld [vmem:[#allocation4 + $0x948] sm:$0xff]
    %v992 = vld [vmem:[#allocation4 + $0x950] sm:$0xff]
    %v993 = vld [vmem:[#allocation4 + $0x958] sm:$0xff]
    %v994 = vld [vmem:[#allocation4 + $0x960] sm:$0xff]
    %v995 = vld [vmem:[#allocation4 + $0x968] sm:$0xff]
    %v996 = vld [vmem:[#allocation4 + $0x970] sm:$0xff]
    %v997 = vld [vmem:[#allocation4 + $0x978] sm:$0xff]
    %v998 = vld [vmem:[#allocation4 + $0x980] sm:$0xff]
    %v999 = vld [vmem:[#allocation4 + $0x988] sm:$0xff]
    %v1000 = vld [vmem:[#allocation4 + $0x990] sm:$0xff]
    %v1001 = vld [vmem:[#allocation4 + $0x998] sm:$0xff]
    %v1002 = vld [vmem:[#allocation4 + $0x9a0] sm:$0xff]
    %v1003 = vld [vmem:[#allocation4 + $0x9a8] sm:$0xff]
    %v1004 = vld [vmem:[#allocation4 + $0x9b0] sm:$0xff]
    %v1005 = vld [vmem:[#allocation4 + $0x9b8] sm:$0xff]
    %v1006 = vld [vmem:[#allocation4 + $0x9c0] sm:$0xff]
    %v1007 = vld [vmem:[#allocation4 + $0x9c8] sm:$0xff]
    %v1008 = vld [vmem:[#allocation4 + $0x9d0] sm:$0xff]
    %v1009 = vld [vmem:[#allocation4 + $0x9d8] sm:$0xff]
    %v1010 = vld [vmem:[#allocation4 + $0x9e0] sm:$0xff]
    %v1011 = vld [vmem:[#allocation4 + $0x9e8] sm:$0xff]
    %v1012 = vld [vmem:[#allocation4 + $0x9f0] sm:$0xff]
    %v1013 = vld [vmem:[#allocation4 + $0x9f8] sm:$0xff]
    %v1014 = vld [vmem:[#allocation4 + $0xa00] sm:$0xff]
    %v1015 = vld [vmem:[#allocation4 + $0xa08] sm:$0xff]
    %v1016 = vld [vmem:[#allocation4 + $0xa10] sm:$0xff]
    %v1017 = vld [vmem:[#allocation4 + $0xa18] sm:$0xff]
    %v1018 = vld [vmem:[#allocation4 + $0xa20] sm:$0xff]
    %v1019 = vld [vmem:[#allocation4 + $0xa28] sm:$0xff]
    %v1020 = vld [vmem:[#allocation4 + $0xa30] sm:$0xff]
    %v1021 = vld [vmem:[#allocation4 + $0xa38] sm:$0xff]
    %v1022 = vld [vmem:[#allocation4 + $0xa40] sm:$0xff]
    %v1023 = vld [vmem:[#allocation4 + $0xa48] sm:$0xff]
    %v1024 = vld [vmem:[#allocation4 + $0xa50] sm:$0xff]
    %v1025 = vld [vmem:[#allocation4 + $0xa58] sm:$0xff]
    %v1026 = vld [vmem:[#allocation4 + $0xa60] sm:$0xff]
    %v1027 = vld [vmem:[#allocation4 + $0xa68] sm:$0xff]
    %v1028 = vld [vmem:[#allocation4 + $0xa70] sm:$0xff]
    %v1029 = vld [vmem:[#allocation4 + $0xa78] sm:$0xff]
    %v1030 = vld [vmem:[#allocation4 + $0xa80] sm:$0xff]
    %v1031 = vld [vmem:[#allocation4 + $0xa88] sm:$0xff]
    %v1032 = vld [vmem:[#allocation4 + $0xa90] sm:$0xff]
    %v1033 = vld [vmem:[#allocation4 + $0xa98] sm:$0xff]
    %v1034 = vld [vmem:[#allocation4 + $0xaa0] sm:$0xff]
    %v1035 = vld [vmem:[#allocation4 + $0xaa8] sm:$0xff]
    %v1036 = vld [vmem:[#allocation4 + $0xab0] sm:$0xff]
    %v1037 = vld [vmem:[#allocation4 + $0xab8] sm:$0xff]
    %v1038 = vld [vmem:[#allocation4 + $0xac0] sm:$0xff]
    %v1039 = vld [vmem:[#allocation4 + $0xac8] sm:$0xff]
    %v1040 = vld [vmem:[#allocation4 + $0xad0] sm:$0xff]
    %v1041 = vld [vmem:[#allocation4 + $0xad8] sm:$0xff]
    %v1042 = vld [vmem:[#allocation4 + $0xae0] sm:$0xff]
    %v1043 = vld [vmem:[#allocation4 + $0xae8] sm:$0xff]
    %v1044 = vld [vmem:[#allocation4 + $0xaf0] sm:$0xff]
    %v1045 = vld [vmem:[#allocation4 + $0xaf8] sm:$0xff]
    %v1046 = vld [vmem:[#allocation4 + $0xb00] sm:$0xff]
    %v1047 = vld [vmem:[#allocation4 + $0xb08] sm:$0xff]
    %v1048 = vld [vmem:[#allocation4 + $0xb10] sm:$0xff]
    %v1049 = vld [vmem:[#allocation4 + $0xb18] sm:$0xff]
    %v1050 = vld [vmem:[#allocation4 + $0xb20] sm:$0xff]
    %v1051 = vld [vmem:[#allocation4 + $0xb28] sm:$0xff]
    %v1052 = vld [vmem:[#allocation4 + $0xb30] sm:$0xff]
    %v1053 = vld [vmem:[#allocation4 + $0xb38] sm:$0xff]
    %v1054 = vld [vmem:[#allocation4 + $0xb40] sm:$0xff]
    %v1055 = vld [vmem:[#allocation4 + $0xb48] sm:$0xff]
    %v1056 = vld [vmem:[#allocation4 + $0xb50] sm:$0xff]
    %v1057 = vld [vmem:[#allocation4 + $0xb58] sm:$0xff]
    %v1058 = vld [vmem:[#allocation4 + $0xb60] sm:$0xff]
    %v1059 = vld [vmem:[#allocation4 + $0xb68] sm:$0xff]
    %v1060 = vld [vmem:[#allocation4 + $0xb70] sm:$0xff]
    %v1061 = vld [vmem:[#allocation4 + $0xb78] sm:$0xff]
    %v1062 = vld [vmem:[#allocation4 + $0xb80] sm:$0xff]
    %v1063 = vld [vmem:[#allocation4 + $0xb88] sm:$0xff]
    %v1064 = vld [vmem:[#allocation4 + $0xb90] sm:$0xff]
    %v1065 = vld [vmem:[#allocation4 + $0xb98] sm:$0xff]
    %v1066 = vld [vmem:[#allocation4 + $0xba0] sm:$0xff]
    %v1067 = vld [vmem:[#allocation4 + $0xba8] sm:$0xff]
    %v1068 = vld [vmem:[#allocation4 + $0xbb0] sm:$0xff]
    %v1069 = vld [vmem:[#allocation4 + $0xbb8] sm:$0xff]
    %v1070 = vld [vmem:[#allocation4 + $0xbc0] sm:$0xff]
    %v1071 = vld [vmem:[#allocation4 + $0xbc8] sm:$0xff]
    %v1072 = vld [vmem:[#allocation4 + $0xbd0] sm:$0xff]
    %v1073 = vld [vmem:[#allocation4 + $0xbd8] sm:$0xff]
    %v1074 = vld [vmem:[#allocation4 + $0xbe0] sm:$0xff]
    %v1075 = vld [vmem:[#allocation4 + $0xbe8] sm:$0xff]
    %v1076 = vld [vmem:[#allocation4 + $0xbf0] sm:$0xff]
    %v1077 = vld [vmem:[#allocation4 + $0xbf8] sm:$0xff]
    %v1078 = vld [vmem:[#allocation4 + $0xc00] sm:$0xff]
    %v1079 = vld [vmem:[#allocation4 + $0xc08] sm:$0xff]
    %v1080 = vld [vmem:[#allocation4 + $0xc10] sm:$0xff]
    %v1081 = vld [vmem:[#allocation4 + $0xc18] sm:$0xff]
    %v1082 = vld [vmem:[#allocation4 + $0xc20] sm:$0xff]
    %v1083 = vld [vmem:[#allocation4 + $0xc28] sm:$0xff]
    %v1084 = vld [vmem:[#allocation4 + $0xc30] sm:$0xff]
    %v1085 = vld [vmem:[#allocation4 + $0xc38] sm:$0xff]
    %v1086 = vld [vmem:[#allocation4 + $0xc40] sm:$0xff]
    %v1087 = vld [vmem:[#allocation4 + $0xc48] sm:$0xff]
    %v1088 = vld [vmem:[#allocation4 + $0xc50] sm:$0xff]
    %v1089 = vld [vmem:[#allocation4 + $0xc58] sm:$0xff]
    %v1090 = vld [vmem:[#allocation4 + $0xc60] sm:$0xff]
    %v1091 = vld [vmem:[#allocation4 + $0xc68] sm:$0xff]
    %v1092 = vld [vmem:[#allocation4 + $0xc70] sm:$0xff]
    %v1093 = vld [vmem:[#allocation4 + $0xc78] sm:$0xff]
    %v1094 = vld [vmem:[#allocation4 + $0xc80] sm:$0xff]
    %v1095 = vld [vmem:[#allocation4 + $0xc88] sm:$0xff]
    %v1096 = vld [vmem:[#allocation4 + $0xc90] sm:$0xff]
    %v1097 = vld [vmem:[#allocation4 + $0xc98] sm:$0xff]
    %v1098 = vld [vmem:[#allocation4 + $0xca0] sm:$0xff]
    %v1099 = vld [vmem:[#allocation4 + $0xca8] sm:$0xff]
    %v1100 = vld [vmem:[#allocation4 + $0xcb0] sm:$0xff]
    %v1101 = vld [vmem:[#allocation4 + $0xcb8] sm:$0xff]
    %v1102 = vld [vmem:[#allocation4 + $0xcc0] sm:$0xff]
    %v1103 = vld [vmem:[#allocation4 + $0xcc8] sm:$0xff]
    %v1104 = vld [vmem:[#allocation4 + $0xcd0] sm:$0xff]
    %v1105 = vld [vmem:[#allocation4 + $0xcd8] sm:$0xff]
    %v1106 = vld [vmem:[#allocation4 + $0xce0] sm:$0xff]
    %v1107 = vld [vmem:[#allocation4 + $0xce8] sm:$0xff]
    %v1108 = vld [vmem:[#allocation4 + $0xcf0] sm:$0xff]
    %v1109 = vld [vmem:[#allocation4 + $0xcf8] sm:$0xff]
    %v1110 = vld [vmem:[#allocation4 + $0xd00] sm:$0xff]
    %v1111 = vld [vmem:[#allocation4 + $0xd08] sm:$0xff]
    %v1112 = vld [vmem:[#allocation4 + $0xd10] sm:$0xff]
    %v1113 = vld [vmem:[#allocation4 + $0xd18] sm:$0xff]
    %v1114 = vld [vmem:[#allocation4 + $0xd20] sm:$0xff]
    %v1115 = vld [vmem:[#allocation4 + $0xd28] sm:$0xff]
    %v1116 = vld [vmem:[#allocation4 + $0xd30] sm:$0xff]
    %v1117 = vld [vmem:[#allocation4 + $0xd38] sm:$0xff]
    %v1118 = vld [vmem:[#allocation4 + $0xd40] sm:$0xff]
    %v1119 = vld [vmem:[#allocation4 + $0xd48] sm:$0xff]
    %v1120 = vld [vmem:[#allocation4 + $0xd50] sm:$0xff]
    %v1121 = vld [vmem:[#allocation4 + $0xd58] sm:$0xff]
    %v1122 = vld [vmem:[#allocation4 + $0xd60] sm:$0xff]
    %v1123 = vld [vmem:[#allocation4 + $0xd68] sm:$0xff]
    %v1124 = vld [vmem:[#allocation4 + $0xd70] sm:$0xff]
    %v1125 = vld [vmem:[#allocation4 + $0xd78] sm:$0xff]
    %v1126 = vld [vmem:[#allocation4 + $0xd80] sm:$0xff]
    %v1127 = vld [vmem:[#allocation4 + $0xd88] sm:$0xff]
    %v1128 = vld [vmem:[#allocation4 + $0xd90] sm:$0xff]
    %v1129 = vld [vmem:[#allocation4 + $0xd98] sm:$0xff]
    %v1130 = vld [vmem:[#allocation4 + $0xda0] sm:$0xff]
    %v1131 = vld [vmem:[#allocation4 + $0xda8] sm:$0xff]
    %v1132 = vld [vmem:[#allocation4 + $0xdb0] sm:$0xff]
    %v1133 = vld [vmem:[#allocation4 + $0xdb8] sm:$0xff]
    %v1134 = vld [vmem:[#allocation4 + $0xdc0] sm:$0xff]
    %v1135 = vld [vmem:[#allocation4 + $0xdc8] sm:$0xff]
    %v1136 = vld [vmem:[#allocation4 + $0xdd0] sm:$0xff]
    %v1137 = vld [vmem:[#allocation4 + $0xdd8] sm:$0xff]
    %v1138 = vld [vmem:[#allocation4 + $0xde0] sm:$0xff]
    %v1139 = vld [vmem:[#allocation4 + $0xde8] sm:$0xff]
    %v1140 = vld [vmem:[#allocation4 + $0xdf0] sm:$0xff]
    %v1141 = vld [vmem:[#allocation4 + $0xdf8] sm:$0xff]
    %v1142 = vld [vmem:[#allocation4 + $0xe00] sm:$0xff]
    %v1143 = vld [vmem:[#allocation4 + $0xe08] sm:$0xff]
    %v1144 = vld [vmem:[#allocation4 + $0xe10] sm:$0xff]
    %v1145 = vld [vmem:[#allocation4 + $0xe18] sm:$0xff]
    %v1146 = vld [vmem:[#allocation4 + $0xe20] sm:$0xff]
    %v1147 = vld [vmem:[#allocation4 + $0xe28] sm:$0xff]
    %v1148 = vld [vmem:[#allocation4 + $0xe30] sm:$0xff]
    %v1149 = vld [vmem:[#allocation4 + $0xe38] sm:$0xff]
    %v1150 = vld [vmem:[#allocation4 + $0xe40] sm:$0xff]
    %v1151 = vld [vmem:[#allocation4 + $0xe48] sm:$0xff]
    %v1152 = vld [vmem:[#allocation4 + $0xe50] sm:$0xff]
    %v1153 = vld [vmem:[#allocation4 + $0xe58] sm:$0xff]
    %v1154 = vld [vmem:[#allocation4 + $0xe60] sm:$0xff]
    %v1155 = vld [vmem:[#allocation4 + $0xe68] sm:$0xff]
    %v1156 = vld [vmem:[#allocation4 + $0xe70] sm:$0xff]
    %v1157 = vld [vmem:[#allocation4 + $0xe78] sm:$0xff]
    %v1158 = vld [vmem:[#allocation4 + $0xe80] sm:$0xff]
    %v1159 = vld [vmem:[#allocation4 + $0xe88] sm:$0xff]
    %v1160 = vld [vmem:[#allocation4 + $0xe90] sm:$0xff]
    %v1161 = vld [vmem:[#allocation4 + $0xe98] sm:$0xff]
    %v1162 = vld [vmem:[#allocation4 + $0xea0] sm:$0xff]
    %v1163 = vld [vmem:[#allocation4 + $0xea8] sm:$0xff]
    %v1164 = vld [vmem:[#allocation4 + $0xeb0] sm:$0xff]
    %v1165 = vld [vmem:[#allocation4 + $0xeb8] sm:$0xff]
    %v1166 = vld [vmem:[#allocation4 + $0xec0] sm:$0xff]
    %v1167 = vld [vmem:[#allocation4 + $0xec8] sm:$0xff]
    %v1168 = vld [vmem:[#allocation4 + $0xed0] sm:$0xff]
    %v1169 = vld [vmem:[#allocation4 + $0xed8] sm:$0xff]
    %v1170 = vld [vmem:[#allocation4 + $0xee0] sm:$0xff]
    %v1171 = vld [vmem:[#allocation4 + $0xee8] sm:$0xff]
    %v1172 = vld [vmem:[#allocation4 + $0xef0] sm:$0xff]
    %v1173 = vld [vmem:[#allocation4 + $0xef8] sm:$0xff]
    %v1174 = vld [vmem:[#allocation4 + $0xf00] sm:$0xff]
    %v1175 = vld [vmem:[#allocation4 + $0xf08] sm:$0xff]
    %v1176 = vld [vmem:[#allocation4 + $0xf10] sm:$0xff]
    %v1177 = vld [vmem:[#allocation4 + $0xf18] sm:$0xff]
    %v1178 = vld [vmem:[#allocation4 + $0xf20] sm:$0xff]
    %v1179 = vld [vmem:[#allocation4 + $0xf28] sm:$0xff]
    %v1180 = vld [vmem:[#allocation4 + $0xf30] sm:$0xff]
    %v1181 = vld [vmem:[#allocation4 + $0xf38] sm:$0xff]
    %v1182 = vld [vmem:[#allocation4 + $0xf40] sm:$0xff]
    %v1183 = vld [vmem:[#allocation4 + $0xf48] sm:$0xff]
    %v1184 = vld [vmem:[#allocation4 + $0xf50] sm:$0xff]
    %v1185 = vld [vmem:[#allocation4 + $0xf58] sm:$0xff]
    %v1186 = vld [vmem:[#allocation4 + $0xf60] sm:$0xff]
    %v1187 = vld [vmem:[#allocation4 + $0xf68] sm:$0xff]
    %v1188 = vld [vmem:[#allocation4 + $0xf70] sm:$0xff]
    %v1189 = vld [vmem:[#allocation4 + $0xf78] sm:$0xff]
    %v1190 = vld [vmem:[#allocation4 + $0xf80] sm:$0xff]
    %v1191 = vld [vmem:[#allocation4 + $0xf88] sm:$0xff]
    %v1192 = vld [vmem:[#allocation4 + $0xf90] sm:$0xff]
    %v1193 = vld [vmem:[#allocation4 + $0xf98] sm:$0xff]
    %v1194 = vld [vmem:[#allocation4 + $0xfa0] sm:$0xff]
    %v1195 = vld [vmem:[#allocation4 + $0xfa8] sm:$0xff]
    %v1196 = vld [vmem:[#allocation4 + $0xfb0] sm:$0xff]
    %v1197 = vld [vmem:[#allocation4 + $0xfb8] sm:$0xff]
    %v1198 = vld [vmem:[#allocation4 + $0xfc0] sm:$0xff]
    %v1199 = vld [vmem:[#allocation4 + $0xfc8] sm:$0xff]
    %v1200 = vld [vmem:[#allocation4 + $0xfd0] sm:$0xff]
    %v1201 = vld [vmem:[#allocation4 + $0xfd8] sm:$0xff]
    %v1202 = vld [vmem:[#allocation4 + $0xfe0] sm:$0xff]
    %v1203 = vld [vmem:[#allocation4 + $0xfe8] sm:$0xff]
    %v1204 = vld [vmem:[#allocation4 + $0xff0] sm:$0xff]
    %v1205 = vld [vmem:[#allocation4 + $0xff8] sm:$0xff]
    %v1206 = vld [vmem:[%s1 + $0x8] sm:$0xff]
    %v1207 = vld [vmem:[%s1 + $0x10] sm:$0xff]
    %v1208 = vpack.c.bf16 %v652, %v652
    %v1209 = vpack.c.bf16 %v653, %v653
    %v1210 = vpack.c.bf16 %v654, %v654
    %v1211 = vpack.c.bf16 %v655, %v655
    %v1214 = vlaneseq
    %v1215 = vshrl.u32 %v1214, 7
    %v1216 = vsub.s32 0, %v1215
    %v1217 = vrot.slane %v1206, %v1216
    %v1218 = vlaneseq
    %v1219 = vshrl.u32 %v1218, 7
    %v1220 = vsub.s32 1, %v1219
    %v1221 = vrot.slane %v1206, %v1220
    %v1222 = vlaneseq
    %v1223 = vshrl.u32 %v1222, 7
    %v1224 = vsub.s32 2, %v1223
    %v1225 = vrot.slane %v1206, %v1224
    %v1226 = vlaneseq
    %v1227 = vshrl.u32 %v1226, 7
    %v1228 = vsub.s32 3, %v1227
    %v1229 = vrot.slane %v1206, %v1228
    %v1230 = vlaneseq
    %v1231 = vshrl.u32 %v1230, 7
    %v1232 = vsub.s32 4, %v1231
    %v1233 = vrot.slane %v1206, %v1232
    %v1234 = vlaneseq
    %v1235 = vshrl.u32 %v1234, 7
    %v1236 = vsub.s32 5, %v1235
    %v1237 = vrot.slane %v1206, %v1236
    %v1238 = vlaneseq
    %v1239 = vshrl.u32 %v1238, 7
    %v1240 = vsub.s32 6, %v1239
    %v1241 = vrot.slane %v1206, %v1240
    %v1242 = vlaneseq
    %v1243 = vshrl.u32 %v1242, 7
    %v1244 = vsub.s32 7, %v1243
    %v1245 = vrot.slane %v1206, %v1244
    %v1246 = vlaneseq
    %v1247 = vshrl.u32 %v1246, 7
    %v1248 = vsub.s32 0, %v1247
    %v1249 = vrot.slane %v1207, %v1248
    %v1250 = vlaneseq
    %v1251 = vshrl.u32 %v1250, 7
    %v1252 = vsub.s32 1, %v1251
    %v1253 = vrot.slane %v1207, %v1252
    %v1254 = vlaneseq
    %v1255 = vshrl.u32 %v1254, 7
    %v1256 = vsub.s32 2, %v1255
    %v1257 = vrot.slane %v1207, %v1256
    %v1258 = vlaneseq
    %v1259 = vshrl.u32 %v1258, 7
    %v1260 = vsub.s32 3, %v1259
    %v1261 = vrot.slane %v1207, %v1260
    %v1262 = vlaneseq
    %v1263 = vshrl.u32 %v1262, 7
    %v1264 = vsub.s32 4, %v1263
    %v1265 = vrot.slane %v1207, %v1264
    %v1266 = vlaneseq
    %v1267 = vshrl.u32 %v1266, 7
    %v1268 = vsub.s32 5, %v1267
    %v1269 = vrot.slane %v1207, %v1268
    %v1270 = vlaneseq
    %v1271 = vshrl.u32 %v1270, 7
    %v1272 = vsub.s32 6, %v1271
    %v1273 = vrot.slane %v1207, %v1272
    %v1274 = vlaneseq
    %v1275 = vshrl.u32 %v1274, 7
    %v1276 = vsub.s32 7, %v1275
    %v1277 = vrot.slane %v1207, %v1276
    %1294 = vmatprep.subr.bf16.mxu0 %v695
    %1295 = vmatpush1.bf16.msra.mxu0 %v694
    %1296 = vmatprep.subr.bf16.mxu0 %v711
    %1297 = vmatpush1.bf16.msra.mxu0 %v710
    %1298 = vmatprep.subr.bf16.mxu0 %v727
    %1299 = vmatpush1.bf16.msra.mxu0 %v726
    %1300 = vmatprep.subr.bf16.mxu0 %v743
    %1301 = vmatpush1.bf16.msra.mxu0 %v742
    %1302 = vmatprep.subr.bf16.mxu0 %v759
    %1303 = vmatpush1.bf16.msra.mxu0 %v758
    %1304 = vmatprep.subr.bf16.mxu0 %v775
    %1305 = vmatpush1.bf16.msra.mxu0 %v774
    %1306 = vmatprep.subr.bf16.mxu0 %v791
    %1307 = vmatpush1.bf16.msra.mxu0 %v790
    %1308 = vmatprep.subr.bf16.mxu0 %v807
    %1309 = vmatpush1.bf16.msra.mxu0 %v806
    %1310 = vmatprep.subr.bf16.mxu0 %v823
    %1311 = vmatpush1.bf16.msra.mxu0 %v822
    %1312 = vmatprep.subr.bf16.mxu0 %v839
    %1313 = vmatpush1.bf16.msra.mxu0 %v838
    %1314 = vmatprep.subr.bf16.mxu0 %v855
    %1315 = vmatpush1.bf16.msra.mxu0 %v854
    %1316 = vmatprep.subr.bf16.mxu0 %v871
    %1317 = vmatpush1.bf16.msra.mxu0 %v870
    %1318 = vmatprep.subr.bf16.mxu0 %v887
    %1319 = vmatpush1.bf16.msra.mxu0 %v886
    %1320 = vmatprep.subr.bf16.mxu0 %v903
    %1321 = vmatpush1.bf16.msra.mxu0 %v902
    %1322 = vmatprep.subr.bf16.mxu0 %v919
    %1323 = vmatpush1.bf16.msra.mxu0 %v918
    %1324 = vmatprep.subr.bf16.mxu0 %v935
    %1325 = vmatpush1.bf16.msra.mxu0 %v934
    %1326 = vmatprep.mubr.bf16.mxu0 %v1209
    %1327 = vmatmul.mubr.bf16.gmra.mrb[0].mxu0 %v1208
    %v1328 = vpop.f32.mrb[0].mxu0
    %v1329 = vadd.f32 %v1217, %v1328
    %v1330 = vpop.f32.mrb[0].mxu0
    %v1331 = vadd.f32 %v1221, %v1330
    %v1332 = vpop.f32.mrb[0].mxu0
    %v1333 = vpop.f32.mrb[0].mxu0
    %1334 = vdwg.mxu0
    %1335 = vmatprep.subr.bf16.mxu0 %v951
    %1336 = vmatpush1.bf16.msra.mxu0 %v950
    %1337 = vmatprep.subr.bf16.mxu0 %v967
    %1338 = vmatpush1.bf16.msra.mxu0 %v966
    %1339 = vmatprep.subr.bf16.mxu0 %v983
    %1340 = vmatpush1.bf16.msra.mxu0 %v982
    %1341 = vmatprep.subr.bf16.mxu0 %v999
    %1342 = vmatpush1.bf16.msra.mxu0 %v998
    %1343 = vmatprep.subr.bf16.mxu0 %v1015
    %1344 = vmatpush1.bf16.msra.mxu0 %v1014
    %1345 = vmatprep.subr.bf16.mxu0 %v1031
    %1346 = vmatpush1.bf16.msra.mxu0 %v1030
    %1347 = vmatprep.subr.bf16.mxu0 %v1047
    %1348 = vmatpush1.bf16.msra.mxu0 %v1046
    %1349 = vmatprep.subr.bf16.mxu0 %v1063
    %1350 = vmatpush1.bf16.msra.mxu0 %v1062
    %1351 = vmatprep.subr.bf16.mxu0 %v1079
    %1352 = vmatpush1.bf16.msra.mxu0 %v1078
    %1353 = vmatprep.subr.bf16.mxu0 %v1095
    %1354 = vmatpush1.bf16.msra.mxu0 %v1094
    %1355 = vmatprep.subr.bf16.mxu0 %v1111
    %1356 = vmatpush1.bf16.msra.mxu0 %v1110
    %1357 = vmatprep.subr.bf16.mxu0 %v1127
    %1358 = vmatpush1.bf16.msra.mxu0 %v1126
    %1359 = vmatprep.subr.bf16.mxu0 %v1143
    %1360 = vmatpush1.bf16.msra.mxu0 %v1142
    %1361 = vmatprep.subr.bf16.mxu0 %v1159
    %1362 = vmatpush1.bf16.msra.mxu0 %v1158
    %1363 = vmatprep.subr.bf16.mxu0 %v1175
    %1364 = vmatpush1.bf16.msra.mxu0 %v1174
    %1365 = vmatprep.subr.bf16.mxu0 %v1191
    %1366 = vmatpush1.bf16.msra.mxu0 %v1190
    %1367 = vmatprep.mubr.bf16.mxu0 %v1211
    %1368 = vmatmul.mubr.bf16.gmra.mrb[0].mxu0 %v1210
    %v1369 = vpop.f32.mrb[0].mxu0
    %v1370 = vadd.f32 %v1329, %v1369
    %v1371 = vpop.f32.mrb[0].mxu0
    %v1372 = vadd.f32 %v1331, %v1371
    %v1373 = vpop.f32.mrb[0].mxu0
    %v1374 = vpop.f32.mrb[0].mxu0
    %1375 = vdwg.mxu0
    %1376 = vmatprep.subr.bf16.mxu0 %v697
    %1377 = vmatpush1.bf16.msra.mxu0 %v696
    %1378 = vmatprep.subr.bf16.mxu0 %v713
    %1379 = vmatpush1.bf16.msra.mxu0 %v712
    %1380 = vmatprep.subr.bf16.mxu0 %v729
    %1381 = vmatpush1.bf16.msra.mxu0 %v728
    %1382 = vmatprep.subr.bf16.mxu0 %v745
    %1383 = vmatpush1.bf16.msra.mxu0 %v744
    %1384 = vmatprep.subr.bf16.mxu0 %v761
    %1385 = vmatpush1.bf16.msra.mxu0 %v760
    %1386 = vmatprep.subr.bf16.mxu0 %v777
    %1387 = vmatpush1.bf16.msra.mxu0 %v776
    %1388 = vmatprep.subr.bf16.mxu0 %v793
    %1389 = vmatpush1.bf16.msra.mxu0 %v792
    %1390 = vmatprep.subr.bf16.mxu0 %v809
    %1391 = vmatpush1.bf16.msra.mxu0 %v808
    %1392 = vmatprep.subr.bf16.mxu0 %v825
    %1393 = vmatpush1.bf16.msra.mxu0 %v824
    %1394 = vmatprep.subr.bf16.mxu0 %v841
    %1395 = vmatpush1.bf16.msra.mxu0 %v840
    %1396 = vmatprep.subr.bf16.mxu0 %v857
    %1397 = vmatpush1.bf16.msra.mxu0 %v856
    %1398 = vmatprep.subr.bf16.mxu0 %v873
    %1399 = vmatpush1.bf16.msra.mxu0 %v872
    %1400 = vmatprep.subr.bf16.mxu0 %v889
    %1401 = vmatpush1.bf16.msra.mxu0 %v888
    %1402 = vmatprep.subr.bf16.mxu0 %v905
    %1403 = vmatpush1.bf16.msra.mxu0 %v904
    %1404 = vmatprep.subr.bf16.mxu0 %v921
    %1405 = vmatpush1.bf16.msra.mxu0 %v920
    %1406 = vmatprep.subr.bf16.mxu0 %v937
    %1407 = vmatpush1.bf16.msra.mxu0 %v936
    %1408 = vmatprep.mubr.bf16.mxu0 %v1209
    %1409 = vmatmul.mubr.bf16.gmra.mrb[0].mxu0 %v1208
    %v1410 = vpop.f32.mrb[0].mxu0
    %v1411 = vadd.f32 %v1225, %v1410
    %v1412 = vpop.f32.mrb[0].mxu0
    %v1413 = vadd.f32 %v1229, %v1412
    %v1414 = vpop.f32.mrb[0].mxu0
    %v1415 = vpop.f32.mrb[0].mxu0
    %1416 = vdwg.mxu0
    %1417 = vmatprep.subr.bf16.mxu0 %v953
    %1418 = vmatpush1.bf16.msra.mxu0 %v952
    %1419 = vmatprep.subr.bf16.mxu0 %v969
    %1420 = vmatpush1.bf16.msra.mxu0 %v968
    %1421 = vmatprep.subr.bf16.mxu0 %v985
    %1422 = vmatpush1.bf16.msra.mxu0 %v984
    %1423 = vmatprep.subr.bf16.mxu0 %v1001
    %1424 = vmatpush1.bf16.msra.mxu0 %v1000
    %1425 = vmatprep.subr.bf16.mxu0 %v1017
    %1426 = vmatpush1.bf16.msra.mxu0 %v1016
    %1427 = vmatprep.subr.bf16.mxu0 %v1033
    %1428 = vmatpush1.bf16.msra.mxu0 %v1032
    %1429 = vmatprep.subr.bf16.mxu0 %v1049
    %1430 = vmatpush1.bf16.msra.mxu0 %v1048
    %1431 = vmatprep.subr.bf16.mxu0 %v1065
    %1432 = vmatpush1.bf16.msra.mxu0 %v1064
    %1433 = vmatprep.subr.bf16.mxu0 %v1081
    %1434 = vmatpush1.bf16.msra.mxu0 %v1080
    %1435 = vmatprep.subr.bf16.mxu0 %v1097
    %1436 = vmatpush1.bf16.msra.mxu0 %v1096
    %1437 = vmatprep.subr.bf16.mxu0 %v1113
    %1438 = vmatpush1.bf16.msra.mxu0 %v1112
    %1439 = vmatprep.subr.bf16.mxu0 %v1129
    %1440 = vmatpush1.bf16.msra.mxu0 %v1128
    %1441 = vmatprep.subr.bf16.mxu0 %v1145
    %1442 = vmatpush1.bf16.msra.mxu0 %v1144
    %1443 = vmatprep.subr.bf16.mxu0 %v1161
    %1444 = vmatpush1.bf16.msra.mxu0 %v1160
    %1445 = vmatprep.subr.bf16.mxu0 %v1177
    %1446 = vmatpush1.bf16.msra.mxu0 %v1176
    %1447 = vmatprep.subr.bf16.mxu0 %v1193
    %1448 = vmatpush1.bf16.msra.mxu0 %v1192
    %1449 = vmatprep.mubr.bf16.mxu0 %v1211
    %1450 = vmatmul.mubr.bf16.gmra.mrb[0].mxu0 %v1210
    %v1451 = vpop.f32.mrb[0].mxu0
    %v1452 = vadd.f32 %v1411, %v1451
    %v1453 = vpop.f32.mrb[0].mxu0
    %v1454 = vadd.f32 %v1413, %v1453
    %v1455 = vpop.f32.mrb[0].mxu0
    %v1456 = vpop.f32.mrb[0].mxu0
    %1457 = vdwg.mxu0
    %1458 = vmatprep.subr.bf16.mxu0 %v699
    %1459 = vmatpush1.bf16.msra.mxu0 %v698
    %1460 = vmatprep.subr.bf16.mxu0 %v715
    %1461 = vmatpush1.bf16.msra.mxu0 %v714
    %1462 = vmatprep.subr.bf16.mxu0 %v731
    %1463 = vmatpush1.bf16.msra.mxu0 %v730
    %1464 = vmatprep.subr.bf16.mxu0 %v747
    %1465 = vmatpush1.bf16.msra.mxu0 %v746
    %1466 = vmatprep.subr.bf16.mxu0 %v763
    %1467 = vmatpush1.bf16.msra.mxu0 %v762
    %1468 = vmatprep.subr.bf16.mxu0 %v779
    %1469 = vmatpush1.bf16.msra.mxu0 %v778
    %1470 = vmatprep.subr.bf16.mxu0 %v795
    %1471 = vmatpush1.bf16.msra.mxu0 %v794
    %1472 = vmatprep.subr.bf16.mxu0 %v811
    %1473 = vmatpush1.bf16.msra.mxu0 %v810
    %1474 = vmatprep.subr.bf16.mxu0 %v827
    %1475 = vmatpush1.bf16.msra.mxu0 %v826
    %1476 = vmatprep.subr.bf16.mxu0 %v843
    %1477 = vmatpush1.bf16.msra.mxu0 %v842
    %1478 = vmatprep.subr.bf16.mxu0 %v859
    %1479 = vmatpush1.bf16.msra.mxu0 %v858
    %1480 = vmatprep.subr.bf16.mxu0 %v875
    %1481 = vmatpush1.bf16.msra.mxu0 %v874
    %1482 = vmatprep.subr.bf16.mxu0 %v891
    %1483 = vmatpush1.bf16.msra.mxu0 %v890
    %1484 = vmatprep.subr.bf16.mxu0 %v907
    %1485 = vmatpush1.bf16.msra.mxu0 %v906
    %1486 = vmatprep.subr.bf16.mxu0 %v923
    %1487 = vmatpush1.bf16.msra.mxu0 %v922
    %1488 = vmatprep.subr.bf16.mxu0 %v939
    %1489 = vmatpush1.bf16.msra.mxu0 %v938
    %1490 = vmatprep.mubr.bf16.mxu0 %v1209
    %1491 = vmatmul.mubr.bf16.gmra.mrb[0].mxu0 %v1208
    %v1492 = vpop.f32.mrb[0].mxu0
    %v1493 = vadd.f32 %v1233, %v1492
    %v1494 = vpop.f32.mrb[0].mxu0
    %v1495 = vadd.f32 %v1237, %v1494
    %v1496 = vpop.f32.mrb[0].mxu0
    %v1497 = vpop.f32.mrb[0].mxu0
    %1498 = vdwg.mxu0
    %1499 = vmatprep.subr.bf16.mxu0 %v955
    %1500 = vmatpush1.bf16.msra.mxu0 %v954
    %1501 = vmatprep.subr.bf16.mxu0 %v971
    %1502 = vmatpush1.bf16.msra.mxu0 %v970
    %1503 = vmatprep.subr.bf16.mxu0 %v987
    %1504 = vmatpush1.bf16.msra.mxu0 %v986
    %1505 = vmatprep.subr.bf16.mxu0 %v1003
    %1506 = vmatpush1.bf16.msra.mxu0 %v1002
    %1507 = vmatprep.subr.bf16.mxu0 %v1019
    %1508 = vmatpush1.bf16.msra.mxu0 %v1018
    %1509 = vmatprep.subr.bf16.mxu0 %v1035
    %1510 = vmatpush1.bf16.msra.mxu0 %v1034
    %1511 = vmatprep.subr.bf16.mxu0 %v1051
    %1512 = vmatpush1.bf16.msra.mxu0 %v1050
    %1513 = vmatprep.subr.bf16.mxu0 %v1067
    %1514 = vmatpush1.bf16.msra.mxu0 %v1066
    %1515 = vmatprep.subr.bf16.mxu0 %v1083
    %1516 = vmatpush1.bf16.msra.mxu0 %v1082
    %1517 = vmatprep.subr.bf16.mxu0 %v1099
    %1518 = vmatpush1.bf16.msra.mxu0 %v1098
    %1519 = vmatprep.subr.bf16.mxu0 %v1115
    %1520 = vmatpush1.bf16.msra.mxu0 %v1114
    %1521 = vmatprep.subr.bf16.mxu0 %v1131
    %1522 = vmatpush1.bf16.msra.mxu0 %v1130
    %1523 = vmatprep.subr.bf16.mxu0 %v1147
    %1524 = vmatpush1.bf16.msra.mxu0 %v1146
    %1525 = vmatprep.subr.bf16.mxu0 %v1163
    %1526 = vmatpush1.bf16.msra.mxu0 %v1162
    %1527 = vmatprep.subr.bf16.mxu0 %v1179
    %1528 = vmatpush1.bf16.msra.mxu0 %v1178
    %1529 = vmatprep.subr.bf16.mxu0 %v1195
    %1530 = vmatpush1.bf16.msra.mxu0 %v1194
    %1531 = vmatprep.mubr.bf16.mxu0 %v1211
    %1532 = vmatmul.mubr.bf16.gmra.mrb[0].mxu0 %v1210
    %v1533 = vpop.f32.mrb[0].mxu0
    %v1534 = vadd.f32 %v1493, %v1533
    %v1535 = vpop.f32.mrb[0].mxu0
    %v1536 = vadd.f32 %v1495, %v1535
    %v1537 = vpop.f32.mrb[0].mxu0
    %v1538 = vpop.f32.mrb[0].mxu0
    %1539 = vdwg.mxu0
    %1540 = vmatprep.subr.bf16.mxu0 %v701
    %1541 = vmatpush1.bf16.msra.mxu0 %v700
    %1542 = vmatprep.subr.bf16.mxu0 %v717
    %1543 = vmatpush1.bf16.msra.mxu0 %v716
    %1544 = vmatprep.subr.bf16.mxu0 %v733
    %1545 = vmatpush1.bf16.msra.mxu0 %v732
    %1546 = vmatprep.subr.bf16.mxu0 %v749
    %1547 = vmatpush1.bf16.msra.mxu0 %v748
    %1548 = vmatprep.subr.bf16.mxu0 %v765
    %1549 = vmatpush1.bf16.msra.mxu0 %v764
    %1550 = vmatprep.subr.bf16.mxu0 %v781
    %1551 = vmatpush1.bf16.msra.mxu0 %v780
    %1552 = vmatprep.subr.bf16.mxu0 %v797
    %1553 = vmatpush1.bf16.msra.mxu0 %v796
    %1554 = vmatprep.subr.bf16.mxu0 %v813
    %1555 = vmatpush1.bf16.msra.mxu0 %v812
    %1556 = vmatprep.subr.bf16.mxu0 %v829
    %1557 = vmatpush1.bf16.msra.mxu0 %v828
    %1558 = vmatprep.subr.bf16.mxu0 %v845
    %1559 = vmatpush1.bf16.msra.mxu0 %v844
    %1560 = vmatprep.subr.bf16.mxu0 %v861
    %1561 = vmatpush1.bf16.msra.mxu0 %v860
    %1562 = vmatprep.subr.bf16.mxu0 %v877
    %1563 = vmatpush1.bf16.msra.mxu0 %v876
    %1564 = vmatprep.subr.bf16.mxu0 %v893
    %1565 = vmatpush1.bf16.msra.mxu0 %v892
    %1566 = vmatprep.subr.bf16.mxu0 %v909
    %1567 = vmatpush1.bf16.msra.mxu0 %v908
    %1568 = vmatprep.subr.bf16.mxu0 %v925
    %1569 = vmatpush1.bf16.msra.mxu0 %v924
    %1570 = vmatprep.subr.bf16.mxu0 %v941
    %1571 = vmatpush1.bf16.msra.mxu0 %v940
    %1572 = vmatprep.mubr.bf16.mxu0 %v1209
    %1573 = vmatmul.mubr.bf16.gmra.mrb[0].mxu0 %v1208
    %v1574 = vpop.f32.mrb[0].mxu0
    %v1575 = vadd.f32 %v1241, %v1574
    %v1576 = vpop.f32.mrb[0].mxu0
    %v1577 = vadd.f32 %v1245, %v1576
    %v1578 = vpop.f32.mrb[0].mxu0
    %v1579 = vpop.f32.mrb[0].mxu0
    %1580 = vdwg.mxu0
    %1581 = vmatprep.subr.bf16.mxu0 %v957
    %1582 = vmatpush1.bf16.msra.mxu0 %v956
    %1583 = vmatprep.subr.bf16.mxu0 %v973
    %1584 = vmatpush1.bf16.msra.mxu0 %v972
    %1585 = vmatprep.subr.bf16.mxu0 %v989
    %1586 = vmatpush1.bf16.msra.mxu0 %v988
    %1587 = vmatprep.subr.bf16.mxu0 %v1005
    %1588 = vmatpush1.bf16.msra.mxu0 %v1004
    %1589 = vmatprep.subr.bf16.mxu0 %v1021
    %1590 = vmatpush1.bf16.msra.mxu0 %v1020
    %1591 = vmatprep.subr.bf16.mxu0 %v1037
    %1592 = vmatpush1.bf16.msra.mxu0 %v1036
    %1593 = vmatprep.subr.bf16.mxu0 %v1053
    %1594 = vmatpush1.bf16.msra.mxu0 %v1052
    %1595 = vmatprep.subr.bf16.mxu0 %v1069
    %1596 = vmatpush1.bf16.msra.mxu0 %v1068
    %1597 = vmatprep.subr.bf16.mxu0 %v1085
    %1598 = vmatpush1.bf16.msra.mxu0 %v1084
    %1599 = vmatprep.subr.bf16.mxu0 %v1101
    %1600 = vmatpush1.bf16.msra.mxu0 %v1100
    %1601 = vmatprep.subr.bf16.mxu0 %v1117
    %1602 = vmatpush1.bf16.msra.mxu0 %v1116
    %1603 = vmatprep.subr.bf16.mxu0 %v1133
    %1604 = vmatpush1.bf16.msra.mxu0 %v1132
    %1605 = vmatprep.subr.bf16.mxu0 %v1149
    %1606 = vmatpush1.bf16.msra.mxu0 %v1148
    %1607 = vmatprep.subr.bf16.mxu0 %v1165
    %1608 = vmatpush1.bf16.msra.mxu0 %v1164
    %1609 = vmatprep.subr.bf16.mxu0 %v1181
    %1610 = vmatpush1.bf16.msra.mxu0 %v1180
    %1611 = vmatprep.subr.bf16.mxu0 %v1197
    %1612 = vmatpush1.bf16.msra.mxu0 %v1196
    %1613 = vmatprep.mubr.bf16.mxu0 %v1211
    %1614 = vmatmul.mubr.bf16.gmra.mrb[0].mxu0 %v1210
    %v1615 = vpop.f32.mrb[0].mxu0
    %v1616 = vadd.f32 %v1575, %v1615
    %v1617 = vpop.f32.mrb[0].mxu0
    %v1618 = vadd.f32 %v1577, %v1617
    %v1619 = vpop.f32.mrb[0].mxu0
    %v1620 = vpop.f32.mrb[0].mxu0
    %1621 = vdwg.mxu0
    %1622 = vmatprep.subr.bf16.mxu0 %v703
    %1623 = vmatpush1.bf16.msra.mxu0 %v702
    %1624 = vmatprep.subr.bf16.mxu0 %v719
    %1625 = vmatpush1.bf16.msra.mxu0 %v718
    %1626 = vmatprep.subr.bf16.mxu0 %v735
    %1627 = vmatpush1.bf16.msra.mxu0 %v734
    %1628 = vmatprep.subr.bf16.mxu0 %v751
    %1629 = vmatpush1.bf16.msra.mxu0 %v750
    %1630 = vmatprep.subr.bf16.mxu0 %v767
    %1631 = vmatpush1.bf16.msra.mxu0 %v766
    %1632 = vmatprep.subr.bf16.mxu0 %v783
    %1633 = vmatpush1.bf16.msra.mxu0 %v782
    %1634 = vmatprep.subr.bf16.mxu0 %v799
    %1635 = vmatpush1.bf16.msra.mxu0 %v798
    %1636 = vmatprep.subr.bf16.mxu0 %v815
    %1637 = vmatpush1.bf16.msra.mxu0 %v814
    %1638 = vmatprep.subr.bf16.mxu0 %v831
    %1639 = vmatpush1.bf16.msra.mxu0 %v830
    %1640 = vmatprep.subr.bf16.mxu0 %v847
    %1641 = vmatpush1.bf16.msra.mxu0 %v846
    %1642 = vmatprep.subr.bf16.mxu0 %v863
    %1643 = vmatpush1.bf16.msra.mxu0 %v862
    %1644 = vmatprep.subr.bf16.mxu0 %v879
    %1645 = vmatpush1.bf16.msra.mxu0 %v878
    %1646 = vmatprep.subr.bf16.mxu0 %v895
    %1647 = vmatpush1.bf16.msra.mxu0 %v894
    %1648 = vmatprep.subr.bf16.mxu0 %v911
    %1649 = vmatpush1.bf16.msra.mxu0 %v910
    %1650 = vmatprep.subr.bf16.mxu0 %v927
    %1651 = vmatpush1.bf16.msra.mxu0 %v926
    %1652 = vmatprep.subr.bf16.mxu0 %v943
    %1653 = vmatpush1.bf16.msra.mxu0 %v942
    %1654 = vmatprep.mubr.bf16.mxu0 %v1209
    %1655 = vmatmul.mubr.bf16.gmra.mrb[0].mxu0 %v1208
    %v1656 = vpop.f32.mrb[0].mxu0
    %v1657 = vadd.f32 %v1249, %v1656
    %v1658 = vpop.f32.mrb[0].mxu0
    %v1659 = vadd.f32 %v1253, %v1658
    %v1660 = vpop.f32.mrb[0].mxu0
    %v1661 = vpop.f32.mrb[0].mxu0
    %1662 = vdwg.mxu0
    %1663 = vmatprep.subr.bf16.mxu0 %v959
    %1664 = vmatpush1.bf16.msra.mxu0 %v958
    %1665 = vmatprep.subr.bf16.mxu0 %v975
    %1666 = vmatpush1.bf16.msra.mxu0 %v974
    %1667 = vmatprep.subr.bf16.mxu0 %v991
    %1668 = vmatpush1.bf16.msra.mxu0 %v990
    %1669 = vmatprep.subr.bf16.mxu0 %v1007
    %1670 = vmatpush1.bf16.msra.mxu0 %v1006
    %1671 = vmatprep.subr.bf16.mxu0 %v1023
    %1672 = vmatpush1.bf16.msra.mxu0 %v1022
    %1673 = vmatprep.subr.bf16.mxu0 %v1039
    %1674 = vmatpush1.bf16.msra.mxu0 %v1038
    %1675 = vmatprep.subr.bf16.mxu0 %v1055
    %1676 = vmatpush1.bf16.msra.mxu0 %v1054
    %1677 = vmatprep.subr.bf16.mxu0 %v1071
    %1678 = vmatpush1.bf16.msra.mxu0 %v1070
    %1679 = vmatprep.subr.bf16.mxu0 %v1087
    %1680 = vmatpush1.bf16.msra.mxu0 %v1086
    %1681 = vmatprep.subr.bf16.mxu0 %v1103
    %1682 = vmatpush1.bf16.msra.mxu0 %v1102
    %1683 = vmatprep.subr.bf16.mxu0 %v1119
    %1684 = vmatpush1.bf16.msra.mxu0 %v1118
    %1685 = vmatprep.subr.bf16.mxu0 %v1135
    %1686 = vmatpush1.bf16.msra.mxu0 %v1134
    %1687 = vmatprep.subr.bf16.mxu0 %v1151
    %1688 = vmatpush1.bf16.msra.mxu0 %v1150
    %1689 = vmatprep.subr.bf16.mxu0 %v1167
    %1690 = vmatpush1.bf16.msra.mxu0 %v1166
    %1691 = vmatprep.subr.bf16.mxu0 %v1183
    %1692 = vmatpush1.bf16.msra.mxu0 %v1182
    %1693 = vmatprep.subr.bf16.mxu0 %v1199
    %1694 = vmatpush1.bf16.msra.mxu0 %v1198
    %1695 = vmatprep.mubr.bf16.mxu0 %v1211
    %1696 = vmatmul.mubr.bf16.gmra.mrb[0].mxu0 %v1210
    %v1697 = vpop.f32.mrb[0].mxu0
    %v1698 = vadd.f32 %v1657, %v1697
    %v1699 = vpop.f32.mrb[0].mxu0
    %v1700 = vadd.f32 %v1659, %v1699
    %v1701 = vpop.f32.mrb[0].mxu0
    %v1702 = vpop.f32.mrb[0].mxu0
    %1703 = vdwg.mxu0
    %1704 = vmatprep.subr.bf16.mxu0 %v705
    %1705 = vmatpush1.bf16.msra.mxu0 %v704
    %1706 = vmatprep.subr.bf16.mxu0 %v721
    %1707 = vmatpush1.bf16.msra.mxu0 %v720
    %1708 = vmatprep.subr.bf16.mxu0 %v737
    %1709 = vmatpush1.bf16.msra.mxu0 %v736
    %1710 = vmatprep.subr.bf16.mxu0 %v753
    %1711 = vmatpush1.bf16.msra.mxu0 %v752
    %1712 = vmatprep.subr.bf16.mxu0 %v769
    %1713 = vmatpush1.bf16.msra.mxu0 %v768
    %1714 = vmatprep.subr.bf16.mxu0 %v785
    %1715 = vmatpush1.bf16.msra.mxu0 %v784
    %1716 = vmatprep.subr.bf16.mxu0 %v801
    %1717 = vmatpush1.bf16.msra.mxu0 %v800
    %1718 = vmatprep.subr.bf16.mxu0 %v817
    %1719 = vmatpush1.bf16.msra.mxu0 %v816
    %1720 = vmatprep.subr.bf16.mxu0 %v833
    %1721 = vmatpush1.bf16.msra.mxu0 %v832
    %1722 = vmatprep.subr.bf16.mxu0 %v849
    %1723 = vmatpush1.bf16.msra.mxu0 %v848
    %1724 = vmatprep.subr.bf16.mxu0 %v865
    %1725 = vmatpush1.bf16.msra.mxu0 %v864
    %1726 = vmatprep.subr.bf16.mxu0 %v881
    %1727 = vmatpush1.bf16.msra.mxu0 %v880
    %1728 = vmatprep.subr.bf16.mxu0 %v897
    %1729 = vmatpush1.bf16.msra.mxu0 %v896
    %1730 = vmatprep.subr.bf16.mxu0 %v913
    %1731 = vmatpush1.bf16.msra.mxu0 %v912
    %1732 = vmatprep.subr.bf16.mxu0 %v929
    %1733 = vmatpush1.bf16.msra.mxu0 %v928
    %1734 = vmatprep.subr.bf16.mxu0 %v945
    %1735 = vmatpush1.bf16.msra.mxu0 %v944
    %1736 = vmatprep.mubr.bf16.mxu0 %v1209
    %1737 = vmatmul.mubr.bf16.gmra.mrb[0].mxu0 %v1208
    %v1738 = vpop.f32.mrb[0].mxu0
    %v1739 = vadd.f32 %v1257, %v1738
    %v1740 = vpop.f32.mrb[0].mxu0
    %v1741 = vadd.f32 %v1261, %v1740
    %v1742 = vpop.f32.mrb[0].mxu0
    %v1743 = vpop.f32.mrb[0].mxu0
    %1744 = vdwg.mxu0
    %1745 = vmatprep.subr.bf16.mxu0 %v961
    %1746 = vmatpush1.bf16.msra.mxu0 %v960
    %1747 = vmatprep.subr.bf16.mxu0 %v977
    %1748 = vmatpush1.bf16.msra.mxu0 %v976
    %1749 = vmatprep.subr.bf16.mxu0 %v993
    %1750 = vmatpush1.bf16.msra.mxu0 %v992
    %1751 = vmatprep.subr.bf16.mxu0 %v1009
    %1752 = vmatpush1.bf16.msra.mxu0 %v1008
    %1753 = vmatprep.subr.bf16.mxu0 %v1025
    %1754 = vmatpush1.bf16.msra.mxu0 %v1024
    %1755 = vmatprep.subr.bf16.mxu0 %v1041
    %1756 = vmatpush1.bf16.msra.mxu0 %v1040
    %1757 = vmatprep.subr.bf16.mxu0 %v1057
    %1758 = vmatpush1.bf16.msra.mxu0 %v1056
    %1759 = vmatprep.subr.bf16.mxu0 %v1073
    %1760 = vmatpush1.bf16.msra.mxu0 %v1072
    %1761 = vmatprep.subr.bf16.mxu0 %v1089
    %1762 = vmatpush1.bf16.msra.mxu0 %v1088
    %1763 = vmatprep.subr.bf16.mxu0 %v1105
    %1764 = vmatpush1.bf16.msra.mxu0 %v1104
    %1765 = vmatprep.subr.bf16.mxu0 %v1121
    %1766 = vmatpush1.bf16.msra.mxu0 %v1120
    %1767 = vmatprep.subr.bf16.mxu0 %v1137
    %1768 = vmatpush1.bf16.msra.mxu0 %v1136
    %1769 = vmatprep.subr.bf16.mxu0 %v1153
    %1770 = vmatpush1.bf16.msra.mxu0 %v1152
    %1771 = vmatprep.subr.bf16.mxu0 %v1169
    %1772 = vmatpush1.bf16.msra.mxu0 %v1168
    %1773 = vmatprep.subr.bf16.mxu0 %v1185
    %1774 = vmatpush1.bf16.msra.mxu0 %v1184
    %1775 = vmatprep.subr.bf16.mxu0 %v1201
    %1776 = vmatpush1.bf16.msra.mxu0 %v1200
    %1777 = vmatprep.mubr.bf16.mxu0 %v1211
    %1778 = vmatmul.mubr.bf16.gmra.mrb[0].mxu0 %v1210
    %v1779 = vpop.f32.mrb[0].mxu0
    %v1780 = vadd.f32 %v1739, %v1779
    %v1781 = vpop.f32.mrb[0].mxu0
    %v1782 = vadd.f32 %v1741, %v1781
    %v1783 = vpop.f32.mrb[0].mxu0
    %v1784 = vpop.f32.mrb[0].mxu0
    %1785 = vdwg.mxu0
    %1786 = vmatprep.subr.bf16.mxu0 %v707
    %1787 = vmatpush1.bf16.msra.mxu0 %v706
    %1788 = vmatprep.subr.bf16.mxu0 %v723
    %1789 = vmatpush1.bf16.msra.mxu0 %v722
    %1790 = vmatprep.subr.bf16.mxu0 %v739
    %1791 = vmatpush1.bf16.msra.mxu0 %v738
    %1792 = vmatprep.subr.bf16.mxu0 %v755
    %1793 = vmatpush1.bf16.msra.mxu0 %v754
    %1794 = vmatprep.subr.bf16.mxu0 %v771
    %1795 = vmatpush1.bf16.msra.mxu0 %v770
    %1796 = vmatprep.subr.bf16.mxu0 %v787
    %1797 = vmatpush1.bf16.msra.mxu0 %v786
    %1798 = vmatprep.subr.bf16.mxu0 %v803
    %1799 = vmatpush1.bf16.msra.mxu0 %v802
    %1800 = vmatprep.subr.bf16.mxu0 %v819
    %1801 = vmatpush1.bf16.msra.mxu0 %v818
    %1802 = vmatprep.subr.bf16.mxu0 %v835
    %1803 = vmatpush1.bf16.msra.mxu0 %v834
    %1804 = vmatprep.subr.bf16.mxu0 %v851
    %1805 = vmatpush1.bf16.msra.mxu0 %v850
    %1806 = vmatprep.subr.bf16.mxu0 %v867
    %1807 = vmatpush1.bf16.msra.mxu0 %v866
    %1808 = vmatprep.subr.bf16.mxu0 %v883
    %1809 = vmatpush1.bf16.msra.mxu0 %v882
    %1810 = vmatprep.subr.bf16.mxu0 %v899
    %1811 = vmatpush1.bf16.msra.mxu0 %v898
    %1812 = vmatprep.subr.bf16.mxu0 %v915
    %1813 = vmatpush1.bf16.msra.mxu0 %v914
    %1814 = vmatprep.subr.bf16.mxu0 %v931
    %1815 = vmatpush1.bf16.msra.mxu0 %v930
    %1816 = vmatprep.subr.bf16.mxu0 %v947
    %1817 = vmatpush1.bf16.msra.mxu0 %v946
    %1818 = vmatprep.mubr.bf16.mxu0 %v1209
    %1819 = vmatmul.mubr.bf16.gmra.mrb[0].mxu0 %v1208
    %v1820 = vpop.f32.mrb[0].mxu0
    %v1821 = vadd.f32 %v1265, %v1820
    %v1822 = vpop.f32.mrb[0].mxu0
    %v1823 = vadd.f32 %v1269, %v1822
    %v1824 = vpop.f32.mrb[0].mxu0
    %v1825 = vpop.f32.mrb[0].mxu0
    %1826 = vdwg.mxu0
    %1827 = vmatprep.subr.bf16.mxu0 %v963
    %1828 = vmatpush1.bf16.msra.mxu0 %v962
    %1829 = vmatprep.subr.bf16.mxu0 %v979
    %1830 = vmatpush1.bf16.msra.mxu0 %v978
    %1831 = vmatprep.subr.bf16.mxu0 %v995
    %1832 = vmatpush1.bf16.msra.mxu0 %v994
    %1833 = vmatprep.subr.bf16.mxu0 %v1011
    %1834 = vmatpush1.bf16.msra.mxu0 %v1010
    %1835 = vmatprep.subr.bf16.mxu0 %v1027
    %1836 = vmatpush1.bf16.msra.mxu0 %v1026
    %1837 = vmatprep.subr.bf16.mxu0 %v1043
    %1838 = vmatpush1.bf16.msra.mxu0 %v1042
    %1839 = vmatprep.subr.bf16.mxu0 %v1059
    %1840 = vmatpush1.bf16.msra.mxu0 %v1058
    %1841 = vmatprep.subr.bf16.mxu0 %v1075
    %1842 = vmatpush1.bf16.msra.mxu0 %v1074
    %1843 = vmatprep.subr.bf16.mxu0 %v1091
    %1844 = vmatpush1.bf16.msra.mxu0 %v1090
    %1845 = vmatprep.subr.bf16.mxu0 %v1107
    %1846 = vmatpush1.bf16.msra.mxu0 %v1106
    %1847 = vmatprep.subr.bf16.mxu0 %v1123
    %1848 = vmatpush1.bf16.msra.mxu0 %v1122
    %1849 = vmatprep.subr.bf16.mxu0 %v1139
    %1850 = vmatpush1.bf16.msra.mxu0 %v1138
    %1851 = vmatprep.subr.bf16.mxu0 %v1155
    %1852 = vmatpush1.bf16.msra.mxu0 %v1154
    %1853 = vmatprep.subr.bf16.mxu0 %v1171
    %1854 = vmatpush1.bf16.msra.mxu0 %v1170
    %1855 = vmatprep.subr.bf16.mxu0 %v1187
    %1856 = vmatpush1.bf16.msra.mxu0 %v1186
    %1857 = vmatprep.subr.bf16.mxu0 %v1203
    %1858 = vmatpush1.bf16.msra.mxu0 %v1202
    %1859 = vmatprep.mubr.bf16.mxu0 %v1211
    %1860 = vmatmul.mubr.bf16.gmra.mrb[0].mxu0 %v1210
    %v1861 = vpop.f32.mrb[0].mxu0
    %v1862 = vadd.f32 %v1821, %v1861
    %v1863 = vpop.f32.mrb[0].mxu0
    %v1864 = vadd.f32 %v1823, %v1863
    %v1865 = vpop.f32.mrb[0].mxu0
    %v1866 = vpop.f32.mrb[0].mxu0
    %1867 = vdwg.mxu0
    %1868 = vmatprep.subr.bf16.mxu0 %v709
    %1869 = vmatpush1.bf16.msra.mxu0 %v708
    %1870 = vmatprep.subr.bf16.mxu0 %v725
    %1871 = vmatpush1.bf16.msra.mxu0 %v724
    %1872 = vmatprep.subr.bf16.mxu0 %v741
    %1873 = vmatpush1.bf16.msra.mxu0 %v740
    %1874 = vmatprep.subr.bf16.mxu0 %v757
    %1875 = vmatpush1.bf16.msra.mxu0 %v756
    %1876 = vmatprep.subr.bf16.mxu0 %v773
    %1877 = vmatpush1.bf16.msra.mxu0 %v772
    %1878 = vmatprep.subr.bf16.mxu0 %v789
    %1879 = vmatpush1.bf16.msra.mxu0 %v788
    %1880 = vmatprep.subr.bf16.mxu0 %v805
    %1881 = vmatpush1.bf16.msra.mxu0 %v804
    %1882 = vmatprep.subr.bf16.mxu0 %v821
    %1883 = vmatpush1.bf16.msra.mxu0 %v820
    %1884 = vmatprep.subr.bf16.mxu0 %v837
    %1885 = vmatpush1.bf16.msra.mxu0 %v836
    %1886 = vmatprep.subr.bf16.mxu0 %v853
    %1887 = vmatpush1.bf16.msra.mxu0 %v852
    %1888 = vmatprep.subr.bf16.mxu0 %v869
    %1889 = vmatpush1.bf16.msra.mxu0 %v868
    %1890 = vmatprep.subr.bf16.mxu0 %v885
    %1891 = vmatpush1.bf16.msra.mxu0 %v884
    %1892 = vmatprep.subr.bf16.mxu0 %v901
    %1893 = vmatpush1.bf16.msra.mxu0 %v900
    %1894 = vmatprep.subr.bf16.mxu0 %v917
    %1895 = vmatpush1.bf16.msra.mxu0 %v916
    %1896 = vmatprep.subr.bf16.mxu0 %v933
    %1897 = vmatpush1.bf16.msra.mxu0 %v932
    %1898 = vmatprep.subr.bf16.mxu0 %v949
    %1899 = vmatpush1.bf16.msra.mxu0 %v948
    %1900 = vmatprep.mubr.bf16.mxu0 %v1209
    %1901 = vmatmul.mubr.bf16.gmra.mrb[0].mxu0 %v1208
    %v1902 = vpop.f32.mrb[0].mxu0
    %v1903 = vadd.f32 %v1273, %v1902
    %v1904 = vpop.f32.mrb[0].mxu0
    %v1905 = vadd.f32 %v1277, %v1904
    %v1906 = vpop.f32.mrb[0].mxu0
    %v1907 = vpop.f32.mrb[0].mxu0
    %1908 = vdwg.mxu0
    %1909 = vmatprep.subr.bf16.mxu0 %v965
    %1910 = vmatpush1.bf16.msra.mxu0 %v964
    %1911 = vmatprep.subr.bf16.mxu0 %v981
    %1912 = vmatpush1.bf16.msra.mxu0 %v980
    %1913 = vmatprep.subr.bf16.mxu0 %v997
    %1914 = vmatpush1.bf16.msra.mxu0 %v996
    %1915 = vmatprep.subr.bf16.mxu0 %v1013
    %1916 = vmatpush1.bf16.msra.mxu0 %v1012
    %1917 = vmatprep.subr.bf16.mxu0 %v1029
    %1918 = vmatpush1.bf16.msra.mxu0 %v1028
    %1919 = vmatprep.subr.bf16.mxu0 %v1045
    %1920 = vmatpush1.bf16.msra.mxu0 %v1044
    %1921 = vmatprep.subr.bf16.mxu0 %v1061
    %1922 = vmatpush1.bf16.msra.mxu0 %v1060
    %1923 = vmatprep.subr.bf16.mxu0 %v1077
    %1924 = vmatpush1.bf16.msra.mxu0 %v1076
    %1925 = vmatprep.subr.bf16.mxu0 %v1093
    %1926 = vmatpush1.bf16.msra.mxu0 %v1092
    %1927 = vmatprep.subr.bf16.mxu0 %v1109
    %1928 = vmatpush1.bf16.msra.mxu0 %v1108
    %1929 = vmatprep.subr.bf16.mxu0 %v1125
    %1930 = vmatpush1.bf16.msra.mxu0 %v1124
    %1931 = vmatprep.subr.bf16.mxu0 %v1141
    %1932 = vmatpush1.bf16.msra.mxu0 %v1140
    %1933 = vmatprep.subr.bf16.mxu0 %v1157
    %1934 = vmatpush1.bf16.msra.mxu0 %v1156
    %1935 = vmatprep.subr.bf16.mxu0 %v1173
    %1936 = vmatpush1.bf16.msra.mxu0 %v1172
    %1937 = vmatprep.subr.bf16.mxu0 %v1189
    %1938 = vmatpush1.bf16.msra.mxu0 %v1188
    %1939 = vmatprep.subr.bf16.mxu0 %v1205
    %1940 = vmatpush1.bf16.msra.mxu0 %v1204
    %1941 = vmatprep.mubr.bf16.mxu0 %v1211
    %1942 = vmatmul.mubr.bf16.gmra.mrb[0].mxu0 %v1210
    %v1943 = vpop.f32.mrb[0].mxu0
    %v1944 = vadd.f32 %v1903, %v1943
    %v1945 = vpop.f32.mrb[0].mxu0
    %v1946 = vadd.f32 %v1905, %v1945
    %v1947 = vpop.f32.mrb[0].mxu0
    %v1948 = vpop.f32.mrb[0].mxu0
    %1949 = vdwg.mxu0
    %v1950 = vmax.f32 %v1370, 0.0
    %v1951 = vmax.f32 %v1372, 0.0
    %v1952 = vmax.f32 %v1452, 0.0
    %v1953 = vmax.f32 %v1454, 0.0
    %v1954 = vmax.f32 %v1534, 0.0
    %v1955 = vmax.f32 %v1536, 0.0
    %v1956 = vmax.f32 %v1616, 0.0
    %v1957 = vmax.f32 %v1618, 0.0
    %v1958 = vmax.f32 %v1698, 0.0
    %v1959 = vmax.f32 %v1700, 0.0
    %v1960 = vmax.f32 %v1780, 0.0
    %v1961 = vmax.f32 %v1782, 0.0
    %v1962 = vmax.f32 %v1862, 0.0
    %v1963 = vmax.f32 %v1864, 0.0
    %v1964 = vmax.f32 %v1944, 0.0
    %v1965 = vmax.f32 %v1946, 0.0
    %s1966 = smul.u32 4, 256
    %s1967 = smul.u32 %s1966, 1
    %s1968 = sshll.u32 %s1967, 4
    %1969 = dma.done %s322, %s1968
    %s1970 = scalar_lea.sflag [#allocation10], 5
    %s1972 = sshll.u32 1, 14
    %s1973 = sxor.u32 4294967295, %s1972
    %s1975 = sadd.s32 2, %s37
    %s1977 = sshll.u32 7, 26
    %s1978 = sxor.u32 4294967295, %s1977
    %s1979 = sand.u32 0, %s1978
    %s1980 = sshll.u32 %s1975, 26
    %s1981 = sor.u32 %s1979, %s1980
    %s1982 = sshll.u32 [#allocation7], 4
    %s1983 = int_to_ptr.vmem [resolvable:$true] %s1982
    %1986 = sst [smem:[#allocation28]] 512
    %s1987 = scalar_lea.smem [#allocation28], 1
    %1988 = sst [smem:[%s1987]] 512
    %s1989 = scalar_lea.smem [#allocation28], 2
    %1990 = sst [smem:[%s1989]] 4
    %s1991 = scalar_lea.smem [#allocation28], 3
    %1992 = sst [smem:[%s1991]] 64
    %s1993 = scalar_lea.smem [#allocation28], 4
    %1994 = sst [smem:[%s1993]] 128
    %s1995 = scalar_lea.smem [#allocation28], 5
    %1996 = sst [smem:[%s1995]] 2
    %s1997 = scalar_lea.smem [#allocation28], 6
    %1998 = sst [smem:[%s1997]] 256
    %s1999 = scalar_lea.smem [#allocation28], 7
    %2000 = sst [smem:[%s1999]] 64
    %s2001 = scalar_lea.smem [#allocation28], 8
    %2002 = sst [smem:[%s2001]] 4
    %2004 = dma.general %s7, 65536, %s1983, %s1970, [#allocation27], [#allocation28], %s1981, 0
    %v2005 = vld [vmem:[#allocation5] sm:$0xff]
    %v2006 = vld [vmem:[#allocation5 + $0x8] sm:$0xff]
    %v2007 = vld [vmem:[#allocation5 + $0x10] sm:$0xff]
    %v2008 = vld [vmem:[#allocation5 + $0x18] sm:$0xff]
    %v2009 = vld [vmem:[#allocation5 + $0x20] sm:$0xff]
    %v2010 = vld [vmem:[#allocation5 + $0x28] sm:$0xff]
    %v2011 = vld [vmem:[#allocation5 + $0x30] sm:$0xff]
    %v2012 = vld [vmem:[#allocation5 + $0x38] sm:$0xff]
    %v2013 = vld [vmem:[#allocation5 + $0x40] sm:$0xff]
    %v2014 = vld [vmem:[#allocation5 + $0x48] sm:$0xff]
    %v2015 = vld [vmem:[#allocation5 + $0x50] sm:$0xff]
    %v2016 = vld [vmem:[#allocation5 + $0x58] sm:$0xff]
    %v2017 = vld [vmem:[#allocation5 + $0x60] sm:$0xff]
    %v2018 = vld [vmem:[#allocation5 + $0x68] sm:$0xff]
    %v2019 = vld [vmem:[#allocation5 + $0x70] sm:$0xff]
    %v2020 = vld [vmem:[#allocation5 + $0x78] sm:$0xff]
    %v2021 = vld [vmem:[#allocation5 + $0x80] sm:$0xff]
    %v2022 = vld [vmem:[#allocation5 + $0x88] sm:$0xff]
    %v2023 = vld [vmem:[#allocation5 + $0x90] sm:$0xff]
    %v2024 = vld [vmem:[#allocation5 + $0x98] sm:$0xff]
    %v2025 = vld [vmem:[#allocation5 + $0xa0] sm:$0xff]
    %v2026 = vld [vmem:[#allocation5 + $0xa8] sm:$0xff]
    %v2027 = vld [vmem:[#allocation5 + $0xb0] sm:$0xff]
    %v2028 = vld [vmem:[#allocation5 + $0xb8] sm:$0xff]
    %v2029 = vld [vmem:[#allocation5 + $0xc0] sm:$0xff]
    %v2030 = vld [vmem:[#allocation5 + $0xc8] sm:$0xff]
    %v2031 = vld [vmem:[#allocation5 + $0xd0] sm:$0xff]
    %v2032 = vld [vmem:[#allocation5 + $0xd8] sm:$0xff]
    %v2033 = vld [vmem:[#allocation5 + $0xe0] sm:$0xff]
    %v2034 = vld [vmem:[#allocation5 + $0xe8] sm:$0xff]
    %v2035 = vld [vmem:[#allocation5 + $0xf0] sm:$0xff]
    %v2036 = vld [vmem:[#allocation5 + $0xf8] sm:$0xff]
    %v2037 = vld [vmem:[#allocation5 + $0x100] sm:$0xff]
    %v2038 = vld [vmem:[#allocation5 + $0x108] sm:$0xff]
    %v2039 = vld [vmem:[#allocation5 + $0x110] sm:$0xff]
    %v2040 = vld [vmem:[#allocation5 + $0x118] sm:$0xff]
    %v2041 = vld [vmem:[#allocation5 + $0x120] sm:$0xff]
    %v2042 = vld [vmem:[#allocation5 + $0x128] sm:$0xff]
    %v2043 = vld [vmem:[#allocation5 + $0x130] sm:$0xff]
    %v2044 = vld [vmem:[#allocation5 + $0x138] sm:$0xff]
    %v2045 = vld [vmem:[#allocation5 + $0x140] sm:$0xff]
    %v2046 = vld [vmem:[#allocation5 + $0x148] sm:$0xff]
    %v2047 = vld [vmem:[#allocation5 + $0x150] sm:$0xff]
    %v2048 = vld [vmem:[#allocation5 + $0x158] sm:$0xff]
    %v2049 = vld [vmem:[#allocation5 + $0x160] sm:$0xff]
    %v2050 = vld [vmem:[#allocation5 + $0x168] sm:$0xff]
    %v2051 = vld [vmem:[#allocation5 + $0x170] sm:$0xff]
    %v2052 = vld [vmem:[#allocation5 + $0x178] sm:$0xff]
    %v2053 = vld [vmem:[#allocation5 + $0x180] sm:$0xff]
    %v2054 = vld [vmem:[#allocation5 + $0x188] sm:$0xff]
    %v2055 = vld [vmem:[#allocation5 + $0x190] sm:$0xff]
    %v2056 = vld [vmem:[#allocation5 + $0x198] sm:$0xff]
    %v2057 = vld [vmem:[#allocation5 + $0x1a0] sm:$0xff]
    %v2058 = vld [vmem:[#allocation5 + $0x1a8] sm:$0xff]
    %v2059 = vld [vmem:[#allocation5 + $0x1b0] sm:$0xff]
    %v2060 = vld [vmem:[#allocation5 + $0x1b8] sm:$0xff]
    %v2061 = vld [vmem:[#allocation5 + $0x1c0] sm:$0xff]
    %v2062 = vld [vmem:[#allocation5 + $0x1c8] sm:$0xff]
    %v2063 = vld [vmem:[#allocation5 + $0x1d0] sm:$0xff]
    %v2064 = vld [vmem:[#allocation5 + $0x1d8] sm:$0xff]
    %v2065 = vld [vmem:[#allocation5 + $0x1e0] sm:$0xff]
    %v2066 = vld [vmem:[#allocation5 + $0x1e8] sm:$0xff]
    %v2067 = vld [vmem:[#allocation5 + $0x1f0] sm:$0xff]
    %v2068 = vld [vmem:[#allocation5 + $0x1f8] sm:$0xff]
    %v2069 = vld [vmem:[#allocation5 + $0x200] sm:$0xff]
    %v2070 = vld [vmem:[#allocation5 + $0x208] sm:$0xff]
    %v2071 = vld [vmem:[#allocation5 + $0x210] sm:$0xff]
    %v2072 = vld [vmem:[#allocation5 + $0x218] sm:$0xff]
    %v2073 = vld [vmem:[#allocation5 + $0x220] sm:$0xff]
    %v2074 = vld [vmem:[#allocation5 + $0x228] sm:$0xff]
    %v2075 = vld [vmem:[#allocation5 + $0x230] sm:$0xff]
    %v2076 = vld [vmem:[#allocation5 + $0x238] sm:$0xff]
    %v2077 = vld [vmem:[#allocation5 + $0x240] sm:$0xff]
    %v2078 = vld [vmem:[#allocation5 + $0x248] sm:$0xff]
    %v2079 = vld [vmem:[#allocation5 + $0x250] sm:$0xff]
    %v2080 = vld [vmem:[#allocation5 + $0x258] sm:$0xff]
    %v2081 = vld [vmem:[#allocation5 + $0x260] sm:$0xff]
    %v2082 = vld [vmem:[#allocation5 + $0x268] sm:$0xff]
    %v2083 = vld [vmem:[#allocation5 + $0x270] sm:$0xff]
    %v2084 = vld [vmem:[#allocation5 + $0x278] sm:$0xff]
    %v2085 = vld [vmem:[#allocation5 + $0x280] sm:$0xff]
    %v2086 = vld [vmem:[#allocation5 + $0x288] sm:$0xff]
    %v2087 = vld [vmem:[#allocation5 + $0x290] sm:$0xff]
    %v2088 = vld [vmem:[#allocation5 + $0x298] sm:$0xff]
    %v2089 = vld [vmem:[#allocation5 + $0x2a0] sm:$0xff]
    %v2090 = vld [vmem:[#allocation5 + $0x2a8] sm:$0xff]
    %v2091 = vld [vmem:[#allocation5 + $0x2b0] sm:$0xff]
    %v2092 = vld [vmem:[#allocation5 + $0x2b8] sm:$0xff]
    %v2093 = vld [vmem:[#allocation5 + $0x2c0] sm:$0xff]
    %v2094 = vld [vmem:[#allocation5 + $0x2c8] sm:$0xff]
    %v2095 = vld [vmem:[#allocation5 + $0x2d0] sm:$0xff]
    %v2096 = vld [vmem:[#allocation5 + $0x2d8] sm:$0xff]
    %v2097 = vld [vmem:[#allocation5 + $0x2e0] sm:$0xff]
    %v2098 = vld [vmem:[#allocation5 + $0x2e8] sm:$0xff]
    %v2099 = vld [vmem:[#allocation5 + $0x2f0] sm:$0xff]
    %v2100 = vld [vmem:[#allocation5 + $0x2f8] sm:$0xff]
    %v2101 = vld [vmem:[#allocation5 + $0x300] sm:$0xff]
    %v2102 = vld [vmem:[#allocation5 + $0x308] sm:$0xff]
    %v2103 = vld [vmem:[#allocation5 + $0x310] sm:$0xff]
    %v2104 = vld [vmem:[#allocation5 + $0x318] sm:$0xff]
    %v2105 = vld [vmem:[#allocation5 + $0x320] sm:$0xff]
    %v2106 = vld [vmem:[#allocation5 + $0x328] sm:$0xff]
    %v2107 = vld [vmem:[#allocation5 + $0x330] sm:$0xff]
    %v2108 = vld [vmem:[#allocation5 + $0x338] sm:$0xff]
    %v2109 = vld [vmem:[#allocation5 + $0x340] sm:$0xff]
    %v2110 = vld [vmem:[#allocation5 + $0x348] sm:$0xff]
    %v2111 = vld [vmem:[#allocation5 + $0x350] sm:$0xff]
    %v2112 = vld [vmem:[#allocation5 + $0x358] sm:$0xff]
    %v2113 = vld [vmem:[#allocation5 + $0x360] sm:$0xff]
    %v2114 = vld [vmem:[#allocation5 + $0x368] sm:$0xff]
    %v2115 = vld [vmem:[#allocation5 + $0x370] sm:$0xff]
    %v2116 = vld [vmem:[#allocation5 + $0x378] sm:$0xff]
    %v2117 = vld [vmem:[#allocation5 + $0x380] sm:$0xff]
    %v2118 = vld [vmem:[#allocation5 + $0x388] sm:$0xff]
    %v2119 = vld [vmem:[#allocation5 + $0x390] sm:$0xff]
    %v2120 = vld [vmem:[#allocation5 + $0x398] sm:$0xff]
    %v2121 = vld [vmem:[#allocation5 + $0x3a0] sm:$0xff]
    %v2122 = vld [vmem:[#allocation5 + $0x3a8] sm:$0xff]
    %v2123 = vld [vmem:[#allocation5 + $0x3b0] sm:$0xff]
    %v2124 = vld [vmem:[#allocation5 + $0x3b8] sm:$0xff]
    %v2125 = vld [vmem:[#allocation5 + $0x3c0] sm:$0xff]
    %v2126 = vld [vmem:[#allocation5 + $0x3c8] sm:$0xff]
    %v2127 = vld [vmem:[#allocation5 + $0x3d0] sm:$0xff]
    %v2128 = vld [vmem:[#allocation5 + $0x3d8] sm:$0xff]
    %v2129 = vld [vmem:[#allocation5 + $0x3e0] sm:$0xff]
    %v2130 = vld [vmem:[#allocation5 + $0x3e8] sm:$0xff]
    %v2131 = vld [vmem:[#allocation5 + $0x3f0] sm:$0xff]
    %v2132 = vld [vmem:[#allocation5 + $0x3f8] sm:$0xff]
    %v2133 = vld [vmem:[%s1 + $0x18] sm:$0x1]
    %v2134 = vpack.c.bf16 %v1950, %v1950
    %v2135 = vpack.c.bf16 %v1951, %v1951
    %v2136 = vpack.c.bf16 %v1952, %v1952
    %v2137 = vpack.c.bf16 %v1953, %v1953
    %v2138 = vpack.c.bf16 %v1954, %v1954
    %v2139 = vpack.c.bf16 %v1955, %v1955
    %v2140 = vpack.c.bf16 %v1956, %v1956
    %v2141 = vpack.c.bf16 %v1957, %v1957
    %v2142 = vpack.c.bf16 %v1958, %v1958
    %v2143 = vpack.c.bf16 %v1959, %v1959
    %v2144 = vpack.c.bf16 %v1960, %v1960
    %v2145 = vpack.c.bf16 %v1961, %v1961
    %v2146 = vpack.c.bf16 %v1962, %v1962
    %v2147 = vpack.c.bf16 %v1963, %v1963
    %v2148 = vpack.c.bf16 %v1964, %v1964
    %v2149 = vpack.c.bf16 %v1965, %v1965
    %v2151 = vlaneseq
    %v2152 = vshrl.u32 %v2151, 7
    %v2153 = vsub.s32 0, %v2152
    %v2154 = vrot.slane %v2133, %v2153
    %2156 = vmatprep.subr.bf16.mxu0 0
    %2157 = vmatpush1.bf16.msra.mxu0 %v2005
    %2158 = vmatprep.subr.bf16.mxu0 0
    %2159 = vmatpush1.bf16.msra.mxu0 %v2006
    %2160 = vmatprep.subr.bf16.mxu0 0
    %2161 = vmatpush1.bf16.msra.mxu0 %v2007
    %2162 = vmatprep.subr.bf16.mxu0 0
    %2163 = vmatpush1.bf16.msra.mxu0 %v2008
    %2164 = vmatprep.subr.bf16.mxu0 0
    %2165 = vmatpush1.bf16.msra.mxu0 %v2009
    %2166 = vmatprep.subr.bf16.mxu0 0
    %2167 = vmatpush1.bf16.msra.mxu0 %v2010
    %2168 = vmatprep.subr.bf16.mxu0 0
    %2169 = vmatpush1.bf16.msra.mxu0 %v2011
    %2170 = vmatprep.subr.bf16.mxu0 0
    %2171 = vmatpush1.bf16.msra.mxu0 %v2012
    %2172 = vmatprep.subr.bf16.mxu0 0
    %2173 = vmatpush1.bf16.msra.mxu0 %v2013
    %2174 = vmatprep.subr.bf16.mxu0 0
    %2175 = vmatpush1.bf16.msra.mxu0 %v2014
    %2176 = vmatprep.subr.bf16.mxu0 0
    %2177 = vmatpush1.bf16.msra.mxu0 %v2015
    %2178 = vmatprep.subr.bf16.mxu0 0
    %2179 = vmatpush1.bf16.msra.mxu0 %v2016
    %2180 = vmatprep.subr.bf16.mxu0 0
    %2181 = vmatpush1.bf16.msra.mxu0 %v2017
    %2182 = vmatprep.subr.bf16.mxu0 0
    %2183 = vmatpush1.bf16.msra.mxu0 %v2018
    %2184 = vmatprep.subr.bf16.mxu0 0
    %2185 = vmatpush1.bf16.msra.mxu0 %v2019
    %2186 = vmatprep.subr.bf16.mxu0 0
    %2187 = vmatpush1.bf16.msra.mxu0 %v2020
    %2188 = vmatprep.mubr.bf16.mxu0 %v2135
    %2189 = vmatmul.mubr.bf16.gmra.mrb[0].mxu0 %v2134
    %v2190 = vpop.f32.mrb[0].mxu0
    %v2191 = vadd.f32 %v2154, %v2190
    %v2192 = vpop.f32.mrb[0].mxu0
    %v2193 = vpop.f32.mrb[0].mxu0
    %v2194 = vpop.f32.mrb[0].mxu0
    %2195 = vdwg.mxu0
    %2196 = vmatprep.subr.bf16.mxu0 0
    %2197 = vmatpush1.bf16.msra.mxu0 %v2021
    %2198 = vmatprep.subr.bf16.mxu0 0
    %2199 = vmatpush1.bf16.msra.mxu0 %v2022
    %2200 = vmatprep.subr.bf16.mxu0 0
    %2201 = vmatpush1.bf16.msra.mxu0 %v2023
    %2202 = vmatprep.subr.bf16.mxu0 0
    %2203 = vmatpush1.bf16.msra.mxu0 %v2024
    %2204 = vmatprep.subr.bf16.mxu0 0
    %2205 = vmatpush1.bf16.msra.mxu0 %v2025
    %2206 = vmatprep.subr.bf16.mxu0 0
    %2207 = vmatpush1.bf16.msra.mxu0 %v2026
    %2208 = vmatprep.subr.bf16.mxu0 0
    %2209 = vmatpush1.bf16.msra.mxu0 %v2027
    %2210 = vmatprep.subr.bf16.mxu0 0
    %2211 = vmatpush1.bf16.msra.mxu0 %v2028
    %2212 = vmatprep.subr.bf16.mxu0 0
    %2213 = vmatpush1.bf16.msra.mxu0 %v2029
    %2214 = vmatprep.subr.bf16.mxu0 0
    %2215 = vmatpush1.bf16.msra.mxu0 %v2030
    %2216 = vmatprep.subr.bf16.mxu0 0
    %2217 = vmatpush1.bf16.msra.mxu0 %v2031
    %2218 = vmatprep.subr.bf16.mxu0 0
    %2219 = vmatpush1.bf16.msra.mxu0 %v2032
    %2220 = vmatprep.subr.bf16.mxu0 0
    %2221 = vmatpush1.bf16.msra.mxu0 %v2033
    %2222 = vmatprep.subr.bf16.mxu0 0
    %2223 = vmatpush1.bf16.msra.mxu0 %v2034
    %2224 = vmatprep.subr.bf16.mxu0 0
    %2225 = vmatpush1.bf16.msra.mxu0 %v2035
    %2226 = vmatprep.subr.bf16.mxu0 0
    %2227 = vmatpush1.bf16.msra.mxu0 %v2036
    %2228 = vmatprep.mubr.bf16.mxu0 %v2137
    %2229 = vmatmul.mubr.bf16.gmra.mrb[0].mxu0 %v2136
    %v2230 = vpop.f32.mrb[0].mxu0
    %v2231 = vadd.f32 %v2191, %v2230
    %v2232 = vpop.f32.mrb[0].mxu0
    %v2233 = vpop.f32.mrb[0].mxu0
    %v2234 = vpop.f32.mrb[0].mxu0
    %2235 = vdwg.mxu0
    %2236 = vmatprep.subr.bf16.mxu0 0
    %2237 = vmatpush1.bf16.msra.mxu0 %v2037
    %2238 = vmatprep.subr.bf16.mxu0 0
    %2239 = vmatpush1.bf16.msra.mxu0 %v2038
    %2240 = vmatprep.subr.bf16.mxu0 0
    %2241 = vmatpush1.bf16.msra.mxu0 %v2039
    %2242 = vmatprep.subr.bf16.mxu0 0
    %2243 = vmatpush1.bf16.msra.mxu0 %v2040
    %2244 = vmatprep.subr.bf16.mxu0 0
    %2245 = vmatpush1.bf16.msra.mxu0 %v2041
    %2246 = vmatprep.subr.bf16.mxu0 0
    %2247 = vmatpush1.bf16.msra.mxu0 %v2042
    %2248 = vmatprep.subr.bf16.mxu0 0
    %2249 = vmatpush1.bf16.msra.mxu0 %v2043
    %2250 = vmatprep.subr.bf16.mxu0 0
    %2251 = vmatpush1.bf16.msra.mxu0 %v2044
    %2252 = vmatprep.subr.bf16.mxu0 0
    %2253 = vmatpush1.bf16.msra.mxu0 %v2045
    %2254 = vmatprep.subr.bf16.mxu0 0
    %2255 = vmatpush1.bf16.msra.mxu0 %v2046
    %2256 = vmatprep.subr.bf16.mxu0 0
    %2257 = vmatpush1.bf16.msra.mxu0 %v2047
    %2258 = vmatprep.subr.bf16.mxu0 0
    %2259 = vmatpush1.bf16.msra.mxu0 %v2048
    %2260 = vmatprep.subr.bf16.mxu0 0
    %2261 = vmatpush1.bf16.msra.mxu0 %v2049
    %2262 = vmatprep.subr.bf16.mxu0 0
    %2263 = vmatpush1.bf16.msra.mxu0 %v2050
    %2264 = vmatprep.subr.bf16.mxu0 0
    %2265 = vmatpush1.bf16.msra.mxu0 %v2051
    %2266 = vmatprep.subr.bf16.mxu0 0
    %2267 = vmatpush1.bf16.msra.mxu0 %v2052
    %2268 = vmatprep.mubr.bf16.mxu0 %v2139
    %2269 = vmatmul.mubr.bf16.gmra.mrb[0].mxu0 %v2138
    %v2270 = vpop.f32.mrb[0].mxu0
    %v2271 = vadd.f32 %v2231, %v2270
    %v2272 = vpop.f32.mrb[0].mxu0
    %v2273 = vpop.f32.mrb[0].mxu0
    %v2274 = vpop.f32.mrb[0].mxu0
    %2275 = vdwg.mxu0
    %2276 = vmatprep.subr.bf16.mxu0 0
    %2277 = vmatpush1.bf16.msra.mxu0 %v2053
    %2278 = vmatprep.subr.bf16.mxu0 0
    %2279 = vmatpush1.bf16.msra.mxu0 %v2054
    %2280 = vmatprep.subr.bf16.mxu0 0
    %2281 = vmatpush1.bf16.msra.mxu0 %v2055
    %2282 = vmatprep.subr.bf16.mxu0 0
    %2283 = vmatpush1.bf16.msra.mxu0 %v2056
    %2284 = vmatprep.subr.bf16.mxu0 0
    %2285 = vmatpush1.bf16.msra.mxu0 %v2057
    %2286 = vmatprep.subr.bf16.mxu0 0
    %2287 = vmatpush1.bf16.msra.mxu0 %v2058
    %2288 = vmatprep.subr.bf16.mxu0 0
    %2289 = vmatpush1.bf16.msra.mxu0 %v2059
    %2290 = vmatprep.subr.bf16.mxu0 0
    %2291 = vmatpush1.bf16.msra.mxu0 %v2060
    %2292 = vmatprep.subr.bf16.mxu0 0
    %2293 = vmatpush1.bf16.msra.mxu0 %v2061
    %2294 = vmatprep.subr.bf16.mxu0 0
    %2295 = vmatpush1.bf16.msra.mxu0 %v2062
    %2296 = vmatprep.subr.bf16.mxu0 0
    %2297 = vmatpush1.bf16.msra.mxu0 %v2063
    %2298 = vmatprep.subr.bf16.mxu0 0
    %2299 = vmatpush1.bf16.msra.mxu0 %v2064
    %2300 = vmatprep.subr.bf16.mxu0 0
    %2301 = vmatpush1.bf16.msra.mxu0 %v2065
    %2302 = vmatprep.subr.bf16.mxu0 0
    %2303 = vmatpush1.bf16.msra.mxu0 %v2066
    %2304 = vmatprep.subr.bf16.mxu0 0
    %2305 = vmatpush1.bf16.msra.mxu0 %v2067
    %2306 = vmatprep.subr.bf16.mxu0 0
    %2307 = vmatpush1.bf16.msra.mxu0 %v2068
    %2308 = vmatprep.mubr.bf16.mxu0 %v2141
    %2309 = vmatmul.mubr.bf16.gmra.mrb[0].mxu0 %v2140
    %v2310 = vpop.f32.mrb[0].mxu0
    %v2311 = vadd.f32 %v2271, %v2310
    %v2312 = vpop.f32.mrb[0].mxu0
    %v2313 = vpop.f32.mrb[0].mxu0
    %v2314 = vpop.f32.mrb[0].mxu0
    %2315 = vdwg.mxu0
    %2316 = vmatprep.subr.bf16.mxu0 0
    %2317 = vmatpush1.bf16.msra.mxu0 %v2069
    %2318 = vmatprep.subr.bf16.mxu0 0
    %2319 = vmatpush1.bf16.msra.mxu0 %v2070
    %2320 = vmatprep.subr.bf16.mxu0 0
    %2321 = vmatpush1.bf16.msra.mxu0 %v2071
    %2322 = vmatprep.subr.bf16.mxu0 0
    %2323 = vmatpush1.bf16.msra.mxu0 %v2072
    %2324 = vmatprep.subr.bf16.mxu0 0
    %2325 = vmatpush1.bf16.msra.mxu0 %v2073
    %2326 = vmatprep.subr.bf16.mxu0 0
    %2327 = vmatpush1.bf16.msra.mxu0 %v2074
    %2328 = vmatprep.subr.bf16.mxu0 0
    %2329 = vmatpush1.bf16.msra.mxu0 %v2075
    %2330 = vmatprep.subr.bf16.mxu0 0
    %2331 = vmatpush1.bf16.msra.mxu0 %v2076
    %2332 = vmatprep.subr.bf16.mxu0 0
    %2333 = vmatpush1.bf16.msra.mxu0 %v2077
    %2334 = vmatprep.subr.bf16.mxu0 0
    %2335 = vmatpush1.bf16.msra.mxu0 %v2078
    %2336 = vmatprep.subr.bf16.mxu0 0
    %2337 = vmatpush1.bf16.msra.mxu0 %v2079
    %2338 = vmatprep.subr.bf16.mxu0 0
    %2339 = vmatpush1.bf16.msra.mxu0 %v2080
    %2340 = vmatprep.subr.bf16.mxu0 0
    %2341 = vmatpush1.bf16.msra.mxu0 %v2081
    %2342 = vmatprep.subr.bf16.mxu0 0
    %2343 = vmatpush1.bf16.msra.mxu0 %v2082
    %2344 = vmatprep.subr.bf16.mxu0 0
    %2345 = vmatpush1.bf16.msra.mxu0 %v2083
    %2346 = vmatprep.subr.bf16.mxu0 0
    %2347 = vmatpush1.bf16.msra.mxu0 %v2084
    %2348 = vmatprep.mubr.bf16.mxu0 %v2143
    %2349 = vmatmul.mubr.bf16.gmra.mrb[0].mxu0 %v2142
    %v2350 = vpop.f32.mrb[0].mxu0
    %v2351 = vadd.f32 %v2311, %v2350
    %v2352 = vpop.f32.mrb[0].mxu0
    %v2353 = vpop.f32.mrb[0].mxu0
    %v2354 = vpop.f32.mrb[0].mxu0
    %2355 = vdwg.mxu0
    %2356 = vmatprep.subr.bf16.mxu0 0
    %2357 = vmatpush1.bf16.msra.mxu0 %v2085
    %2358 = vmatprep.subr.bf16.mxu0 0
    %2359 = vmatpush1.bf16.msra.mxu0 %v2086
    %2360 = vmatprep.subr.bf16.mxu0 0
    %2361 = vmatpush1.bf16.msra.mxu0 %v2087
    %2362 = vmatprep.subr.bf16.mxu0 0
    %2363 = vmatpush1.bf16.msra.mxu0 %v2088
    %2364 = vmatprep.subr.bf16.mxu0 0
    %2365 = vmatpush1.bf16.msra.mxu0 %v2089
    %2366 = vmatprep.subr.bf16.mxu0 0
    %2367 = vmatpush1.bf16.msra.mxu0 %v2090
    %2368 = vmatprep.subr.bf16.mxu0 0
    %2369 = vmatpush1.bf16.msra.mxu0 %v2091
    %2370 = vmatprep.subr.bf16.mxu0 0
    %2371 = vmatpush1.bf16.msra.mxu0 %v2092
    %2372 = vmatprep.subr.bf16.mxu0 0
    %2373 = vmatpush1.bf16.msra.mxu0 %v2093
    %2374 = vmatprep.subr.bf16.mxu0 0
    %2375 = vmatpush1.bf16.msra.mxu0 %v2094
    %2376 = vmatprep.subr.bf16.mxu0 0
    %2377 = vmatpush1.bf16.msra.mxu0 %v2095
    %2378 = vmatprep.subr.bf16.mxu0 0
    %2379 = vmatpush1.bf16.msra.mxu0 %v2096
    %2380 = vmatprep.subr.bf16.mxu0 0
    %2381 = vmatpush1.bf16.msra.mxu0 %v2097
    %2382 = vmatprep.subr.bf16.mxu0 0
    %2383 = vmatpush1.bf16.msra.mxu0 %v2098
    %2384 = vmatprep.subr.bf16.mxu0 0
    %2385 = vmatpush1.bf16.msra.mxu0 %v2099
    %2386 = vmatprep.subr.bf16.mxu0 0
    %2387 = vmatpush1.bf16.msra.mxu0 %v2100
    %2388 = vmatprep.mubr.bf16.mxu0 %v2145
    %2389 = vmatmul.mubr.bf16.gmra.mrb[0].mxu0 %v2144
    %v2390 = vpop.f32.mrb[0].mxu0
    %v2391 = vadd.f32 %v2351, %v2390
    %v2392 = vpop.f32.mrb[0].mxu0
    %v2393 = vpop.f32.mrb[0].mxu0
    %v2394 = vpop.f32.mrb[0].mxu0
    %2395 = vdwg.mxu0
    %2396 = vmatprep.subr.bf16.mxu0 0
    %2397 = vmatpush1.bf16.msra.mxu0 %v2101
    %2398 = vmatprep.subr.bf16.mxu0 0
    %2399 = vmatpush1.bf16.msra.mxu0 %v2102
    %2400 = vmatprep.subr.bf16.mxu0 0
    %2401 = vmatpush1.bf16.msra.mxu0 %v2103
    %2402 = vmatprep.subr.bf16.mxu0 0
    %2403 = vmatpush1.bf16.msra.mxu0 %v2104
    %2404 = vmatprep.subr.bf16.mxu0 0
    %2405 = vmatpush1.bf16.msra.mxu0 %v2105
    %2406 = vmatprep.subr.bf16.mxu0 0
    %2407 = vmatpush1.bf16.msra.mxu0 %v2106
    %2408 = vmatprep.subr.bf16.mxu0 0
    %2409 = vmatpush1.bf16.msra.mxu0 %v2107
    %2410 = vmatprep.subr.bf16.mxu0 0
    %2411 = vmatpush1.bf16.msra.mxu0 %v2108
    %2412 = vmatprep.subr.bf16.mxu0 0
    %2413 = vmatpush1.bf16.msra.mxu0 %v2109
    %2414 = vmatprep.subr.bf16.mxu0 0
    %2415 = vmatpush1.bf16.msra.mxu0 %v2110
    %2416 = vmatprep.subr.bf16.mxu0 0
    %2417 = vmatpush1.bf16.msra.mxu0 %v2111
    %2418 = vmatprep.subr.bf16.mxu0 0
    %2419 = vmatpush1.bf16.msra.mxu0 %v2112
    %2420 = vmatprep.subr.bf16.mxu0 0
    %2421 = vmatpush1.bf16.msra.mxu0 %v2113
    %2422 = vmatprep.subr.bf16.mxu0 0
    %2423 = vmatpush1.bf16.msra.mxu0 %v2114
    %2424 = vmatprep.subr.bf16.mxu0 0
    %2425 = vmatpush1.bf16.msra.mxu0 %v2115
    %2426 = vmatprep.subr.bf16.mxu0 0
    %2427 = vmatpush1.bf16.msra.mxu0 %v2116
    %2428 = vmatprep.mubr.bf16.mxu0 %v2147
    %2429 = vmatmul.mubr.bf16.gmra.mrb[0].mxu0 %v2146
    %v2430 = vpop.f32.mrb[0].mxu0
    %v2431 = vadd.f32 %v2391, %v2430
    %v2432 = vpop.f32.mrb[0].mxu0
    %v2433 = vpop.f32.mrb[0].mxu0
    %v2434 = vpop.f32.mrb[0].mxu0
    %2435 = vdwg.mxu0
    %2436 = vmatprep.subr.bf16.mxu0 0
    %2437 = vmatpush1.bf16.msra.mxu0 %v2117
    %2438 = vmatprep.subr.bf16.mxu0 0
    %2439 = vmatpush1.bf16.msra.mxu0 %v2118
    %2440 = vmatprep.subr.bf16.mxu0 0
    %2441 = vmatpush1.bf16.msra.mxu0 %v2119
    %2442 = vmatprep.subr.bf16.mxu0 0
    %2443 = vmatpush1.bf16.msra.mxu0 %v2120
    %2444 = vmatprep.subr.bf16.mxu0 0
    %2445 = vmatpush1.bf16.msra.mxu0 %v2121
    %2446 = vmatprep.subr.bf16.mxu0 0
    %2447 = vmatpush1.bf16.msra.mxu0 %v2122
    %2448 = vmatprep.subr.bf16.mxu0 0
    %2449 = vmatpush1.bf16.msra.mxu0 %v2123
    %2450 = vmatprep.subr.bf16.mxu0 0
    %2451 = vmatpush1.bf16.msra.mxu0 %v2124
    %2452 = vmatprep.subr.bf16.mxu0 0
    %2453 = vmatpush1.bf16.msra.mxu0 %v2125
    %2454 = vmatprep.subr.bf16.mxu0 0
    %2455 = vmatpush1.bf16.msra.mxu0 %v2126
    %2456 = vmatprep.subr.bf16.mxu0 0
    %2457 = vmatpush1.bf16.msra.mxu0 %v2127
    %2458 = vmatprep.subr.bf16.mxu0 0
    %2459 = vmatpush1.bf16.msra.mxu0 %v2128
    %2460 = vmatprep.subr.bf16.mxu0 0
    %2461 = vmatpush1.bf16.msra.mxu0 %v2129
    %2462 = vmatprep.subr.bf16.mxu0 0
    %2463 = vmatpush1.bf16.msra.mxu0 %v2130
    %2464 = vmatprep.subr.bf16.mxu0 0
    %2465 = vmatpush1.bf16.msra.mxu0 %v2131
    %2466 = vmatprep.subr.bf16.mxu0 0
    %2467 = vmatpush1.bf16.msra.mxu0 %v2132
    %2468 = vmatprep.mubr.bf16.mxu0 %v2149
    %2469 = vmatmul.mubr.bf16.gmra.mrb[0].mxu0 %v2148
    %v2470 = vpop.f32.mrb[0].mxu0
    %v2471 = vadd.f32 %v2431, %v2470
    %v2472 = vpop.f32.mrb[0].mxu0
    %v2473 = vpop.f32.mrb[0].mxu0
    %v2474 = vpop.f32.mrb[0].mxu0
    %2475 = vdwg.mxu0
    %s2476 = smul.u32 4, 16
    %s2477 = smul.u32 %s2476, 16
    %s2478 = sshll.u32 %s2477, 4
    %2479 = dma.done %s659, %s2478
    %s2480 = scalar_lea.sflag [#allocation10], 6
    %s2482 = sshll.u32 1, 14
    %s2483 = sxor.u32 4294967295, %s2482
    %s2485 = sadd.s32 2, %s37
    %s2487 = sshll.u32 7, 26
    %s2488 = sxor.u32 4294967295, %s2487
    %s2489 = sand.u32 0, %s2488
    %s2490 = sshll.u32 %s2485, 26
    %s2491 = sor.u32 %s2489, %s2490
    %s2492 = sshll.u32 [#allocation8], 4
    %s2493 = int_to_ptr.vmem [resolvable:$true] %s2492
    %2496 = sst [smem:[#allocation30]] 512
    %s2497 = scalar_lea.smem [#allocation30], 1
    %2498 = sst [smem:[%s2497]] 512
    %s2499 = scalar_lea.smem [#allocation30], 2
    %2500 = sst [smem:[%s2499]] 4
    %s2501 = scalar_lea.smem [#allocation30], 3
    %2502 = sst [smem:[%s2501]] 64
    %s2503 = scalar_lea.smem [#allocation30], 4
    %2504 = sst [smem:[%s2503]] 128
    %s2505 = scalar_lea.smem [#allocation30], 5
    %2506 = sst [smem:[%s2505]] 2
    %s2507 = scalar_lea.smem [#allocation30], 6
    %2508 = sst [smem:[%s2507]] 256
    %s2509 = scalar_lea.smem [#allocation30], 7
    %2510 = sst [smem:[%s2509]] 64
    %s2511 = scalar_lea.smem [#allocation30], 8
    %2512 = sst [smem:[%s2511]] 4
    %2514 = dma.general %s8, 16384, %s2493, %s2480, [#allocation29], [#allocation30], %s2491, 0
    %v2515 = vld [vmem:[#allocation6] sm:$0xff]
    %v2516 = vld [vmem:[#allocation6 + $0x8] sm:$0xff]
    %v2517 = vld [vmem:[#allocation6 + $0x10] sm:$0xff]
    %v2518 = vld [vmem:[#allocation6 + $0x18] sm:$0xff]
    %v2519 = vld [vmem:[#allocation6 + $0x20] sm:$0xff]
    %v2520 = vld [vmem:[#allocation6 + $0x28] sm:$0xff]
    %v2521 = vld [vmem:[#allocation6 + $0x30] sm:$0xff]
    %v2522 = vld [vmem:[#allocation6 + $0x38] sm:$0xff]
    %v2523 = vld [vmem:[#allocation6 + $0x40] sm:$0xff]
    %v2524 = vld [vmem:[#allocation6 + $0x48] sm:$0xff]
    %v2525 = vld [vmem:[#allocation6 + $0x50] sm:$0xff]
    %v2526 = vld [vmem:[#allocation6 + $0x58] sm:$0xff]
    %v2527 = vld [vmem:[#allocation6 + $0x60] sm:$0xff]
    %v2528 = vld [vmem:[#allocation6 + $0x68] sm:$0xff]
    %v2529 = vld [vmem:[#allocation6 + $0x70] sm:$0xff]
    %v2530 = vld [vmem:[#allocation6 + $0x78] sm:$0xff]
    %v2531 = vld [vmem:[#allocation6 + $0x80] sm:$0xff]
    %v2532 = vld [vmem:[#allocation6 + $0x88] sm:$0xff]
    %v2533 = vld [vmem:[#allocation6 + $0x90] sm:$0xff]
    %v2534 = vld [vmem:[#allocation6 + $0x98] sm:$0xff]
    %v2535 = vld [vmem:[#allocation6 + $0xa0] sm:$0xff]
    %v2536 = vld [vmem:[#allocation6 + $0xa8] sm:$0xff]
    %v2537 = vld [vmem:[#allocation6 + $0xb0] sm:$0xff]
    %v2538 = vld [vmem:[#allocation6 + $0xb8] sm:$0xff]
    %v2539 = vld [vmem:[#allocation6 + $0xc0] sm:$0xff]
    %v2540 = vld [vmem:[#allocation6 + $0xc8] sm:$0xff]
    %v2541 = vld [vmem:[#allocation6 + $0xd0] sm:$0xff]
    %v2542 = vld [vmem:[#allocation6 + $0xd8] sm:$0xff]
    %v2543 = vld [vmem:[#allocation6 + $0xe0] sm:$0xff]
    %v2544 = vld [vmem:[#allocation6 + $0xe8] sm:$0xff]
    %v2545 = vld [vmem:[#allocation6 + $0xf0] sm:$0xff]
    %v2546 = vld [vmem:[#allocation6 + $0xf8] sm:$0xff]
    %v2547 = vld [vmem:[#allocation6 + $0x100] sm:$0xff]
    %v2548 = vld [vmem:[#allocation6 + $0x108] sm:$0xff]
    %v2549 = vld [vmem:[#allocation6 + $0x110] sm:$0xff]
    %v2550 = vld [vmem:[#allocation6 + $0x118] sm:$0xff]
    %v2551 = vld [vmem:[#allocation6 + $0x120] sm:$0xff]
    %v2552 = vld [vmem:[#allocation6 + $0x128] sm:$0xff]
    %v2553 = vld [vmem:[#allocation6 + $0x130] sm:$0xff]
    %v2554 = vld [vmem:[#allocation6 + $0x138] sm:$0xff]
    %v2555 = vld [vmem:[#allocation6 + $0x140] sm:$0xff]
    %v2556 = vld [vmem:[#allocation6 + $0x148] sm:$0xff]
    %v2557 = vld [vmem:[#allocation6 + $0x150] sm:$0xff]
    %v2558 = vld [vmem:[#allocation6 + $0x158] sm:$0xff]
    %v2559 = vld [vmem:[#allocation6 + $0x160] sm:$0xff]
    %v2560 = vld [vmem:[#allocation6 + $0x168] sm:$0xff]
    %v2561 = vld [vmem:[#allocation6 + $0x170] sm:$0xff]
    %v2562 = vld [vmem:[#allocation6 + $0x178] sm:$0xff]
    %v2563 = vld [vmem:[#allocation6 + $0x180] sm:$0xff]
    %v2564 = vld [vmem:[#allocation6 + $0x188] sm:$0xff]
    %v2565 = vld [vmem:[#allocation6 + $0x190] sm:$0xff]
    %v2566 = vld [vmem:[#allocation6 + $0x198] sm:$0xff]
    %v2567 = vld [vmem:[#allocation6 + $0x1a0] sm:$0xff]
    %v2568 = vld [vmem:[#allocation6 + $0x1a8] sm:$0xff]
    %v2569 = vld [vmem:[#allocation6 + $0x1b0] sm:$0xff]
    %v2570 = vld [vmem:[#allocation6 + $0x1b8] sm:$0xff]
    %v2571 = vld [vmem:[#allocation6 + $0x1c0] sm:$0xff]
    %v2572 = vld [vmem:[#allocation6 + $0x1c8] sm:$0xff]
    %v2573 = vld [vmem:[#allocation6 + $0x1d0] sm:$0xff]
    %v2574 = vld [vmem:[#allocation6 + $0x1d8] sm:$0xff]
    %v2575 = vld [vmem:[#allocation6 + $0x1e0] sm:$0xff]
    %v2576 = vld [vmem:[#allocation6 + $0x1e8] sm:$0xff]
    %v2577 = vld [vmem:[#allocation6 + $0x1f0] sm:$0xff]
    %v2578 = vld [vmem:[#allocation6 + $0x1f8] sm:$0xff]
    %v2579 = vld [vmem:[#allocation6 + $0x200] sm:$0xff]
    %v2580 = vld [vmem:[#allocation6 + $0x208] sm:$0xff]
    %v2581 = vld [vmem:[#allocation6 + $0x210] sm:$0xff]
    %v2582 = vld [vmem:[#allocation6 + $0x218] sm:$0xff]
    %v2583 = vld [vmem:[#allocation6 + $0x220] sm:$0xff]
    %v2584 = vld [vmem:[#allocation6 + $0x228] sm:$0xff]
    %v2585 = vld [vmem:[#allocation6 + $0x230] sm:$0xff]
    %v2586 = vld [vmem:[#allocation6 + $0x238] sm:$0xff]
    %v2587 = vld [vmem:[#allocation6 + $0x240] sm:$0xff]
    %v2588 = vld [vmem:[#allocation6 + $0x248] sm:$0xff]
    %v2589 = vld [vmem:[#allocation6 + $0x250] sm:$0xff]
    %v2590 = vld [vmem:[#allocation6 + $0x258] sm:$0xff]
    %v2591 = vld [vmem:[#allocation6 + $0x260] sm:$0xff]
    %v2592 = vld [vmem:[#allocation6 + $0x268] sm:$0xff]
    %v2593 = vld [vmem:[#allocation6 + $0x270] sm:$0xff]
    %v2594 = vld [vmem:[#allocation6 + $0x278] sm:$0xff]
    %v2595 = vld [vmem:[#allocation6 + $0x280] sm:$0xff]
    %v2596 = vld [vmem:[#allocation6 + $0x288] sm:$0xff]
    %v2597 = vld [vmem:[#allocation6 + $0x290] sm:$0xff]
    %v2598 = vld [vmem:[#allocation6 + $0x298] sm:$0xff]
    %v2599 = vld [vmem:[#allocation6 + $0x2a0] sm:$0xff]
    %v2600 = vld [vmem:[#allocation6 + $0x2a8] sm:$0xff]
    %v2601 = vld [vmem:[#allocation6 + $0x2b0] sm:$0xff]
    %v2602 = vld [vmem:[#allocation6 + $0x2b8] sm:$0xff]
    %v2603 = vld [vmem:[#allocation6 + $0x2c0] sm:$0xff]
    %v2604 = vld [vmem:[#allocation6 + $0x2c8] sm:$0xff]
    %v2605 = vld [vmem:[#allocation6 + $0x2d0] sm:$0xff]
    %v2606 = vld [vmem:[#allocation6 + $0x2d8] sm:$0xff]
    %v2607 = vld [vmem:[#allocation6 + $0x2e0] sm:$0xff]
    %v2608 = vld [vmem:[#allocation6 + $0x2e8] sm:$0xff]
    %v2609 = vld [vmem:[#allocation6 + $0x2f0] sm:$0xff]
    %v2610 = vld [vmem:[#allocation6 + $0x2f8] sm:$0xff]
    %v2611 = vld [vmem:[#allocation6 + $0x300] sm:$0xff]
    %v2612 = vld [vmem:[#allocation6 + $0x308] sm:$0xff]
    %v2613 = vld [vmem:[#allocation6 + $0x310] sm:$0xff]
    %v2614 = vld [vmem:[#allocation6 + $0x318] sm:$0xff]
    %v2615 = vld [vmem:[#allocation6 + $0x320] sm:$0xff]
    %v2616 = vld [vmem:[#allocation6 + $0x328] sm:$0xff]
    %v2617 = vld [vmem:[#allocation6 + $0x330] sm:$0xff]
    %v2618 = vld [vmem:[#allocation6 + $0x338] sm:$0xff]
    %v2619 = vld [vmem:[#allocation6 + $0x340] sm:$0xff]
    %v2620 = vld [vmem:[#allocation6 + $0x348] sm:$0xff]
    %v2621 = vld [vmem:[#allocation6 + $0x350] sm:$0xff]
    %v2622 = vld [vmem:[#allocation6 + $0x358] sm:$0xff]
    %v2623 = vld [vmem:[#allocation6 + $0x360] sm:$0xff]
    %v2624 = vld [vmem:[#allocation6 + $0x368] sm:$0xff]
    %v2625 = vld [vmem:[#allocation6 + $0x370] sm:$0xff]
    %v2626 = vld [vmem:[#allocation6 + $0x378] sm:$0xff]
    %v2627 = vld [vmem:[#allocation6 + $0x380] sm:$0xff]
    %v2628 = vld [vmem:[#allocation6 + $0x388] sm:$0xff]
    %v2629 = vld [vmem:[#allocation6 + $0x390] sm:$0xff]
    %v2630 = vld [vmem:[#allocation6 + $0x398] sm:$0xff]
    %v2631 = vld [vmem:[#allocation6 + $0x3a0] sm:$0xff]
    %v2632 = vld [vmem:[#allocation6 + $0x3a8] sm:$0xff]
    %v2633 = vld [vmem:[#allocation6 + $0x3b0] sm:$0xff]
    %v2634 = vld [vmem:[#allocation6 + $0x3b8] sm:$0xff]
    %v2635 = vld [vmem:[#allocation6 + $0x3c0] sm:$0xff]
    %v2636 = vld [vmem:[#allocation6 + $0x3c8] sm:$0xff]
    %v2637 = vld [vmem:[#allocation6 + $0x3d0] sm:$0xff]
    %v2638 = vld [vmem:[#allocation6 + $0x3d8] sm:$0xff]
    %v2639 = vld [vmem:[#allocation6 + $0x3e0] sm:$0xff]
    %v2640 = vld [vmem:[#allocation6 + $0x3e8] sm:$0xff]
    %v2641 = vld [vmem:[#allocation6 + $0x3f0] sm:$0xff]
    %v2642 = vld [vmem:[#allocation6 + $0x3f8] sm:$0xff]
    %v2643 = vld [vmem:[%s1 + $0x19] sm:$0xff]
    %v2644 = vld [vmem:[%s1 + $0x21] sm:$0xff]
    %v2645 = vpack.c.bf16 %v2471, %v2471
    %v2648 = vlaneseq
    %v2649 = vshrl.u32 %v2648, 7
    %v2650 = vsub.s32 0, %v2649
    %v2651 = vrot.slane %v2643, %v2650
    %v2652 = vlaneseq
    %v2653 = vshrl.u32 %v2652, 7
    %v2654 = vsub.s32 1, %v2653
    %v2655 = vrot.slane %v2643, %v2654
    %v2656 = vlaneseq
    %v2657 = vshrl.u32 %v2656, 7
    %v2658 = vsub.s32 2, %v2657
    %v2659 = vrot.slane %v2643, %v2658
    %v2660 = vlaneseq
    %v2661 = vshrl.u32 %v2660, 7
    %v2662 = vsub.s32 3, %v2661
    %v2663 = vrot.slane %v2643, %v2662
    %v2664 = vlaneseq
    %v2665 = vshrl.u32 %v2664, 7
    %v2666 = vsub.s32 4, %v2665
    %v2667 = vrot.slane %v2643, %v2666
    %v2668 = vlaneseq
    %v2669 = vshrl.u32 %v2668, 7
    %v2670 = vsub.s32 5, %v2669
    %v2671 = vrot.slane %v2643, %v2670
    %v2672 = vlaneseq
    %v2673 = vshrl.u32 %v2672, 7
    %v2674 = vsub.s32 6, %v2673
    %v2675 = vrot.slane %v2643, %v2674
    %v2676 = vlaneseq
    %v2677 = vshrl.u32 %v2676, 7
    %v2678 = vsub.s32 7, %v2677
    %v2679 = vrot.slane %v2643, %v2678
    %v2680 = vlaneseq
    %v2681 = vshrl.u32 %v2680, 7
    %v2682 = vsub.s32 0, %v2681
    %v2683 = vrot.slane %v2644, %v2682
    %v2684 = vlaneseq
    %v2685 = vshrl.u32 %v2684, 7
    %v2686 = vsub.s32 1, %v2685
    %v2687 = vrot.slane %v2644, %v2686
    %v2688 = vlaneseq
    %v2689 = vshrl.u32 %v2688, 7
    %v2690 = vsub.s32 2, %v2689
    %v2691 = vrot.slane %v2644, %v2690
    %v2692 = vlaneseq
    %v2693 = vshrl.u32 %v2692, 7
    %v2694 = vsub.s32 3, %v2693
    %v2695 = vrot.slane %v2644, %v2694
    %v2696 = vlaneseq
    %v2697 = vshrl.u32 %v2696, 7
    %v2698 = vsub.s32 4, %v2697
    %v2699 = vrot.slane %v2644, %v2698
    %v2700 = vlaneseq
    %v2701 = vshrl.u32 %v2700, 7
    %v2702 = vsub.s32 5, %v2701
    %v2703 = vrot.slane %v2644, %v2702
    %v2704 = vlaneseq
    %v2705 = vshrl.u32 %v2704, 7
    %v2706 = vsub.s32 6, %v2705
    %v2707 = vrot.slane %v2644, %v2706
    %v2708 = vlaneseq
    %v2709 = vshrl.u32 %v2708, 7
    %v2710 = vsub.s32 7, %v2709
    %v2711 = vrot.slane %v2644, %v2710
    %2728 = vmatprep.subr.bf16.mxu0 %v2516
    %2729 = vmatpush1.bf16.msra.mxu0 %v2515
    %2730 = vmatprep.subr.bf16.mxu0 %v2532
    %2731 = vmatpush1.bf16.msra.mxu0 %v2531
    %2732 = vmatprep.subr.bf16.mxu0 %v2548
    %2733 = vmatpush1.bf16.msra.mxu0 %v2547
    %2734 = vmatprep.subr.bf16.mxu0 %v2564
    %2735 = vmatpush1.bf16.msra.mxu0 %v2563
    %2736 = vmatprep.subr.bf16.mxu0 %v2580
    %2737 = vmatpush1.bf16.msra.mxu0 %v2579
    %2738 = vmatprep.subr.bf16.mxu0 %v2596
    %2739 = vmatpush1.bf16.msra.mxu0 %v2595
    %2740 = vmatprep.subr.bf16.mxu0 %v2612
    %2741 = vmatpush1.bf16.msra.mxu0 %v2611
    %2742 = vmatprep.subr.bf16.mxu0 %v2628
    %2743 = vmatpush1.bf16.msra.mxu0 %v2627
    %2744 = vmatprep.subr.bf16.mxu0 0
    %2745 = vmatpush1.bf16.msra.mxu0 0
    %2746 = vmatprep.subr.bf16.mxu0 0
    %2747 = vmatpush1.bf16.msra.mxu0 0
    %2748 = vmatprep.subr.bf16.mxu0 0
    %2749 = vmatpush1.bf16.msra.mxu0 0
    %2750 = vmatprep.subr.bf16.mxu0 0
    %2751 = vmatpush1.bf16.msra.mxu0 0
    %2752 = vmatprep.subr.bf16.mxu0 0
    %2753 = vmatpush1.bf16.msra.mxu0 0
    %2754 = vmatprep.subr.bf16.mxu0 0
    %2755 = vmatpush1.bf16.msra.mxu0 0
    %2756 = vmatprep.subr.bf16.mxu0 0
    %2757 = vmatpush1.bf16.msra.mxu0 0
    %2758 = vmatprep.subr.bf16.mxu0 0
    %2759 = vmatpush1.bf16.msra.mxu0 0
    %2760 = vmatprep.mubr.bf16.mxu0 0
    %2761 = vmatmul.mubr.bf16.gmra.mrb[0].mxu0 %v2645
    %v2762 = vpop.f32.mrb[0].mxu0
    %v2763 = vadd.f32 %v2651, %v2762
    %v2764 = vpop.f32.mrb[0].mxu0
    %v2765 = vadd.f32 %v2655, %v2764
    %v2766 = vpop.f32.mrb[0].mxu0
    %v2767 = vpop.f32.mrb[0].mxu0
    %2768 = vdwg.mxu0
    %2769 = vmatprep.subr.bf16.mxu0 %v2518
    %2770 = vmatpush1.bf16.msra.mxu0 %v2517
    %2771 = vmatprep.subr.bf16.mxu0 %v2534
    %2772 = vmatpush1.bf16.msra.mxu0 %v2533
    %2773 = vmatprep.subr.bf16.mxu0 %v2550
    %2774 = vmatpush1.bf16.msra.mxu0 %v2549
    %2775 = vmatprep.subr.bf16.mxu0 %v2566
    %2776 = vmatpush1.bf16.msra.mxu0 %v2565
    %2777 = vmatprep.subr.bf16.mxu0 %v2582
    %2778 = vmatpush1.bf16.msra.mxu0 %v2581
    %2779 = vmatprep.subr.bf16.mxu0 %v2598
    %2780 = vmatpush1.bf16.msra.mxu0 %v2597
    %2781 = vmatprep.subr.bf16.mxu0 %v2614
    %2782 = vmatpush1.bf16.msra.mxu0 %v2613
    %2783 = vmatprep.subr.bf16.mxu0 %v2630
    %2784 = vmatpush1.bf16.msra.mxu0 %v2629
    %2785 = vmatprep.subr.bf16.mxu0 0
    %2786 = vmatpush1.bf16.msra.mxu0 0
    %2787 = vmatprep.subr.bf16.mxu0 0
    %2788 = vmatpush1.bf16.msra.mxu0 0
    %2789 = vmatprep.subr.bf16.mxu0 0
    %2790 = vmatpush1.bf16.msra.mxu0 0
    %2791 = vmatprep.subr.bf16.mxu0 0
    %2792 = vmatpush1.bf16.msra.mxu0 0
    %2793 = vmatprep.subr.bf16.mxu0 0
    %2794 = vmatpush1.bf16.msra.mxu0 0
    %2795 = vmatprep.subr.bf16.mxu0 0
    %2796 = vmatpush1.bf16.msra.mxu0 0
    %2797 = vmatprep.subr.bf16.mxu0 0
    %2798 = vmatpush1.bf16.msra.mxu0 0
    %2799 = vmatprep.subr.bf16.mxu0 0
    %2800 = vmatpush1.bf16.msra.mxu0 0
    %2801 = vmatprep.mubr.bf16.mxu0 0
    %2802 = vmatmul.mubr.bf16.gmra.mrb[0].mxu0 %v2645
    %v2803 = vpop.f32.mrb[0].mxu0
    %v2804 = vadd.f32 %v2659, %v2803
    %v2805 = vpop.f32.mrb[0].mxu0
    %v2806 = vadd.f32 %v2663, %v2805
    %v2807 = vpop.f32.mrb[0].mxu0
    %v2808 = vpop.f32.mrb[0].mxu0
    %2809 = vdwg.mxu0
    %2810 = vmatprep.subr.bf16.mxu0 %v2520
    %2811 = vmatpush1.bf16.msra.mxu0 %v2519
    %2812 = vmatprep.subr.bf16.mxu0 %v2536
    %2813 = vmatpush1.bf16.msra.mxu0 %v2535
    %2814 = vmatprep.subr.bf16.mxu0 %v2552
    %2815 = vmatpush1.bf16.msra.mxu0 %v2551
    %2816 = vmatprep.subr.bf16.mxu0 %v2568
    %2817 = vmatpush1.bf16.msra.mxu0 %v2567
    %2818 = vmatprep.subr.bf16.mxu0 %v2584
    %2819 = vmatpush1.bf16.msra.mxu0 %v2583
    %2820 = vmatprep.subr.bf16.mxu0 %v2600
    %2821 = vmatpush1.bf16.msra.mxu0 %v2599
    %2822 = vmatprep.subr.bf16.mxu0 %v2616
    %2823 = vmatpush1.bf16.msra.mxu0 %v2615
    %2824 = vmatprep.subr.bf16.mxu0 %v2632
    %2825 = vmatpush1.bf16.msra.mxu0 %v2631
    %2826 = vmatprep.subr.bf16.mxu0 0
    %2827 = vmatpush1.bf16.msra.mxu0 0
    %2828 = vmatprep.subr.bf16.mxu0 0
    %2829 = vmatpush1.bf16.msra.mxu0 0
    %2830 = vmatprep.subr.bf16.mxu0 0
    %2831 = vmatpush1.bf16.msra.mxu0 0
    %2832 = vmatprep.subr.bf16.mxu0 0
    %2833 = vmatpush1.bf16.msra.mxu0 0
    %2834 = vmatprep.subr.bf16.mxu0 0
    %2835 = vmatpush1.bf16.msra.mxu0 0
    %2836 = vmatprep.subr.bf16.mxu0 0
    %2837 = vmatpush1.bf16.msra.mxu0 0
    %2838 = vmatprep.subr.bf16.mxu0 0
    %2839 = vmatpush1.bf16.msra.mxu0 0
    %2840 = vmatprep.subr.bf16.mxu0 0
    %2841 = vmatpush1.bf16.msra.mxu0 0
    %2842 = vmatprep.mubr.bf16.mxu0 0
    %2843 = vmatmul.mubr.bf16.gmra.mrb[0].mxu0 %v2645
    %v2844 = vpop.f32.mrb[0].mxu0
    %v2845 = vadd.f32 %v2667, %v2844
    %v2846 = vpop.f32.mrb[0].mxu0
    %v2847 = vadd.f32 %v2671, %v2846
    %v2848 = vpop.f32.mrb[0].mxu0
    %v2849 = vpop.f32.mrb[0].mxu0
    %2850 = vdwg.mxu0
    %2851 = vmatprep.subr.bf16.mxu0 %v2522
    %2852 = vmatpush1.bf16.msra.mxu0 %v2521
    %2853 = vmatprep.subr.bf16.mxu0 %v2538
    %2854 = vmatpush1.bf16.msra.mxu0 %v2537
    %2855 = vmatprep.subr.bf16.mxu0 %v2554
    %2856 = vmatpush1.bf16.msra.mxu0 %v2553
    %2857 = vmatprep.subr.bf16.mxu0 %v2570
    %2858 = vmatpush1.bf16.msra.mxu0 %v2569
    %2859 = vmatprep.subr.bf16.mxu0 %v2586
    %2860 = vmatpush1.bf16.msra.mxu0 %v2585
    %2861 = vmatprep.subr.bf16.mxu0 %v2602
    %2862 = vmatpush1.bf16.msra.mxu0 %v2601
    %2863 = vmatprep.subr.bf16.mxu0 %v2618
    %2864 = vmatpush1.bf16.msra.mxu0 %v2617
    %2865 = vmatprep.subr.bf16.mxu0 %v2634
    %2866 = vmatpush1.bf16.msra.mxu0 %v2633
    %2867 = vmatprep.subr.bf16.mxu0 0
    %2868 = vmatpush1.bf16.msra.mxu0 0
    %2869 = vmatprep.subr.bf16.mxu0 0
    %2870 = vmatpush1.bf16.msra.mxu0 0
    %2871 = vmatprep.subr.bf16.mxu0 0
    %2872 = vmatpush1.bf16.msra.mxu0 0
    %2873 = vmatprep.subr.bf16.mxu0 0
    %2874 = vmatpush1.bf16.msra.mxu0 0
    %2875 = vmatprep.subr.bf16.mxu0 0
    %2876 = vmatpush1.bf16.msra.mxu0 0
    %2877 = vmatprep.subr.bf16.mxu0 0
    %2878 = vmatpush1.bf16.msra.mxu0 0
    %2879 = vmatprep.subr.bf16.mxu0 0
    %2880 = vmatpush1.bf16.msra.mxu0 0
    %2881 = vmatprep.subr.bf16.mxu0 0
    %2882 = vmatpush1.bf16.msra.mxu0 0
    %2883 = vmatprep.mubr.bf16.mxu0 0
    %2884 = vmatmul.mubr.bf16.gmra.mrb[0].mxu0 %v2645
    %v2885 = vpop.f32.mrb[0].mxu0
    %v2886 = vadd.f32 %v2675, %v2885
    %v2887 = vpop.f32.mrb[0].mxu0
    %v2888 = vadd.f32 %v2679, %v2887
    %v2889 = vpop.f32.mrb[0].mxu0
    %v2890 = vpop.f32.mrb[0].mxu0
    %2891 = vdwg.mxu0
    %2892 = vmatprep.subr.bf16.mxu0 %v2524
    %2893 = vmatpush1.bf16.msra.mxu0 %v2523
    %2894 = vmatprep.subr.bf16.mxu0 %v2540
    %2895 = vmatpush1.bf16.msra.mxu0 %v2539
    %2896 = vmatprep.subr.bf16.mxu0 %v2556
    %2897 = vmatpush1.bf16.msra.mxu0 %v2555
    %2898 = vmatprep.subr.bf16.mxu0 %v2572
    %2899 = vmatpush1.bf16.msra.mxu0 %v2571
    %2900 = vmatprep.subr.bf16.mxu0 %v2588
    %2901 = vmatpush1.bf16.msra.mxu0 %v2587
    %2902 = vmatprep.subr.bf16.mxu0 %v2604
    %2903 = vmatpush1.bf16.msra.mxu0 %v2603
    %2904 = vmatprep.subr.bf16.mxu0 %v2620
    %2905 = vmatpush1.bf16.msra.mxu0 %v2619
    %2906 = vmatprep.subr.bf16.mxu0 %v2636
    %2907 = vmatpush1.bf16.msra.mxu0 %v2635
    %2908 = vmatprep.subr.bf16.mxu0 0
    %2909 = vmatpush1.bf16.msra.mxu0 0
    %2910 = vmatprep.subr.bf16.mxu0 0
    %2911 = vmatpush1.bf16.msra.mxu0 0
    %2912 = vmatprep.subr.bf16.mxu0 0
    %2913 = vmatpush1.bf16.msra.mxu0 0
    %2914 = vmatprep.subr.bf16.mxu0 0
    %2915 = vmatpush1.bf16.msra.mxu0 0
    %2916 = vmatprep.subr.bf16.mxu0 0
    %2917 = vmatpush1.bf16.msra.mxu0 0
    %2918 = vmatprep.subr.bf16.mxu0 0
    %2919 = vmatpush1.bf16.msra.mxu0 0
    %2920 = vmatprep.subr.bf16.mxu0 0
    %2921 = vmatpush1.bf16.msra.mxu0 0
    %2922 = vmatprep.subr.bf16.mxu0 0
    %2923 = vmatpush1.bf16.msra.mxu0 0
    %2924 = vmatprep.mubr.bf16.mxu0 0
    %2925 = vmatmul.mubr.bf16.gmra.mrb[0].mxu0 %v2645
    %v2926 = vpop.f32.mrb[0].mxu0
    %v2927 = vadd.f32 %v2683, %v2926
    %v2928 = vpop.f32.mrb[0].mxu0
    %v2929 = vadd.f32 %v2687, %v2928
    %v2930 = vpop.f32.mrb[0].mxu0
    %v2931 = vpop.f32.mrb[0].mxu0
    %2932 = vdwg.mxu0
    %2933 = vmatprep.subr.bf16.mxu0 %v2526
    %2934 = vmatpush1.bf16.msra.mxu0 %v2525
    %2935 = vmatprep.subr.bf16.mxu0 %v2542
    %2936 = vmatpush1.bf16.msra.mxu0 %v2541
    %2937 = vmatprep.subr.bf16.mxu0 %v2558
    %2938 = vmatpush1.bf16.msra.mxu0 %v2557
    %2939 = vmatprep.subr.bf16.mxu0 %v2574
    %2940 = vmatpush1.bf16.msra.mxu0 %v2573
    %2941 = vmatprep.subr.bf16.mxu0 %v2590
    %2942 = vmatpush1.bf16.msra.mxu0 %v2589
    %2943 = vmatprep.subr.bf16.mxu0 %v2606
    %2944 = vmatpush1.bf16.msra.mxu0 %v2605
    %2945 = vmatprep.subr.bf16.mxu0 %v2622
    %2946 = vmatpush1.bf16.msra.mxu0 %v2621
    %2947 = vmatprep.subr.bf16.mxu0 %v2638
    %2948 = vmatpush1.bf16.msra.mxu0 %v2637
    %2949 = vmatprep.subr.bf16.mxu0 0
    %2950 = vmatpush1.bf16.msra.mxu0 0
    %2951 = vmatprep.subr.bf16.mxu0 0
    %2952 = vmatpush1.bf16.msra.mxu0 0
    %2953 = vmatprep.subr.bf16.mxu0 0
    %2954 = vmatpush1.bf16.msra.mxu0 0
    %2955 = vmatprep.subr.bf16.mxu0 0
    %2956 = vmatpush1.bf16.msra.mxu0 0
    %2957 = vmatprep.subr.bf16.mxu0 0
    %2958 = vmatpush1.bf16.msra.mxu0 0
    %2959 = vmatprep.subr.bf16.mxu0 0
    %2960 = vmatpush1.bf16.msra.mxu0 0
    %2961 = vmatprep.subr.bf16.mxu0 0
    %2962 = vmatpush1.bf16.msra.mxu0 0
    %2963 = vmatprep.subr.bf16.mxu0 0
    %2964 = vmatpush1.bf16.msra.mxu0 0
    %2965 = vmatprep.mubr.bf16.mxu0 0
    %2966 = vmatmul.mubr.bf16.gmra.mrb[0].mxu0 %v2645
    %v2967 = vpop.f32.mrb[0].mxu0
    %v2968 = vadd.f32 %v2691, %v2967
    %v2969 = vpop.f32.mrb[0].mxu0
    %v2970 = vadd.f32 %v2695, %v2969
    %v2971 = vpop.f32.mrb[0].mxu0
    %v2972 = vpop.f32.mrb[0].mxu0
    %2973 = vdwg.mxu0
    %2974 = vmatprep.subr.bf16.mxu0 %v2528
    %2975 = vmatpush1.bf16.msra.mxu0 %v2527
    %2976 = vmatprep.subr.bf16.mxu0 %v2544
    %2977 = vmatpush1.bf16.msra.mxu0 %v2543
    %2978 = vmatprep.subr.bf16.mxu0 %v2560
    %2979 = vmatpush1.bf16.msra.mxu0 %v2559
    %2980 = vmatprep.subr.bf16.mxu0 %v2576
    %2981 = vmatpush1.bf16.msra.mxu0 %v2575
    %2982 = vmatprep.subr.bf16.mxu0 %v2592
    %2983 = vmatpush1.bf16.msra.mxu0 %v2591
    %2984 = vmatprep.subr.bf16.mxu0 %v2608
    %2985 = vmatpush1.bf16.msra.mxu0 %v2607
    %2986 = vmatprep.subr.bf16.mxu0 %v2624
    %2987 = vmatpush1.bf16.msra.mxu0 %v2623
    %2988 = vmatprep.subr.bf16.mxu0 %v2640
    %2989 = vmatpush1.bf16.msra.mxu0 %v2639
    %2990 = vmatprep.subr.bf16.mxu0 0
    %2991 = vmatpush1.bf16.msra.mxu0 0
    %2992 = vmatprep.subr.bf16.mxu0 0
    %2993 = vmatpush1.bf16.msra.mxu0 0
    %2994 = vmatprep.subr.bf16.mxu0 0
    %2995 = vmatpush1.bf16.msra.mxu0 0
    %2996 = vmatprep.subr.bf16.mxu0 0
    %2997 = vmatpush1.bf16.msra.mxu0 0
    %2998 = vmatprep.subr.bf16.mxu0 0
    %2999 = vmatpush1.bf16.msra.mxu0 0
    %3000 = vmatprep.subr.bf16.mxu0 0
    %3001 = vmatpush1.bf16.msra.mxu0 0
    %3002 = vmatprep.subr.bf16.mxu0 0
    %3003 = vmatpush1.bf16.msra.mxu0 0
    %3004 = vmatprep.subr.bf16.mxu0 0
    %3005 = vmatpush1.bf16.msra.mxu0 0
    %3006 = vmatprep.mubr.bf16.mxu0 0
    %3007 = vmatmul.mubr.bf16.gmra.mrb[0].mxu0 %v2645
    %v3008 = vpop.f32.mrb[0].mxu0
    %v3009 = vadd.f32 %v2699, %v3008
    %v3010 = vpop.f32.mrb[0].mxu0
    %v3011 = vadd.f32 %v2703, %v3010
    %v3012 = vpop.f32.mrb[0].mxu0
    %v3013 = vpop.f32.mrb[0].mxu0
    %3014 = vdwg.mxu0
    %3015 = vmatprep.subr.bf16.mxu0 %v2530
    %3016 = vmatpush1.bf16.msra.mxu0 %v2529
    %3017 = vmatprep.subr.bf16.mxu0 %v2546
    %3018 = vmatpush1.bf16.msra.mxu0 %v2545
    %3019 = vmatprep.subr.bf16.mxu0 %v2562
    %3020 = vmatpush1.bf16.msra.mxu0 %v2561
    %3021 = vmatprep.subr.bf16.mxu0 %v2578
    %3022 = vmatpush1.bf16.msra.mxu0 %v2577
    %3023 = vmatprep.subr.bf16.mxu0 %v2594
    %3024 = vmatpush1.bf16.msra.mxu0 %v2593
    %3025 = vmatprep.subr.bf16.mxu0 %v2610
    %3026 = vmatpush1.bf16.msra.mxu0 %v2609
    %3027 = vmatprep.subr.bf16.mxu0 %v2626
    %3028 = vmatpush1.bf16.msra.mxu0 %v2625
    %3029 = vmatprep.subr.bf16.mxu0 %v2642
    %3030 = vmatpush1.bf16.msra.mxu0 %v2641
    %3031 = vmatprep.subr.bf16.mxu0 0
    %3032 = vmatpush1.bf16.msra.mxu0 0
    %3033 = vmatprep.subr.bf16.mxu0 0
    %3034 = vmatpush1.bf16.msra.mxu0 0
    %3035 = vmatprep.subr.bf16.mxu0 0
    %3036 = vmatpush1.bf16.msra.mxu0 0
    %3037 = vmatprep.subr.bf16.mxu0 0
    %3038 = vmatpush1.bf16.msra.mxu0 0
    %3039 = vmatprep.subr.bf16.mxu0 0
    %3040 = vmatpush1.bf16.msra.mxu0 0
    %3041 = vmatprep.subr.bf16.mxu0 0
    %3042 = vmatpush1.bf16.msra.mxu0 0
    %3043 = vmatprep.subr.bf16.mxu0 0
    %3044 = vmatpush1.bf16.msra.mxu0 0
    %3045 = vmatprep.subr.bf16.mxu0 0
    %3046 = vmatpush1.bf16.msra.mxu0 0
    %3047 = vmatprep.mubr.bf16.mxu0 0
    %3048 = vmatmul.mubr.bf16.gmra.mrb[0].mxu0 %v2645
    %v3049 = vpop.f32.mrb[0].mxu0
    %v3050 = vadd.f32 %v2707, %v3049
    %v3051 = vpop.f32.mrb[0].mxu0
    %v3052 = vadd.f32 %v2711, %v3051
    %v3053 = vpop.f32.mrb[0].mxu0
    %v3054 = vpop.f32.mrb[0].mxu0
    %3055 = vdwg.mxu0
    %v3056 = vmax.f32 %v2763, 0.0
    %v3057 = vmax.f32 %v2765, 0.0
    %v3058 = vmax.f32 %v2804, 0.0
    %v3059 = vmax.f32 %v2806, 0.0
    %v3060 = vmax.f32 %v2845, 0.0
    %v3061 = vmax.f32 %v2847, 0.0
    %v3062 = vmax.f32 %v2886, 0.0
    %v3063 = vmax.f32 %v2888, 0.0
    %v3064 = vmax.f32 %v2927, 0.0
    %v3065 = vmax.f32 %v2929, 0.0
    %v3066 = vmax.f32 %v2968, 0.0
    %v3067 = vmax.f32 %v2970, 0.0
    %v3068 = vmax.f32 %v3009, 0.0
    %v3069 = vmax.f32 %v3011, 0.0
    %v3070 = vmax.f32 %v3050, 0.0
    %v3071 = vmax.f32 %v3052, 0.0
    %s3072 = smul.u32 %s1966, 4
    %s3073 = sshll.u32 %s3072, 4
    %3074 = dma.done %s1970, %s3073
    %s3075 = scalar_lea.sflag [#allocation10], 7
    %s3077 = sshll.u32 1, 14
    %s3078 = sxor.u32 4294967295, %s3077
    %s3080 = sadd.s32 2, %s37
    %s3082 = sshll.u32 7, 26
    %s3083 = sxor.u32 4294967295, %s3082
    %s3084 = sand.u32 0, %s3083
    %s3085 = sshll.u32 %s3080, 26
    %s3086 = sor.u32 %s3084, %s3085
    %s3087 = sshll.u32 [#allocation9], 4
    %s3088 = int_to_ptr.vmem [resolvable:$true] %s3087
    %3091 = sst [smem:[#allocation32]] 256
    %s3092 = scalar_lea.smem [#allocation32], 1
    %3093 = sst [smem:[%s3092]] 256
    %s3094 = scalar_lea.smem [#allocation32], 2
    %3095 = sst [smem:[%s3094]] 2
    %s3096 = scalar_lea.smem [#allocation32], 3
    %3097 = sst [smem:[%s3096]] 64
    %s3098 = scalar_lea.smem [#allocation32], 4
    %3099 = sst [smem:[%s3098]] 128
    %s3100 = scalar_lea.smem [#allocation32], 5
    %3101 = sst [smem:[%s3100]] 2
    %s3102 = scalar_lea.smem [#allocation32], 6
    %3103 = sst [smem:[%s3102]] 128
    %s3104 = scalar_lea.smem [#allocation32], 7
    %3105 = sst [smem:[%s3104]] 64
    %s3106 = scalar_lea.smem [#allocation32], 8
    %3107 = sst [smem:[%s3106]] 4
    %3109 = dma.general %s9, 8192, %s3088, %s3075, [#allocation31], [#allocation32], %s3086, 0
    %v3110 = vld [vmem:[#allocation7] sm:$0xff]
    %v3111 = vld [vmem:[#allocation7 + $0x8] sm:$0xff]
    %v3112 = vld [vmem:[#allocation7 + $0x10] sm:$0xff]
    %v3113 = vld [vmem:[#allocation7 + $0x18] sm:$0xff]
    %v3114 = vld [vmem:[#allocation7 + $0x20] sm:$0xff]
    %v3115 = vld [vmem:[#allocation7 + $0x28] sm:$0xff]
    %v3116 = vld [vmem:[#allocation7 + $0x30] sm:$0xff]
    %v3117 = vld [vmem:[#allocation7 + $0x38] sm:$0xff]
    %v3118 = vld [vmem:[#allocation7 + $0x40] sm:$0xff]
    %v3119 = vld [vmem:[#allocation7 + $0x48] sm:$0xff]
    %v3120 = vld [vmem:[#allocation7 + $0x50] sm:$0xff]
    %v3121 = vld [vmem:[#allocation7 + $0x58] sm:$0xff]
    %v3122 = vld [vmem:[#allocation7 + $0x60] sm:$0xff]
    %v3123 = vld [vmem:[#allocation7 + $0x68] sm:$0xff]
    %v3124 = vld [vmem:[#allocation7 + $0x70] sm:$0xff]
    %v3125 = vld [vmem:[#allocation7 + $0x78] sm:$0xff]
    %v3126 = vld [vmem:[#allocation7 + $0x80] sm:$0xff]
    %v3127 = vld [vmem:[#allocation7 + $0x88] sm:$0xff]
    %v3128 = vld [vmem:[#allocation7 + $0x90] sm:$0xff]
    %v3129 = vld [vmem:[#allocation7 + $0x98] sm:$0xff]
    %v3130 = vld [vmem:[#allocation7 + $0xa0] sm:$0xff]
    %v3131 = vld [vmem:[#allocation7 + $0xa8] sm:$0xff]
    %v3132 = vld [vmem:[#allocation7 + $0xb0] sm:$0xff]
    %v3133 = vld [vmem:[#allocation7 + $0xb8] sm:$0xff]
    %v3134 = vld [vmem:[#allocation7 + $0xc0] sm:$0xff]
    %v3135 = vld [vmem:[#allocation7 + $0xc8] sm:$0xff]
    %v3136 = vld [vmem:[#allocation7 + $0xd0] sm:$0xff]
    %v3137 = vld [vmem:[#allocation7 + $0xd8] sm:$0xff]
    %v3138 = vld [vmem:[#allocation7 + $0xe0] sm:$0xff]
    %v3139 = vld [vmem:[#allocation7 + $0xe8] sm:$0xff]
    %v3140 = vld [vmem:[#allocation7 + $0xf0] sm:$0xff]
    %v3141 = vld [vmem:[#allocation7 + $0xf8] sm:$0xff]
    %v3142 = vld [vmem:[#allocation7 + $0x100] sm:$0xff]
    %v3143 = vld [vmem:[#allocation7 + $0x108] sm:$0xff]
    %v3144 = vld [vmem:[#allocation7 + $0x110] sm:$0xff]
    %v3145 = vld [vmem:[#allocation7 + $0x118] sm:$0xff]
    %v3146 = vld [vmem:[#allocation7 + $0x120] sm:$0xff]
    %v3147 = vld [vmem:[#allocation7 + $0x128] sm:$0xff]
    %v3148 = vld [vmem:[#allocation7 + $0x130] sm:$0xff]
    %v3149 = vld [vmem:[#allocation7 + $0x138] sm:$0xff]
    %v3150 = vld [vmem:[#allocation7 + $0x140] sm:$0xff]
    %v3151 = vld [vmem:[#allocation7 + $0x148] sm:$0xff]
    %v3152 = vld [vmem:[#allocation7 + $0x150] sm:$0xff]
    %v3153 = vld [vmem:[#allocation7 + $0x158] sm:$0xff]
    %v3154 = vld [vmem:[#allocation7 + $0x160] sm:$0xff]
    %v3155 = vld [vmem:[#allocation7 + $0x168] sm:$0xff]
    %v3156 = vld [vmem:[#allocation7 + $0x170] sm:$0xff]
    %v3157 = vld [vmem:[#allocation7 + $0x178] sm:$0xff]
    %v3158 = vld [vmem:[#allocation7 + $0x180] sm:$0xff]
    %v3159 = vld [vmem:[#allocation7 + $0x188] sm:$0xff]
    %v3160 = vld [vmem:[#allocation7 + $0x190] sm:$0xff]
    %v3161 = vld [vmem:[#allocation7 + $0x198] sm:$0xff]
    %v3162 = vld [vmem:[#allocation7 + $0x1a0] sm:$0xff]
    %v3163 = vld [vmem:[#allocation7 + $0x1a8] sm:$0xff]
    %v3164 = vld [vmem:[#allocation7 + $0x1b0] sm:$0xff]
    %v3165 = vld [vmem:[#allocation7 + $0x1b8] sm:$0xff]
    %v3166 = vld [vmem:[#allocation7 + $0x1c0] sm:$0xff]
    %v3167 = vld [vmem:[#allocation7 + $0x1c8] sm:$0xff]
    %v3168 = vld [vmem:[#allocation7 + $0x1d0] sm:$0xff]
    %v3169 = vld [vmem:[#allocation7 + $0x1d8] sm:$0xff]
    %v3170 = vld [vmem:[#allocation7 + $0x1e0] sm:$0xff]
    %v3171 = vld [vmem:[#allocation7 + $0x1e8] sm:$0xff]
    %v3172 = vld [vmem:[#allocation7 + $0x1f0] sm:$0xff]
    %v3173 = vld [vmem:[#allocation7 + $0x1f8] sm:$0xff]
    %v3174 = vld [vmem:[#allocation7 + $0x200] sm:$0xff]
    %v3175 = vld [vmem:[#allocation7 + $0x208] sm:$0xff]
    %v3176 = vld [vmem:[#allocation7 + $0x210] sm:$0xff]
    %v3177 = vld [vmem:[#allocation7 + $0x218] sm:$0xff]
    %v3178 = vld [vmem:[#allocation7 + $0x220] sm:$0xff]
    %v3179 = vld [vmem:[#allocation7 + $0x228] sm:$0xff]
    %v3180 = vld [vmem:[#allocation7 + $0x230] sm:$0xff]
    %v3181 = vld [vmem:[#allocation7 + $0x238] sm:$0xff]
    %v3182 = vld [vmem:[#allocation7 + $0x240] sm:$0xff]
    %v3183 = vld [vmem:[#allocation7 + $0x248] sm:$0xff]
    %v3184 = vld [vmem:[#allocation7 + $0x250] sm:$0xff]
    %v3185 = vld [vmem:[#allocation7 + $0x258] sm:$0xff]
    %v3186 = vld [vmem:[#allocation7 + $0x260] sm:$0xff]
    %v3187 = vld [vmem:[#allocation7 + $0x268] sm:$0xff]
    %v3188 = vld [vmem:[#allocation7 + $0x270] sm:$0xff]
    %v3189 = vld [vmem:[#allocation7 + $0x278] sm:$0xff]
    %v3190 = vld [vmem:[#allocation7 + $0x280] sm:$0xff]
    %v3191 = vld [vmem:[#allocation7 + $0x288] sm:$0xff]
    %v3192 = vld [vmem:[#allocation7 + $0x290] sm:$0xff]
    %v3193 = vld [vmem:[#allocation7 + $0x298] sm:$0xff]
    %v3194 = vld [vmem:[#allocation7 + $0x2a0] sm:$0xff]
    %v3195 = vld [vmem:[#allocation7 + $0x2a8] sm:$0xff]
    %v3196 = vld [vmem:[#allocation7 + $0x2b0] sm:$0xff]
    %v3197 = vld [vmem:[#allocation7 + $0x2b8] sm:$0xff]
    %v3198 = vld [vmem:[#allocation7 + $0x2c0] sm:$0xff]
    %v3199 = vld [vmem:[#allocation7 + $0x2c8] sm:$0xff]
    %v3200 = vld [vmem:[#allocation7 + $0x2d0] sm:$0xff]
    %v3201 = vld [vmem:[#allocation7 + $0x2d8] sm:$0xff]
    %v3202 = vld [vmem:[#allocation7 + $0x2e0] sm:$0xff]
    %v3203 = vld [vmem:[#allocation7 + $0x2e8] sm:$0xff]
    %v3204 = vld [vmem:[#allocation7 + $0x2f0] sm:$0xff]
    %v3205 = vld [vmem:[#allocation7 + $0x2f8] sm:$0xff]
    %v3206 = vld [vmem:[#allocation7 + $0x300] sm:$0xff]
    %v3207 = vld [vmem:[#allocation7 + $0x308] sm:$0xff]
    %v3208 = vld [vmem:[#allocation7 + $0x310] sm:$0xff]
    %v3209 = vld [vmem:[#allocation7 + $0x318] sm:$0xff]
    %v3210 = vld [vmem:[#allocation7 + $0x320] sm:$0xff]
    %v3211 = vld [vmem:[#allocation7 + $0x328] sm:$0xff]
    %v3212 = vld [vmem:[#allocation7 + $0x330] sm:$0xff]
    %v3213 = vld [vmem:[#allocation7 + $0x338] sm:$0xff]
    %v3214 = vld [vmem:[#allocation7 + $0x340] sm:$0xff]
    %v3215 = vld [vmem:[#allocation7 + $0x348] sm:$0xff]
    %v3216 = vld [vmem:[#allocation7 + $0x350] sm:$0xff]
    %v3217 = vld [vmem:[#allocation7 + $0x358] sm:$0xff]
    %v3218 = vld [vmem:[#allocation7 + $0x360] sm:$0xff]
    %v3219 = vld [vmem:[#allocation7 + $0x368] sm:$0xff]
    %v3220 = vld [vmem:[#allocation7 + $0x370] sm:$0xff]
    %v3221 = vld [vmem:[#allocation7 + $0x378] sm:$0xff]
    %v3222 = vld [vmem:[#allocation7 + $0x380] sm:$0xff]
    %v3223 = vld [vmem:[#allocation7 + $0x388] sm:$0xff]
    %v3224 = vld [vmem:[#allocation7 + $0x390] sm:$0xff]
    %v3225 = vld [vmem:[#allocation7 + $0x398] sm:$0xff]
    %v3226 = vld [vmem:[#allocation7 + $0x3a0] sm:$0xff]
    %v3227 = vld [vmem:[#allocation7 + $0x3a8] sm:$0xff]
    %v3228 = vld [vmem:[#allocation7 + $0x3b0] sm:$0xff]
    %v3229 = vld [vmem:[#allocation7 + $0x3b8] sm:$0xff]
    %v3230 = vld [vmem:[#allocation7 + $0x3c0] sm:$0xff]
    %v3231 = vld [vmem:[#allocation7 + $0x3c8] sm:$0xff]
    %v3232 = vld [vmem:[#allocation7 + $0x3d0] sm:$0xff]
    %v3233 = vld [vmem:[#allocation7 + $0x3d8] sm:$0xff]
    %v3234 = vld [vmem:[#allocation7 + $0x3e0] sm:$0xff]
    %v3235 = vld [vmem:[#allocation7 + $0x3e8] sm:$0xff]
    %v3236 = vld [vmem:[#allocation7 + $0x3f0] sm:$0xff]
    %v3237 = vld [vmem:[#allocation7 + $0x3f8] sm:$0xff]
    %v3238 = vld [vmem:[#allocation7 + $0x400] sm:$0xff]
    %v3239 = vld [vmem:[#allocation7 + $0x408] sm:$0xff]
    %v3240 = vld [vmem:[#allocation7 + $0x410] sm:$0xff]
    %v3241 = vld [vmem:[#allocation7 + $0x418] sm:$0xff]
    %v3242 = vld [vmem:[#allocation7 + $0x420] sm:$0xff]
    %v3243 = vld [vmem:[#allocation7 + $0x428] sm:$0xff]
    %v3244 = vld [vmem:[#allocation7 + $0x430] sm:$0xff]
    %v3245 = vld [vmem:[#allocation7 + $0x438] sm:$0xff]
    %v3246 = vld [vmem:[#allocation7 + $0x440] sm:$0xff]
    %v3247 = vld [vmem:[#allocation7 + $0x448] sm:$0xff]
    %v3248 = vld [vmem:[#allocation7 + $0x450] sm:$0xff]
    %v3249 = vld [vmem:[#allocation7 + $0x458] sm:$0xff]
    %v3250 = vld [vmem:[#allocation7 + $0x460] sm:$0xff]
    %v3251 = vld [vmem:[#allocation7 + $0x468] sm:$0xff]
    %v3252 = vld [vmem:[#allocation7 + $0x470] sm:$0xff]
    %v3253 = vld [vmem:[#allocation7 + $0x478] sm:$0xff]
    %v3254 = vld [vmem:[#allocation7 + $0x480] sm:$0xff]
    %v3255 = vld [vmem:[#allocation7 + $0x488] sm:$0xff]
    %v3256 = vld [vmem:[#allocation7 + $0x490] sm:$0xff]
    %v3257 = vld [vmem:[#allocation7 + $0x498] sm:$0xff]
    %v3258 = vld [vmem:[#allocation7 + $0x4a0] sm:$0xff]
    %v3259 = vld [vmem:[#allocation7 + $0x4a8] sm:$0xff]
    %v3260 = vld [vmem:[#allocation7 + $0x4b0] sm:$0xff]
    %v3261 = vld [vmem:[#allocation7 + $0x4b8] sm:$0xff]
    %v3262 = vld [vmem:[#allocation7 + $0x4c0] sm:$0xff]
    %v3263 = vld [vmem:[#allocation7 + $0x4c8] sm:$0xff]
    %v3264 = vld [vmem:[#allocation7 + $0x4d0] sm:$0xff]
    %v3265 = vld [vmem:[#allocation7 + $0x4d8] sm:$0xff]
    %v3266 = vld [vmem:[#allocation7 + $0x4e0] sm:$0xff]
    %v3267 = vld [vmem:[#allocation7 + $0x4e8] sm:$0xff]
    %v3268 = vld [vmem:[#allocation7 + $0x4f0] sm:$0xff]
    %v3269 = vld [vmem:[#allocation7 + $0x4f8] sm:$0xff]
    %v3270 = vld [vmem:[#allocation7 + $0x500] sm:$0xff]
    %v3271 = vld [vmem:[#allocation7 + $0x508] sm:$0xff]
    %v3272 = vld [vmem:[#allocation7 + $0x510] sm:$0xff]
    %v3273 = vld [vmem:[#allocation7 + $0x518] sm:$0xff]
    %v3274 = vld [vmem:[#allocation7 + $0x520] sm:$0xff]
    %v3275 = vld [vmem:[#allocation7 + $0x528] sm:$0xff]
    %v3276 = vld [vmem:[#allocation7 + $0x530] sm:$0xff]
    %v3277 = vld [vmem:[#allocation7 + $0x538] sm:$0xff]
    %v3278 = vld [vmem:[#allocation7 + $0x540] sm:$0xff]
    %v3279 = vld [vmem:[#allocation7 + $0x548] sm:$0xff]
    %v3280 = vld [vmem:[#allocation7 + $0x550] sm:$0xff]
    %v3281 = vld [vmem:[#allocation7 + $0x558] sm:$0xff]
    %v3282 = vld [vmem:[#allocation7 + $0x560] sm:$0xff]
    %v3283 = vld [vmem:[#allocation7 + $0x568] sm:$0xff]
    %v3284 = vld [vmem:[#allocation7 + $0x570] sm:$0xff]
    %v3285 = vld [vmem:[#allocation7 + $0x578] sm:$0xff]
    %v3286 = vld [vmem:[#allocation7 + $0x580] sm:$0xff]
    %v3287 = vld [vmem:[#allocation7 + $0x588] sm:$0xff]
    %v3288 = vld [vmem:[#allocation7 + $0x590] sm:$0xff]
    %v3289 = vld [vmem:[#allocation7 + $0x598] sm:$0xff]
    %v3290 = vld [vmem:[#allocation7 + $0x5a0] sm:$0xff]
    %v3291 = vld [vmem:[#allocation7 + $0x5a8] sm:$0xff]
    %v3292 = vld [vmem:[#allocation7 + $0x5b0] sm:$0xff]
    %v3293 = vld [vmem:[#allocation7 + $0x5b8] sm:$0xff]
    %v3294 = vld [vmem:[#allocation7 + $0x5c0] sm:$0xff]
    %v3295 = vld [vmem:[#allocation7 + $0x5c8] sm:$0xff]
    %v3296 = vld [vmem:[#allocation7 + $0x5d0] sm:$0xff]
    %v3297 = vld [vmem:[#allocation7 + $0x5d8] sm:$0xff]
    %v3298 = vld [vmem:[#allocation7 + $0x5e0] sm:$0xff]
    %v3299 = vld [vmem:[#allocation7 + $0x5e8] sm:$0xff]
    %v3300 = vld [vmem:[#allocation7 + $0x5f0] sm:$0xff]
    %v3301 = vld [vmem:[#allocation7 + $0x5f8] sm:$0xff]
    %v3302 = vld [vmem:[#allocation7 + $0x600] sm:$0xff]
    %v3303 = vld [vmem:[#allocation7 + $0x608] sm:$0xff]
    %v3304 = vld [vmem:[#allocation7 + $0x610] sm:$0xff]
    %v3305 = vld [vmem:[#allocation7 + $0x618] sm:$0xff]
    %v3306 = vld [vmem:[#allocation7 + $0x620] sm:$0xff]
    %v3307 = vld [vmem:[#allocation7 + $0x628] sm:$0xff]
    %v3308 = vld [vmem:[#allocation7 + $0x630] sm:$0xff]
    %v3309 = vld [vmem:[#allocation7 + $0x638] sm:$0xff]
    %v3310 = vld [vmem:[#allocation7 + $0x640] sm:$0xff]
    %v3311 = vld [vmem:[#allocation7 + $0x648] sm:$0xff]
    %v3312 = vld [vmem:[#allocation7 + $0x650] sm:$0xff]
    %v3313 = vld [vmem:[#allocation7 + $0x658] sm:$0xff]
    %v3314 = vld [vmem:[#allocation7 + $0x660] sm:$0xff]
    %v3315 = vld [vmem:[#allocation7 + $0x668] sm:$0xff]
    %v3316 = vld [vmem:[#allocation7 + $0x670] sm:$0xff]
    %v3317 = vld [vmem:[#allocation7 + $0x678] sm:$0xff]
    %v3318 = vld [vmem:[#allocation7 + $0x680] sm:$0xff]
    %v3319 = vld [vmem:[#allocation7 + $0x688] sm:$0xff]
    %v3320 = vld [vmem:[#allocation7 + $0x690] sm:$0xff]
    %v3321 = vld [vmem:[#allocation7 + $0x698] sm:$0xff]
    %v3322 = vld [vmem:[#allocation7 + $0x6a0] sm:$0xff]
    %v3323 = vld [vmem:[#allocation7 + $0x6a8] sm:$0xff]
    %v3324 = vld [vmem:[#allocation7 + $0x6b0] sm:$0xff]
    %v3325 = vld [vmem:[#allocation7 + $0x6b8] sm:$0xff]
    %v3326 = vld [vmem:[#allocation7 + $0x6c0] sm:$0xff]
    %v3327 = vld [vmem:[#allocation7 + $0x6c8] sm:$0xff]
    %v3328 = vld [vmem:[#allocation7 + $0x6d0] sm:$0xff]
    %v3329 = vld [vmem:[#allocation7 + $0x6d8] sm:$0xff]
    %v3330 = vld [vmem:[#allocation7 + $0x6e0] sm:$0xff]
    %v3331 = vld [vmem:[#allocation7 + $0x6e8] sm:$0xff]
    %v3332 = vld [vmem:[#allocation7 + $0x6f0] sm:$0xff]
    %v3333 = vld [vmem:[#allocation7 + $0x6f8] sm:$0xff]
    %v3334 = vld [vmem:[#allocation7 + $0x700] sm:$0xff]
    %v3335 = vld [vmem:[#allocation7 + $0x708] sm:$0xff]
    %v3336 = vld [vmem:[#allocation7 + $0x710] sm:$0xff]
    %v3337 = vld [vmem:[#allocation7 + $0x718] sm:$0xff]
    %v3338 = vld [vmem:[#allocation7 + $0x720] sm:$0xff]
    %v3339 = vld [vmem:[#allocation7 + $0x728] sm:$0xff]
    %v3340 = vld [vmem:[#allocation7 + $0x730] sm:$0xff]
    %v3341 = vld [vmem:[#allocation7 + $0x738] sm:$0xff]
    %v3342 = vld [vmem:[#allocation7 + $0x740] sm:$0xff]
    %v3343 = vld [vmem:[#allocation7 + $0x748] sm:$0xff]
    %v3344 = vld [vmem:[#allocation7 + $0x750] sm:$0xff]
    %v3345 = vld [vmem:[#allocation7 + $0x758] sm:$0xff]
    %v3346 = vld [vmem:[#allocation7 + $0x760] sm:$0xff]
    %v3347 = vld [vmem:[#allocation7 + $0x768] sm:$0xff]
    %v3348 = vld [vmem:[#allocation7 + $0x770] sm:$0xff]
    %v3349 = vld [vmem:[#allocation7 + $0x778] sm:$0xff]
    %v3350 = vld [vmem:[#allocation7 + $0x780] sm:$0xff]
    %v3351 = vld [vmem:[#allocation7 + $0x788] sm:$0xff]
    %v3352 = vld [vmem:[#allocation7 + $0x790] sm:$0xff]
    %v3353 = vld [vmem:[#allocation7 + $0x798] sm:$0xff]
    %v3354 = vld [vmem:[#allocation7 + $0x7a0] sm:$0xff]
    %v3355 = vld [vmem:[#allocation7 + $0x7a8] sm:$0xff]
    %v3356 = vld [vmem:[#allocation7 + $0x7b0] sm:$0xff]
    %v3357 = vld [vmem:[#allocation7 + $0x7b8] sm:$0xff]
    %v3358 = vld [vmem:[#allocation7 + $0x7c0] sm:$0xff]
    %v3359 = vld [vmem:[#allocation7 + $0x7c8] sm:$0xff]
    %v3360 = vld [vmem:[#allocation7 + $0x7d0] sm:$0xff]
    %v3361 = vld [vmem:[#allocation7 + $0x7d8] sm:$0xff]
    %v3362 = vld [vmem:[#allocation7 + $0x7e0] sm:$0xff]
    %v3363 = vld [vmem:[#allocation7 + $0x7e8] sm:$0xff]
    %v3364 = vld [vmem:[#allocation7 + $0x7f0] sm:$0xff]
    %v3365 = vld [vmem:[#allocation7 + $0x7f8] sm:$0xff]
    %v3366 = vld [vmem:[#allocation7 + $0x800] sm:$0xff]
    %v3367 = vld [vmem:[#allocation7 + $0x808] sm:$0xff]
    %v3368 = vld [vmem:[#allocation7 + $0x810] sm:$0xff]
    %v3369 = vld [vmem:[#allocation7 + $0x818] sm:$0xff]
    %v3370 = vld [vmem:[#allocation7 + $0x820] sm:$0xff]
    %v3371 = vld [vmem:[#allocation7 + $0x828] sm:$0xff]
    %v3372 = vld [vmem:[#allocation7 + $0x830] sm:$0xff]
    %v3373 = vld [vmem:[#allocation7 + $0x838] sm:$0xff]
    %v3374 = vld [vmem:[#allocation7 + $0x840] sm:$0xff]
    %v3375 = vld [vmem:[#allocation7 + $0x848] sm:$0xff]
    %v3376 = vld [vmem:[#allocation7 + $0x850] sm:$0xff]
    %v3377 = vld [vmem:[#allocation7 + $0x858] sm:$0xff]
    %v3378 = vld [vmem:[#allocation7 + $0x860] sm:$0xff]
    %v3379 = vld [vmem:[#allocation7 + $0x868] sm:$0xff]
    %v3380 = vld [vmem:[#allocation7 + $0x870] sm:$0xff]
    %v3381 = vld [vmem:[#allocation7 + $0x878] sm:$0xff]
    %v3382 = vld [vmem:[#allocation7 + $0x880] sm:$0xff]
    %v3383 = vld [vmem:[#allocation7 + $0x888] sm:$0xff]
    %v3384 = vld [vmem:[#allocation7 + $0x890] sm:$0xff]
    %v3385 = vld [vmem:[#allocation7 + $0x898] sm:$0xff]
    %v3386 = vld [vmem:[#allocation7 + $0x8a0] sm:$0xff]
    %v3387 = vld [vmem:[#allocation7 + $0x8a8] sm:$0xff]
    %v3388 = vld [vmem:[#allocation7 + $0x8b0] sm:$0xff]
    %v3389 = vld [vmem:[#allocation7 + $0x8b8] sm:$0xff]
    %v3390 = vld [vmem:[#allocation7 + $0x8c0] sm:$0xff]
    %v3391 = vld [vmem:[#allocation7 + $0x8c8] sm:$0xff]
    %v3392 = vld [vmem:[#allocation7 + $0x8d0] sm:$0xff]
    %v3393 = vld [vmem:[#allocation7 + $0x8d8] sm:$0xff]
    %v3394 = vld [vmem:[#allocation7 + $0x8e0] sm:$0xff]
    %v3395 = vld [vmem:[#allocation7 + $0x8e8] sm:$0xff]
    %v3396 = vld [vmem:[#allocation7 + $0x8f0] sm:$0xff]
    %v3397 = vld [vmem:[#allocation7 + $0x8f8] sm:$0xff]
    %v3398 = vld [vmem:[#allocation7 + $0x900] sm:$0xff]
    %v3399 = vld [vmem:[#allocation7 + $0x908] sm:$0xff]
    %v3400 = vld [vmem:[#allocation7 + $0x910] sm:$0xff]
    %v3401 = vld [vmem:[#allocation7 + $0x918] sm:$0xff]
    %v3402 = vld [vmem:[#allocation7 + $0x920] sm:$0xff]
    %v3403 = vld [vmem:[#allocation7 + $0x928] sm:$0xff]
    %v3404 = vld [vmem:[#allocation7 + $0x930] sm:$0xff]
    %v3405 = vld [vmem:[#allocation7 + $0x938] sm:$0xff]
    %v3406 = vld [vmem:[#allocation7 + $0x940] sm:$0xff]
    %v3407 = vld [vmem:[#allocation7 + $0x948] sm:$0xff]
    %v3408 = vld [vmem:[#allocation7 + $0x950] sm:$0xff]
    %v3409 = vld [vmem:[#allocation7 + $0x958] sm:$0xff]
    %v3410 = vld [vmem:[#allocation7 + $0x960] sm:$0xff]
    %v3411 = vld [vmem:[#allocation7 + $0x968] sm:$0xff]
    %v3412 = vld [vmem:[#allocation7 + $0x970] sm:$0xff]
    %v3413 = vld [vmem:[#allocation7 + $0x978] sm:$0xff]
    %v3414 = vld [vmem:[#allocation7 + $0x980] sm:$0xff]
    %v3415 = vld [vmem:[#allocation7 + $0x988] sm:$0xff]
    %v3416 = vld [vmem:[#allocation7 + $0x990] sm:$0xff]
    %v3417 = vld [vmem:[#allocation7 + $0x998] sm:$0xff]
    %v3418 = vld [vmem:[#allocation7 + $0x9a0] sm:$0xff]
    %v3419 = vld [vmem:[#allocation7 + $0x9a8] sm:$0xff]
    %v3420 = vld [vmem:[#allocation7 + $0x9b0] sm:$0xff]
    %v3421 = vld [vmem:[#allocation7 + $0x9b8] sm:$0xff]
    %v3422 = vld [vmem:[#allocation7 + $0x9c0] sm:$0xff]
    %v3423 = vld [vmem:[#allocation7 + $0x9c8] sm:$0xff]
    %v3424 = vld [vmem:[#allocation7 + $0x9d0] sm:$0xff]
    %v3425 = vld [vmem:[#allocation7 + $0x9d8] sm:$0xff]
    %v3426 = vld [vmem:[#allocation7 + $0x9e0] sm:$0xff]
    %v3427 = vld [vmem:[#allocation7 + $0x9e8] sm:$0xff]
    %v3428 = vld [vmem:[#allocation7 + $0x9f0] sm:$0xff]
    %v3429 = vld [vmem:[#allocation7 + $0x9f8] sm:$0xff]
    %v3430 = vld [vmem:[#allocation7 + $0xa00] sm:$0xff]
    %v3431 = vld [vmem:[#allocation7 + $0xa08] sm:$0xff]
    %v3432 = vld [vmem:[#allocation7 + $0xa10] sm:$0xff]
    %v3433 = vld [vmem:[#allocation7 + $0xa18] sm:$0xff]
    %v3434 = vld [vmem:[#allocation7 + $0xa20] sm:$0xff]
    %v3435 = vld [vmem:[#allocation7 + $0xa28] sm:$0xff]
    %v3436 = vld [vmem:[#allocation7 + $0xa30] sm:$0xff]
    %v3437 = vld [vmem:[#allocation7 + $0xa38] sm:$0xff]
    %v3438 = vld [vmem:[#allocation7 + $0xa40] sm:$0xff]
    %v3439 = vld [vmem:[#allocation7 + $0xa48] sm:$0xff]
    %v3440 = vld [vmem:[#allocation7 + $0xa50] sm:$0xff]
    %v3441 = vld [vmem:[#allocation7 + $0xa58] sm:$0xff]
    %v3442 = vld [vmem:[#allocation7 + $0xa60] sm:$0xff]
    %v3443 = vld [vmem:[#allocation7 + $0xa68] sm:$0xff]
    %v3444 = vld [vmem:[#allocation7 + $0xa70] sm:$0xff]
    %v3445 = vld [vmem:[#allocation7 + $0xa78] sm:$0xff]
    %v3446 = vld [vmem:[#allocation7 + $0xa80] sm:$0xff]
    %v3447 = vld [vmem:[#allocation7 + $0xa88] sm:$0xff]
    %v3448 = vld [vmem:[#allocation7 + $0xa90] sm:$0xff]
    %v3449 = vld [vmem:[#allocation7 + $0xa98] sm:$0xff]
    %v3450 = vld [vmem:[#allocation7 + $0xaa0] sm:$0xff]
    %v3451 = vld [vmem:[#allocation7 + $0xaa8] sm:$0xff]
    %v3452 = vld [vmem:[#allocation7 + $0xab0] sm:$0xff]
    %v3453 = vld [vmem:[#allocation7 + $0xab8] sm:$0xff]
    %v3454 = vld [vmem:[#allocation7 + $0xac0] sm:$0xff]
    %v3455 = vld [vmem:[#allocation7 + $0xac8] sm:$0xff]
    %v3456 = vld [vmem:[#allocation7 + $0xad0] sm:$0xff]
    %v3457 = vld [vmem:[#allocation7 + $0xad8] sm:$0xff]
    %v3458 = vld [vmem:[#allocation7 + $0xae0] sm:$0xff]
    %v3459 = vld [vmem:[#allocation7 + $0xae8] sm:$0xff]
    %v3460 = vld [vmem:[#allocation7 + $0xaf0] sm:$0xff]
    %v3461 = vld [vmem:[#allocation7 + $0xaf8] sm:$0xff]
    %v3462 = vld [vmem:[#allocation7 + $0xb00] sm:$0xff]
    %v3463 = vld [vmem:[#allocation7 + $0xb08] sm:$0xff]
    %v3464 = vld [vmem:[#allocation7 + $0xb10] sm:$0xff]
    %v3465 = vld [vmem:[#allocation7 + $0xb18] sm:$0xff]
    %v3466 = vld [vmem:[#allocation7 + $0xb20] sm:$0xff]
    %v3467 = vld [vmem:[#allocation7 + $0xb28] sm:$0xff]
    %v3468 = vld [vmem:[#allocation7 + $0xb30] sm:$0xff]
    %v3469 = vld [vmem:[#allocation7 + $0xb38] sm:$0xff]
    %v3470 = vld [vmem:[#allocation7 + $0xb40] sm:$0xff]
    %v3471 = vld [vmem:[#allocation7 + $0xb48] sm:$0xff]
    %v3472 = vld [vmem:[#allocation7 + $0xb50] sm:$0xff]
    %v3473 = vld [vmem:[#allocation7 + $0xb58] sm:$0xff]
    %v3474 = vld [vmem:[#allocation7 + $0xb60] sm:$0xff]
    %v3475 = vld [vmem:[#allocation7 + $0xb68] sm:$0xff]
    %v3476 = vld [vmem:[#allocation7 + $0xb70] sm:$0xff]
    %v3477 = vld [vmem:[#allocation7 + $0xb78] sm:$0xff]
    %v3478 = vld [vmem:[#allocation7 + $0xb80] sm:$0xff]
    %v3479 = vld [vmem:[#allocation7 + $0xb88] sm:$0xff]
    %v3480 = vld [vmem:[#allocation7 + $0xb90] sm:$0xff]
    %v3481 = vld [vmem:[#allocation7 + $0xb98] sm:$0xff]
    %v3482 = vld [vmem:[#allocation7 + $0xba0] sm:$0xff]
    %v3483 = vld [vmem:[#allocation7 + $0xba8] sm:$0xff]
    %v3484 = vld [vmem:[#allocation7 + $0xbb0] sm:$0xff]
    %v3485 = vld [vmem:[#allocation7 + $0xbb8] sm:$0xff]
    %v3486 = vld [vmem:[#allocation7 + $0xbc0] sm:$0xff]
    %v3487 = vld [vmem:[#allocation7 + $0xbc8] sm:$0xff]
    %v3488 = vld [vmem:[#allocation7 + $0xbd0] sm:$0xff]
    %v3489 = vld [vmem:[#allocation7 + $0xbd8] sm:$0xff]
    %v3490 = vld [vmem:[#allocation7 + $0xbe0] sm:$0xff]
    %v3491 = vld [vmem:[#allocation7 + $0xbe8] sm:$0xff]
    %v3492 = vld [vmem:[#allocation7 + $0xbf0] sm:$0xff]
    %v3493 = vld [vmem:[#allocation7 + $0xbf8] sm:$0xff]
    %v3494 = vld [vmem:[#allocation7 + $0xc00] sm:$0xff]
    %v3495 = vld [vmem:[#allocation7 + $0xc08] sm:$0xff]
    %v3496 = vld [vmem:[#allocation7 + $0xc10] sm:$0xff]
    %v3497 = vld [vmem:[#allocation7 + $0xc18] sm:$0xff]
    %v3498 = vld [vmem:[#allocation7 + $0xc20] sm:$0xff]
    %v3499 = vld [vmem:[#allocation7 + $0xc28] sm:$0xff]
    %v3500 = vld [vmem:[#allocation7 + $0xc30] sm:$0xff]
    %v3501 = vld [vmem:[#allocation7 + $0xc38] sm:$0xff]
    %v3502 = vld [vmem:[#allocation7 + $0xc40] sm:$0xff]
    %v3503 = vld [vmem:[#allocation7 + $0xc48] sm:$0xff]
    %v3504 = vld [vmem:[#allocation7 + $0xc50] sm:$0xff]
    %v3505 = vld [vmem:[#allocation7 + $0xc58] sm:$0xff]
    %v3506 = vld [vmem:[#allocation7 + $0xc60] sm:$0xff]
    %v3507 = vld [vmem:[#allocation7 + $0xc68] sm:$0xff]
    %v3508 = vld [vmem:[#allocation7 + $0xc70] sm:$0xff]
    %v3509 = vld [vmem:[#allocation7 + $0xc78] sm:$0xff]
    %v3510 = vld [vmem:[#allocation7 + $0xc80] sm:$0xff]
    %v3511 = vld [vmem:[#allocation7 + $0xc88] sm:$0xff]
    %v3512 = vld [vmem:[#allocation7 + $0xc90] sm:$0xff]
    %v3513 = vld [vmem:[#allocation7 + $0xc98] sm:$0xff]
    %v3514 = vld [vmem:[#allocation7 + $0xca0] sm:$0xff]
    %v3515 = vld [vmem:[#allocation7 + $0xca8] sm:$0xff]
    %v3516 = vld [vmem:[#allocation7 + $0xcb0] sm:$0xff]
    %v3517 = vld [vmem:[#allocation7 + $0xcb8] sm:$0xff]
    %v3518 = vld [vmem:[#allocation7 + $0xcc0] sm:$0xff]
    %v3519 = vld [vmem:[#allocation7 + $0xcc8] sm:$0xff]
    %v3520 = vld [vmem:[#allocation7 + $0xcd0] sm:$0xff]
    %v3521 = vld [vmem:[#allocation7 + $0xcd8] sm:$0xff]
    %v3522 = vld [vmem:[#allocation7 + $0xce0] sm:$0xff]
    %v3523 = vld [vmem:[#allocation7 + $0xce8] sm:$0xff]
    %v3524 = vld [vmem:[#allocation7 + $0xcf0] sm:$0xff]
    %v3525 = vld [vmem:[#allocation7 + $0xcf8] sm:$0xff]
    %v3526 = vld [vmem:[#allocation7 + $0xd00] sm:$0xff]
    %v3527 = vld [vmem:[#allocation7 + $0xd08] sm:$0xff]
    %v3528 = vld [vmem:[#allocation7 + $0xd10] sm:$0xff]
    %v3529 = vld [vmem:[#allocation7 + $0xd18] sm:$0xff]
    %v3530 = vld [vmem:[#allocation7 + $0xd20] sm:$0xff]
    %v3531 = vld [vmem:[#allocation7 + $0xd28] sm:$0xff]
    %v3532 = vld [vmem:[#allocation7 + $0xd30] sm:$0xff]
    %v3533 = vld [vmem:[#allocation7 + $0xd38] sm:$0xff]
    %v3534 = vld [vmem:[#allocation7 + $0xd40] sm:$0xff]
    %v3535 = vld [vmem:[#allocation7 + $0xd48] sm:$0xff]
    %v3536 = vld [vmem:[#allocation7 + $0xd50] sm:$0xff]
    %v3537 = vld [vmem:[#allocation7 + $0xd58] sm:$0xff]
    %v3538 = vld [vmem:[#allocation7 + $0xd60] sm:$0xff]
    %v3539 = vld [vmem:[#allocation7 + $0xd68] sm:$0xff]
    %v3540 = vld [vmem:[#allocation7 + $0xd70] sm:$0xff]
    %v3541 = vld [vmem:[#allocation7 + $0xd78] sm:$0xff]
    %v3542 = vld [vmem:[#allocation7 + $0xd80] sm:$0xff]
    %v3543 = vld [vmem:[#allocation7 + $0xd88] sm:$0xff]
    %v3544 = vld [vmem:[#allocation7 + $0xd90] sm:$0xff]
    %v3545 = vld [vmem:[#allocation7 + $0xd98] sm:$0xff]
    %v3546 = vld [vmem:[#allocation7 + $0xda0] sm:$0xff]
    %v3547 = vld [vmem:[#allocation7 + $0xda8] sm:$0xff]
    %v3548 = vld [vmem:[#allocation7 + $0xdb0] sm:$0xff]
    %v3549 = vld [vmem:[#allocation7 + $0xdb8] sm:$0xff]
    %v3550 = vld [vmem:[#allocation7 + $0xdc0] sm:$0xff]
    %v3551 = vld [vmem:[#allocation7 + $0xdc8] sm:$0xff]
    %v3552 = vld [vmem:[#allocation7 + $0xdd0] sm:$0xff]
    %v3553 = vld [vmem:[#allocation7 + $0xdd8] sm:$0xff]
    %v3554 = vld [vmem:[#allocation7 + $0xde0] sm:$0xff]
    %v3555 = vld [vmem:[#allocation7 + $0xde8] sm:$0xff]
    %v3556 = vld [vmem:[#allocation7 + $0xdf0] sm:$0xff]
    %v3557 = vld [vmem:[#allocation7 + $0xdf8] sm:$0xff]
    %v3558 = vld [vmem:[#allocation7 + $0xe00] sm:$0xff]
    %v3559 = vld [vmem:[#allocation7 + $0xe08] sm:$0xff]
    %v3560 = vld [vmem:[#allocation7 + $0xe10] sm:$0xff]
    %v3561 = vld [vmem:[#allocation7 + $0xe18] sm:$0xff]
    %v3562 = vld [vmem:[#allocation7 + $0xe20] sm:$0xff]
    %v3563 = vld [vmem:[#allocation7 + $0xe28] sm:$0xff]
    %v3564 = vld [vmem:[#allocation7 + $0xe30] sm:$0xff]
    %v3565 = vld [vmem:[#allocation7 + $0xe38] sm:$0xff]
    %v3566 = vld [vmem:[#allocation7 + $0xe40] sm:$0xff]
    %v3567 = vld [vmem:[#allocation7 + $0xe48] sm:$0xff]
    %v3568 = vld [vmem:[#allocation7 + $0xe50] sm:$0xff]
    %v3569 = vld [vmem:[#allocation7 + $0xe58] sm:$0xff]
    %v3570 = vld [vmem:[#allocation7 + $0xe60] sm:$0xff]
    %v3571 = vld [vmem:[#allocation7 + $0xe68] sm:$0xff]
    %v3572 = vld [vmem:[#allocation7 + $0xe70] sm:$0xff]
    %v3573 = vld [vmem:[#allocation7 + $0xe78] sm:$0xff]
    %v3574 = vld [vmem:[#allocation7 + $0xe80] sm:$0xff]
    %v3575 = vld [vmem:[#allocation7 + $0xe88] sm:$0xff]
    %v3576 = vld [vmem:[#allocation7 + $0xe90] sm:$0xff]
    %v3577 = vld [vmem:[#allocation7 + $0xe98] sm:$0xff]
    %v3578 = vld [vmem:[#allocation7 + $0xea0] sm:$0xff]
    %v3579 = vld [vmem:[#allocation7 + $0xea8] sm:$0xff]
    %v3580 = vld [vmem:[#allocation7 + $0xeb0] sm:$0xff]
    %v3581 = vld [vmem:[#allocation7 + $0xeb8] sm:$0xff]
    %v3582 = vld [vmem:[#allocation7 + $0xec0] sm:$0xff]
    %v3583 = vld [vmem:[#allocation7 + $0xec8] sm:$0xff]
    %v3584 = vld [vmem:[#allocation7 + $0xed0] sm:$0xff]
    %v3585 = vld [vmem:[#allocation7 + $0xed8] sm:$0xff]
    %v3586 = vld [vmem:[#allocation7 + $0xee0] sm:$0xff]
    %v3587 = vld [vmem:[#allocation7 + $0xee8] sm:$0xff]
    %v3588 = vld [vmem:[#allocation7 + $0xef0] sm:$0xff]
    %v3589 = vld [vmem:[#allocation7 + $0xef8] sm:$0xff]
    %v3590 = vld [vmem:[#allocation7 + $0xf00] sm:$0xff]
    %v3591 = vld [vmem:[#allocation7 + $0xf08] sm:$0xff]
    %v3592 = vld [vmem:[#allocation7 + $0xf10] sm:$0xff]
    %v3593 = vld [vmem:[#allocation7 + $0xf18] sm:$0xff]
    %v3594 = vld [vmem:[#allocation7 + $0xf20] sm:$0xff]
    %v3595 = vld [vmem:[#allocation7 + $0xf28] sm:$0xff]
    %v3596 = vld [vmem:[#allocation7 + $0xf30] sm:$0xff]
    %v3597 = vld [vmem:[#allocation7 + $0xf38] sm:$0xff]
    %v3598 = vld [vmem:[#allocation7 + $0xf40] sm:$0xff]
    %v3599 = vld [vmem:[#allocation7 + $0xf48] sm:$0xff]
    %v3600 = vld [vmem:[#allocation7 + $0xf50] sm:$0xff]
    %v3601 = vld [vmem:[#allocation7 + $0xf58] sm:$0xff]
    %v3602 = vld [vmem:[#allocation7 + $0xf60] sm:$0xff]
    %v3603 = vld [vmem:[#allocation7 + $0xf68] sm:$0xff]
    %v3604 = vld [vmem:[#allocation7 + $0xf70] sm:$0xff]
    %v3605 = vld [vmem:[#allocation7 + $0xf78] sm:$0xff]
    %v3606 = vld [vmem:[#allocation7 + $0xf80] sm:$0xff]
    %v3607 = vld [vmem:[#allocation7 + $0xf88] sm:$0xff]
    %v3608 = vld [vmem:[#allocation7 + $0xf90] sm:$0xff]
    %v3609 = vld [vmem:[#allocation7 + $0xf98] sm:$0xff]
    %v3610 = vld [vmem:[#allocation7 + $0xfa0] sm:$0xff]
    %v3611 = vld [vmem:[#allocation7 + $0xfa8] sm:$0xff]
    %v3612 = vld [vmem:[#allocation7 + $0xfb0] sm:$0xff]
    %v3613 = vld [vmem:[#allocation7 + $0xfb8] sm:$0xff]
    %v3614 = vld [vmem:[#allocation7 + $0xfc0] sm:$0xff]
    %v3615 = vld [vmem:[#allocation7 + $0xfc8] sm:$0xff]
    %v3616 = vld [vmem:[#allocation7 + $0xfd0] sm:$0xff]
    %v3617 = vld [vmem:[#allocation7 + $0xfd8] sm:$0xff]
    %v3618 = vld [vmem:[#allocation7 + $0xfe0] sm:$0xff]
    %v3619 = vld [vmem:[#allocation7 + $0xfe8] sm:$0xff]
    %v3620 = vld [vmem:[#allocation7 + $0xff0] sm:$0xff]
    %v3621 = vld [vmem:[#allocation7 + $0xff8] sm:$0xff]
    %v3622 = vld [vmem:[%s1 + $0x29] sm:$0xf]
    %v3623 = vpack.c.bf16 %v3056, %v3056
    %v3624 = vpack.c.bf16 %v3057, %v3057
    %v3625 = vpack.c.bf16 %v3058, %v3058
    %v3626 = vpack.c.bf16 %v3059, %v3059
    %v3627 = vpack.c.bf16 %v3060, %v3060
    %v3628 = vpack.c.bf16 %v3061, %v3061
    %v3629 = vpack.c.bf16 %v3062, %v3062
    %v3630 = vpack.c.bf16 %v3063, %v3063
    %v3631 = vpack.c.bf16 %v3064, %v3064
    %v3632 = vpack.c.bf16 %v3065, %v3065
    %v3633 = vpack.c.bf16 %v3066, %v3066
    %v3634 = vpack.c.bf16 %v3067, %v3067
    %v3635 = vpack.c.bf16 %v3068, %v3068
    %v3636 = vpack.c.bf16 %v3069, %v3069
    %v3637 = vpack.c.bf16 %v3070, %v3070
    %v3638 = vpack.c.bf16 %v3071, %v3071
    %v3640 = vlaneseq
    %v3641 = vshrl.u32 %v3640, 7
    %v3642 = vsub.s32 0, %v3641
    %v3643 = vrot.slane %v3622, %v3642
    %v3644 = vlaneseq
    %v3645 = vshrl.u32 %v3644, 7
    %v3646 = vsub.s32 1, %v3645
    %v3647 = vrot.slane %v3622, %v3646
    %v3648 = vlaneseq
    %v3649 = vshrl.u32 %v3648, 7
    %v3650 = vsub.s32 2, %v3649
    %v3651 = vrot.slane %v3622, %v3650
    %v3652 = vlaneseq
    %v3653 = vshrl.u32 %v3652, 7
    %v3654 = vsub.s32 3, %v3653
    %v3655 = vrot.slane %v3622, %v3654
    %3660 = vmatprep.subr.bf16.mxu0 %v3111
    %3661 = vmatpush1.bf16.msra.mxu0 %v3110
    %3662 = vmatprep.subr.bf16.mxu0 %v3115
    %3663 = vmatpush1.bf16.msra.mxu0 %v3114
    %3664 = vmatprep.subr.bf16.mxu0 %v3119
    %3665 = vmatpush1.bf16.msra.mxu0 %v3118
    %3666 = vmatprep.subr.bf16.mxu0 %v3123
    %3667 = vmatpush1.bf16.msra.mxu0 %v3122
    %3668 = vmatprep.subr.bf16.mxu0 %v3127
    %3669 = vmatpush1.bf16.msra.mxu0 %v3126
    %3670 = vmatprep.subr.bf16.mxu0 %v3131
    %3671 = vmatpush1.bf16.msra.mxu0 %v3130
    %3672 = vmatprep.subr.bf16.mxu0 %v3135
    %3673 = vmatpush1.bf16.msra.mxu0 %v3134
    %3674 = vmatprep.subr.bf16.mxu0 %v3139
    %3675 = vmatpush1.bf16.msra.mxu0 %v3138
    %3676 = vmatprep.subr.bf16.mxu0 %v3143
    %3677 = vmatpush1.bf16.msra.mxu0 %v3142
    %3678 = vmatprep.subr.bf16.mxu0 %v3147
    %3679 = vmatpush1.bf16.msra.mxu0 %v3146
    %3680 = vmatprep.subr.bf16.mxu0 %v3151
    %3681 = vmatpush1.bf16.msra.mxu0 %v3150
    %3682 = vmatprep.subr.bf16.mxu0 %v3155
    %3683 = vmatpush1.bf16.msra.mxu0 %v3154
    %3684 = vmatprep.subr.bf16.mxu0 %v3159
    %3685 = vmatpush1.bf16.msra.mxu0 %v3158
    %3686 = vmatprep.subr.bf16.mxu0 %v3163
    %3687 = vmatpush1.bf16.msra.mxu0 %v3162
    %3688 = vmatprep.subr.bf16.mxu0 %v3167
    %3689 = vmatpush1.bf16.msra.mxu0 %v3166
    %3690 = vmatprep.subr.bf16.mxu0 %v3171
    %3691 = vmatpush1.bf16.msra.mxu0 %v3170
    %3692 = vmatprep.mubr.bf16.mxu0 %v3624
    %3693 = vmatmul.mubr.bf16.gmra.mrb[0].mxu0 %v3623
    %v3694 = vpop.f32.mrb[0].mxu0
    %v3695 = vadd.f32 %v3643, %v3694
    %v3696 = vpop.f32.mrb[0].mxu0
    %v3697 = vadd.f32 %v3647, %v3696
    %v3698 = vpop.f32.mrb[0].mxu0
    %v3699 = vpop.f32.mrb[0].mxu0
    %3700 = vdwg.mxu0
    %3701 = vmatprep.subr.bf16.mxu0 %v3175
    %3702 = vmatpush1.bf16.msra.mxu0 %v3174
    %3703 = vmatprep.subr.bf16.mxu0 %v3179
    %3704 = vmatpush1.bf16.msra.mxu0 %v3178
    %3705 = vmatprep.subr.bf16.mxu0 %v3183
    %3706 = vmatpush1.bf16.msra.mxu0 %v3182
    %3707 = vmatprep.subr.bf16.mxu0 %v3187
    %3708 = vmatpush1.bf16.msra.mxu0 %v3186
    %3709 = vmatprep.subr.bf16.mxu0 %v3191
    %3710 = vmatpush1.bf16.msra.mxu0 %v3190
    %3711 = vmatprep.subr.bf16.mxu0 %v3195
    %3712 = vmatpush1.bf16.msra.mxu0 %v3194
    %3713 = vmatprep.subr.bf16.mxu0 %v3199
    %3714 = vmatpush1.bf16.msra.mxu0 %v3198
    %3715 = vmatprep.subr.bf16.mxu0 %v3203
    %3716 = vmatpush1.bf16.msra.mxu0 %v3202
    %3717 = vmatprep.subr.bf16.mxu0 %v3207
    %3718 = vmatpush1.bf16.msra.mxu0 %v3206
    %3719 = vmatprep.subr.bf16.mxu0 %v3211
    %3720 = vmatpush1.bf16.msra.mxu0 %v3210
    %3721 = vmatprep.subr.bf16.mxu0 %v3215
    %3722 = vmatpush1.bf16.msra.mxu0 %v3214
    %3723 = vmatprep.subr.bf16.mxu0 %v3219
    %3724 = vmatpush1.bf16.msra.mxu0 %v3218
    %3725 = vmatprep.subr.bf16.mxu0 %v3223
    %3726 = vmatpush1.bf16.msra.mxu0 %v3222
    %3727 = vmatprep.subr.bf16.mxu0 %v3227
    %3728 = vmatpush1.bf16.msra.mxu0 %v3226
    %3729 = vmatprep.subr.bf16.mxu0 %v3231
    %3730 = vmatpush1.bf16.msra.mxu0 %v3230
    %3731 = vmatprep.subr.bf16.mxu0 %v3235
    %3732 = vmatpush1.bf16.msra.mxu0 %v3234
    %3733 = vmatprep.mubr.bf16.mxu0 %v3626
    %3734 = vmatmul.mubr.bf16.gmra.mrb[0].mxu0 %v3625
    %v3735 = vpop.f32.mrb[0].mxu0
    %v3736 = vadd.f32 %v3695, %v3735
    %v3737 = vpop.f32.mrb[0].mxu0
    %v3738 = vadd.f32 %v3697, %v3737
    %v3739 = vpop.f32.mrb[0].mxu0
    %v3740 = vpop.f32.mrb[0].mxu0
    %3741 = vdwg.mxu0
    %3742 = vmatprep.subr.bf16.mxu0 %v3239
    %3743 = vmatpush1.bf16.msra.mxu0 %v3238
    %3744 = vmatprep.subr.bf16.mxu0 %v3243
    %3745 = vmatpush1.bf16.msra.mxu0 %v3242
    %3746 = vmatprep.subr.bf16.mxu0 %v3247
    %3747 = vmatpush1.bf16.msra.mxu0 %v3246
    %3748 = vmatprep.subr.bf16.mxu0 %v3251
    %3749 = vmatpush1.bf16.msra.mxu0 %v3250
    %3750 = vmatprep.subr.bf16.mxu0 %v3255
    %3751 = vmatpush1.bf16.msra.mxu0 %v3254
    %3752 = vmatprep.subr.bf16.mxu0 %v3259
    %3753 = vmatpush1.bf16.msra.mxu0 %v3258
    %3754 = vmatprep.subr.bf16.mxu0 %v3263
    %3755 = vmatpush1.bf16.msra.mxu0 %v3262
    %3756 = vmatprep.subr.bf16.mxu0 %v3267
    %3757 = vmatpush1.bf16.msra.mxu0 %v3266
    %3758 = vmatprep.subr.bf16.mxu0 %v3271
    %3759 = vmatpush1.bf16.msra.mxu0 %v3270
    %3760 = vmatprep.subr.bf16.mxu0 %v3275
    %3761 = vmatpush1.bf16.msra.mxu0 %v3274
    %3762 = vmatprep.subr.bf16.mxu0 %v3279
    %3763 = vmatpush1.bf16.msra.mxu0 %v3278
    %3764 = vmatprep.subr.bf16.mxu0 %v3283
    %3765 = vmatpush1.bf16.msra.mxu0 %v3282
    %3766 = vmatprep.subr.bf16.mxu0 %v3287
    %3767 = vmatpush1.bf16.msra.mxu0 %v3286
    %3768 = vmatprep.subr.bf16.mxu0 %v3291
    %3769 = vmatpush1.bf16.msra.mxu0 %v3290
    %3770 = vmatprep.subr.bf16.mxu0 %v3295
    %3771 = vmatpush1.bf16.msra.mxu0 %v3294
    %3772 = vmatprep.subr.bf16.mxu0 %v3299
    %3773 = vmatpush1.bf16.msra.mxu0 %v3298
    %3774 = vmatprep.mubr.bf16.mxu0 %v3628
    %3775 = vmatmul.mubr.bf16.gmra.mrb[0].mxu0 %v3627
    %v3776 = vpop.f32.mrb[0].mxu0
    %v3777 = vadd.f32 %v3736, %v3776
    %v3778 = vpop.f32.mrb[0].mxu0
    %v3779 = vadd.f32 %v3738, %v3778
    %v3780 = vpop.f32.mrb[0].mxu0
    %v3781 = vpop.f32.mrb[0].mxu0
    %3782 = vdwg.mxu0
    %3783 = vmatprep.subr.bf16.mxu0 %v3303
    %3784 = vmatpush1.bf16.msra.mxu0 %v3302
    %3785 = vmatprep.subr.bf16.mxu0 %v3307
    %3786 = vmatpush1.bf16.msra.mxu0 %v3306
    %3787 = vmatprep.subr.bf16.mxu0 %v3311
    %3788 = vmatpush1.bf16.msra.mxu0 %v3310
    %3789 = vmatprep.subr.bf16.mxu0 %v3315
    %3790 = vmatpush1.bf16.msra.mxu0 %v3314
    %3791 = vmatprep.subr.bf16.mxu0 %v3319
    %3792 = vmatpush1.bf16.msra.mxu0 %v3318
    %3793 = vmatprep.subr.bf16.mxu0 %v3323
    %3794 = vmatpush1.bf16.msra.mxu0 %v3322
    %3795 = vmatprep.subr.bf16.mxu0 %v3327
    %3796 = vmatpush1.bf16.msra.mxu0 %v3326
    %3797 = vmatprep.subr.bf16.mxu0 %v3331
    %3798 = vmatpush1.bf16.msra.mxu0 %v3330
    %3799 = vmatprep.subr.bf16.mxu0 %v3335
    %3800 = vmatpush1.bf16.msra.mxu0 %v3334
    %3801 = vmatprep.subr.bf16.mxu0 %v3339
    %3802 = vmatpush1.bf16.msra.mxu0 %v3338
    %3803 = vmatprep.subr.bf16.mxu0 %v3343
    %3804 = vmatpush1.bf16.msra.mxu0 %v3342
    %3805 = vmatprep.subr.bf16.mxu0 %v3347
    %3806 = vmatpush1.bf16.msra.mxu0 %v3346
    %3807 = vmatprep.subr.bf16.mxu0 %v3351
    %3808 = vmatpush1.bf16.msra.mxu0 %v3350
    %3809 = vmatprep.subr.bf16.mxu0 %v3355
    %3810 = vmatpush1.bf16.msra.mxu0 %v3354
    %3811 = vmatprep.subr.bf16.mxu0 %v3359
    %3812 = vmatpush1.bf16.msra.mxu0 %v3358
    %3813 = vmatprep.subr.bf16.mxu0 %v3363
    %3814 = vmatpush1.bf16.msra.mxu0 %v3362
    %3815 = vmatprep.mubr.bf16.mxu0 %v3630
    %3816 = vmatmul.mubr.bf16.gmra.mrb[0].mxu0 %v3629
    %v3817 = vpop.f32.mrb[0].mxu0
    %v3818 = vadd.f32 %v3777, %v3817
    %v3819 = vpop.f32.mrb[0].mxu0
    %v3820 = vadd.f32 %v3779, %v3819
    %v3821 = vpop.f32.mrb[0].mxu0
    %v3822 = vpop.f32.mrb[0].mxu0
    %3823 = vdwg.mxu0
    %3824 = vmatprep.subr.bf16.mxu0 %v3367
    %3825 = vmatpush1.bf16.msra.mxu0 %v3366
    %3826 = vmatprep.subr.bf16.mxu0 %v3371
    %3827 = vmatpush1.bf16.msra.mxu0 %v3370
    %3828 = vmatprep.subr.bf16.mxu0 %v3375
    %3829 = vmatpush1.bf16.msra.mxu0 %v3374
    %3830 = vmatprep.subr.bf16.mxu0 %v3379
    %3831 = vmatpush1.bf16.msra.mxu0 %v3378
    %3832 = vmatprep.subr.bf16.mxu0 %v3383
    %3833 = vmatpush1.bf16.msra.mxu0 %v3382
    %3834 = vmatprep.subr.bf16.mxu0 %v3387
    %3835 = vmatpush1.bf16.msra.mxu0 %v3386
    %3836 = vmatprep.subr.bf16.mxu0 %v3391
    %3837 = vmatpush1.bf16.msra.mxu0 %v3390
    %3838 = vmatprep.subr.bf16.mxu0 %v3395
    %3839 = vmatpush1.bf16.msra.mxu0 %v3394
    %3840 = vmatprep.subr.bf16.mxu0 %v3399
    %3841 = vmatpush1.bf16.msra.mxu0 %v3398
    %3842 = vmatprep.subr.bf16.mxu0 %v3403
    %3843 = vmatpush1.bf16.msra.mxu0 %v3402
    %3844 = vmatprep.subr.bf16.mxu0 %v3407
    %3845 = vmatpush1.bf16.msra.mxu0 %v3406
    %3846 = vmatprep.subr.bf16.mxu0 %v3411
    %3847 = vmatpush1.bf16.msra.mxu0 %v3410
    %3848 = vmatprep.subr.bf16.mxu0 %v3415
    %3849 = vmatpush1.bf16.msra.mxu0 %v3414
    %3850 = vmatprep.subr.bf16.mxu0 %v3419
    %3851 = vmatpush1.bf16.msra.mxu0 %v3418
    %3852 = vmatprep.subr.bf16.mxu0 %v3423
    %3853 = vmatpush1.bf16.msra.mxu0 %v3422
    %3854 = vmatprep.subr.bf16.mxu0 %v3427
    %3855 = vmatpush1.bf16.msra.mxu0 %v3426
    %3856 = vmatprep.mubr.bf16.mxu0 %v3632
    %3857 = vmatmul.mubr.bf16.gmra.mrb[0].mxu0 %v3631
    %v3858 = vpop.f32.mrb[0].mxu0
    %v3859 = vadd.f32 %v3818, %v3858
    %v3860 = vpop.f32.mrb[0].mxu0
    %v3861 = vadd.f32 %v3820, %v3860
    %v3862 = vpop.f32.mrb[0].mxu0
    %v3863 = vpop.f32.mrb[0].mxu0
    %3864 = vdwg.mxu0
    %3865 = vmatprep.subr.bf16.mxu0 %v3431
    %3866 = vmatpush1.bf16.msra.mxu0 %v3430
    %3867 = vmatprep.subr.bf16.mxu0 %v3435
    %3868 = vmatpush1.bf16.msra.mxu0 %v3434
    %3869 = vmatprep.subr.bf16.mxu0 %v3439
    %3870 = vmatpush1.bf16.msra.mxu0 %v3438
    %3871 = vmatprep.subr.bf16.mxu0 %v3443
    %3872 = vmatpush1.bf16.msra.mxu0 %v3442
    %3873 = vmatprep.subr.bf16.mxu0 %v3447
    %3874 = vmatpush1.bf16.msra.mxu0 %v3446
    %3875 = vmatprep.subr.bf16.mxu0 %v3451
    %3876 = vmatpush1.bf16.msra.mxu0 %v3450
    %3877 = vmatprep.subr.bf16.mxu0 %v3455
    %3878 = vmatpush1.bf16.msra.mxu0 %v3454
    %3879 = vmatprep.subr.bf16.mxu0 %v3459
    %3880 = vmatpush1.bf16.msra.mxu0 %v3458
    %3881 = vmatprep.subr.bf16.mxu0 %v3463
    %3882 = vmatpush1.bf16.msra.mxu0 %v3462
    %3883 = vmatprep.subr.bf16.mxu0 %v3467
    %3884 = vmatpush1.bf16.msra.mxu0 %v3466
    %3885 = vmatprep.subr.bf16.mxu0 %v3471
    %3886 = vmatpush1.bf16.msra.mxu0 %v3470
    %3887 = vmatprep.subr.bf16.mxu0 %v3475
    %3888 = vmatpush1.bf16.msra.mxu0 %v3474
    %3889 = vmatprep.subr.bf16.mxu0 %v3479
    %3890 = vmatpush1.bf16.msra.mxu0 %v3478
    %3891 = vmatprep.subr.bf16.mxu0 %v3483
    %3892 = vmatpush1.bf16.msra.mxu0 %v3482
    %3893 = vmatprep.subr.bf16.mxu0 %v3487
    %3894 = vmatpush1.bf16.msra.mxu0 %v3486
    %3895 = vmatprep.subr.bf16.mxu0 %v3491
    %3896 = vmatpush1.bf16.msra.mxu0 %v3490
    %3897 = vmatprep.mubr.bf16.mxu0 %v3634
    %3898 = vmatmul.mubr.bf16.gmra.mrb[0].mxu0 %v3633
    %v3899 = vpop.f32.mrb[0].mxu0
    %v3900 = vadd.f32 %v3859, %v3899
    %v3901 = vpop.f32.mrb[0].mxu0
    %v3902 = vadd.f32 %v3861, %v3901
    %v3903 = vpop.f32.mrb[0].mxu0
    %v3904 = vpop.f32.mrb[0].mxu0
    %3905 = vdwg.mxu0
    %3906 = vmatprep.subr.bf16.mxu0 %v3495
    %3907 = vmatpush1.bf16.msra.mxu0 %v3494
    %3908 = vmatprep.subr.bf16.mxu0 %v3499
    %3909 = vmatpush1.bf16.msra.mxu0 %v3498
    %3910 = vmatprep.subr.bf16.mxu0 %v3503
    %3911 = vmatpush1.bf16.msra.mxu0 %v3502
    %3912 = vmatprep.subr.bf16.mxu0 %v3507
    %3913 = vmatpush1.bf16.msra.mxu0 %v3506
    %3914 = vmatprep.subr.bf16.mxu0 %v3511
    %3915 = vmatpush1.bf16.msra.mxu0 %v3510
    %3916 = vmatprep.subr.bf16.mxu0 %v3515
    %3917 = vmatpush1.bf16.msra.mxu0 %v3514
    %3918 = vmatprep.subr.bf16.mxu0 %v3519
    %3919 = vmatpush1.bf16.msra.mxu0 %v3518
    %3920 = vmatprep.subr.bf16.mxu0 %v3523
    %3921 = vmatpush1.bf16.msra.mxu0 %v3522
    %3922 = vmatprep.subr.bf16.mxu0 %v3527
    %3923 = vmatpush1.bf16.msra.mxu0 %v3526
    %3924 = vmatprep.subr.bf16.mxu0 %v3531
    %3925 = vmatpush1.bf16.msra.mxu0 %v3530
    %3926 = vmatprep.subr.bf16.mxu0 %v3535
    %3927 = vmatpush1.bf16.msra.mxu0 %v3534
    %3928 = vmatprep.subr.bf16.mxu0 %v3539
    %3929 = vmatpush1.bf16.msra.mxu0 %v3538
    %3930 = vmatprep.subr.bf16.mxu0 %v3543
    %3931 = vmatpush1.bf16.msra.mxu0 %v3542
    %3932 = vmatprep.subr.bf16.mxu0 %v3547
    %3933 = vmatpush1.bf16.msra.mxu0 %v3546
    %3934 = vmatprep.subr.bf16.mxu0 %v3551
    %3935 = vmatpush1.bf16.msra.mxu0 %v3550
    %3936 = vmatprep.subr.bf16.mxu0 %v3555
    %3937 = vmatpush1.bf16.msra.mxu0 %v3554
    %3938 = vmatprep.mubr.bf16.mxu0 %v3636
    %3939 = vmatmul.mubr.bf16.gmra.mrb[0].mxu0 %v3635
    %v3940 = vpop.f32.mrb[0].mxu0
    %v3941 = vadd.f32 %v3900, %v3940
    %v3942 = vpop.f32.mrb[0].mxu0
    %v3943 = vadd.f32 %v3902, %v3942
    %v3944 = vpop.f32.mrb[0].mxu0
    %v3945 = vpop.f32.mrb[0].mxu0
    %3946 = vdwg.mxu0
    %3947 = vmatprep.subr.bf16.mxu0 %v3559
    %3948 = vmatpush1.bf16.msra.mxu0 %v3558
    %3949 = vmatprep.subr.bf16.mxu0 %v3563
    %3950 = vmatpush1.bf16.msra.mxu0 %v3562
    %3951 = vmatprep.subr.bf16.mxu0 %v3567
    %3952 = vmatpush1.bf16.msra.mxu0 %v3566
    %3953 = vmatprep.subr.bf16.mxu0 %v3571
    %3954 = vmatpush1.bf16.msra.mxu0 %v3570
    %3955 = vmatprep.subr.bf16.mxu0 %v3575
    %3956 = vmatpush1.bf16.msra.mxu0 %v3574
    %3957 = vmatprep.subr.bf16.mxu0 %v3579
    %3958 = vmatpush1.bf16.msra.mxu0 %v3578
    %3959 = vmatprep.subr.bf16.mxu0 %v3583
    %3960 = vmatpush1.bf16.msra.mxu0 %v3582
    %3961 = vmatprep.subr.bf16.mxu0 %v3587
    %3962 = vmatpush1.bf16.msra.mxu0 %v3586
    %3963 = vmatprep.subr.bf16.mxu0 %v3591
    %3964 = vmatpush1.bf16.msra.mxu0 %v3590
    %3965 = vmatprep.subr.bf16.mxu0 %v3595
    %3966 = vmatpush1.bf16.msra.mxu0 %v3594
    %3967 = vmatprep.subr.bf16.mxu0 %v3599
    %3968 = vmatpush1.bf16.msra.mxu0 %v3598
    %3969 = vmatprep.subr.bf16.mxu0 %v3603
    %3970 = vmatpush1.bf16.msra.mxu0 %v3602
    %3971 = vmatprep.subr.bf16.mxu0 %v3607
    %3972 = vmatpush1.bf16.msra.mxu0 %v3606
    %3973 = vmatprep.subr.bf16.mxu0 %v3611
    %3974 = vmatpush1.bf16.msra.mxu0 %v3610
    %3975 = vmatprep.subr.bf16.mxu0 %v3615
    %3976 = vmatpush1.bf16.msra.mxu0 %v3614
    %3977 = vmatprep.subr.bf16.mxu0 %v3619
    %3978 = vmatpush1.bf16.msra.mxu0 %v3618
    %3979 = vmatprep.mubr.bf16.mxu0 %v3638
    %3980 = vmatmul.mubr.bf16.gmra.mrb[0].mxu0 %v3637
    %v3981 = vpop.f32.mrb[0].mxu0
    %v3982 = vadd.f32 %v3941, %v3981
    %v3983 = vpop.f32.mrb[0].mxu0
    %v3984 = vadd.f32 %v3943, %v3983
    %v3985 = vpop.f32.mrb[0].mxu0
    %v3986 = vpop.f32.mrb[0].mxu0
    %3987 = vdwg.mxu0
    %3988 = vmatprep.subr.bf16.mxu0 %v3113
    %3989 = vmatpush1.bf16.msra.mxu0 %v3112
    %3990 = vmatprep.subr.bf16.mxu0 %v3117
    %3991 = vmatpush1.bf16.msra.mxu0 %v3116
    %3992 = vmatprep.subr.bf16.mxu0 %v3121
    %3993 = vmatpush1.bf16.msra.mxu0 %v3120
    %3994 = vmatprep.subr.bf16.mxu0 %v3125
    %3995 = vmatpush1.bf16.msra.mxu0 %v3124
    %3996 = vmatprep.subr.bf16.mxu0 %v3129
    %3997 = vmatpush1.bf16.msra.mxu0 %v3128
    %3998 = vmatprep.subr.bf16.mxu0 %v3133
    %3999 = vmatpush1.bf16.msra.mxu0 %v3132
    %4000 = vmatprep.subr.bf16.mxu0 %v3137
    %4001 = vmatpush1.bf16.msra.mxu0 %v3136
    %4002 = vmatprep.subr.bf16.mxu0 %v3141
    %4003 = vmatpush1.bf16.msra.mxu0 %v3140
    %4004 = vmatprep.subr.bf16.mxu0 %v3145
    %4005 = vmatpush1.bf16.msra.mxu0 %v3144
    %4006 = vmatprep.subr.bf16.mxu0 %v3149
    %4007 = vmatpush1.bf16.msra.mxu0 %v3148
    %4008 = vmatprep.subr.bf16.mxu0 %v3153
    %4009 = vmatpush1.bf16.msra.mxu0 %v3152
    %4010 = vmatprep.subr.bf16.mxu0 %v3157
    %4011 = vmatpush1.bf16.msra.mxu0 %v3156
    %4012 = vmatprep.subr.bf16.mxu0 %v3161
    %4013 = vmatpush1.bf16.msra.mxu0 %v3160
    %4014 = vmatprep.subr.bf16.mxu0 %v3165
    %4015 = vmatpush1.bf16.msra.mxu0 %v3164
    %4016 = vmatprep.subr.bf16.mxu0 %v3169
    %4017 = vmatpush1.bf16.msra.mxu0 %v3168
    %4018 = vmatprep.subr.bf16.mxu0 %v3173
    %4019 = vmatpush1.bf16.msra.mxu0 %v3172
    %4020 = vmatprep.mubr.bf16.mxu0 %v3624
    %4021 = vmatmul.mubr.bf16.gmra.mrb[0].mxu0 %v3623
    %v4022 = vpop.f32.mrb[0].mxu0
    %v4023 = vadd.f32 %v3651, %v4022
    %v4024 = vpop.f32.mrb[0].mxu0
    %v4025 = vadd.f32 %v3655, %v4024
    %v4026 = vpop.f32.mrb[0].mxu0
    %v4027 = vpop.f32.mrb[0].mxu0
    %4028 = vdwg.mxu0
    %4029 = vmatprep.subr.bf16.mxu0 %v3177
    %4030 = vmatpush1.bf16.msra.mxu0 %v3176
    %4031 = vmatprep.subr.bf16.mxu0 %v3181
    %4032 = vmatpush1.bf16.msra.mxu0 %v3180
    %4033 = vmatprep.subr.bf16.mxu0 %v3185
    %4034 = vmatpush1.bf16.msra.mxu0 %v3184
    %4035 = vmatprep.subr.bf16.mxu0 %v3189
    %4036 = vmatpush1.bf16.msra.mxu0 %v3188
    %4037 = vmatprep.subr.bf16.mxu0 %v3193
    %4038 = vmatpush1.bf16.msra.mxu0 %v3192
    %4039 = vmatprep.subr.bf16.mxu0 %v3197
    %4040 = vmatpush1.bf16.msra.mxu0 %v3196
    %4041 = vmatprep.subr.bf16.mxu0 %v3201
    %4042 = vmatpush1.bf16.msra.mxu0 %v3200
    %4043 = vmatprep.subr.bf16.mxu0 %v3205
    %4044 = vmatpush1.bf16.msra.mxu0 %v3204
    %4045 = vmatprep.subr.bf16.mxu0 %v3209
    %4046 = vmatpush1.bf16.msra.mxu0 %v3208
    %4047 = vmatprep.subr.bf16.mxu0 %v3213
    %4048 = vmatpush1.bf16.msra.mxu0 %v3212
    %4049 = vmatprep.subr.bf16.mxu0 %v3217
    %4050 = vmatpush1.bf16.msra.mxu0 %v3216
    %4051 = vmatprep.subr.bf16.mxu0 %v3221
    %4052 = vmatpush1.bf16.msra.mxu0 %v3220
    %4053 = vmatprep.subr.bf16.mxu0 %v3225
    %4054 = vmatpush1.bf16.msra.mxu0 %v3224
    %4055 = vmatprep.subr.bf16.mxu0 %v3229
    %4056 = vmatpush1.bf16.msra.mxu0 %v3228
    %4057 = vmatprep.subr.bf16.mxu0 %v3233
    %4058 = vmatpush1.bf16.msra.mxu0 %v3232
    %4059 = vmatprep.subr.bf16.mxu0 %v3237
    %4060 = vmatpush1.bf16.msra.mxu0 %v3236
    %4061 = vmatprep.mubr.bf16.mxu0 %v3626
    %4062 = vmatmul.mubr.bf16.gmra.mrb[0].mxu0 %v3625
    %v4063 = vpop.f32.mrb[0].mxu0
    %v4064 = vadd.f32 %v4023, %v4063
    %v4065 = vpop.f32.mrb[0].mxu0
    %v4066 = vadd.f32 %v4025, %v4065
    %v4067 = vpop.f32.mrb[0].mxu0
    %v4068 = vpop.f32.mrb[0].mxu0
    %4069 = vdwg.mxu0
    %4070 = vmatprep.subr.bf16.mxu0 %v3241
    %4071 = vmatpush1.bf16.msra.mxu0 %v3240
    %4072 = vmatprep.subr.bf16.mxu0 %v3245
    %4073 = vmatpush1.bf16.msra.mxu0 %v3244
    %4074 = vmatprep.subr.bf16.mxu0 %v3249
    %4075 = vmatpush1.bf16.msra.mxu0 %v3248
    %4076 = vmatprep.subr.bf16.mxu0 %v3253
    %4077 = vmatpush1.bf16.msra.mxu0 %v3252
    %4078 = vmatprep.subr.bf16.mxu0 %v3257
    %4079 = vmatpush1.bf16.msra.mxu0 %v3256
    %4080 = vmatprep.subr.bf16.mxu0 %v3261
    %4081 = vmatpush1.bf16.msra.mxu0 %v3260
    %4082 = vmatprep.subr.bf16.mxu0 %v3265
    %4083 = vmatpush1.bf16.msra.mxu0 %v3264
    %4084 = vmatprep.subr.bf16.mxu0 %v3269
    %4085 = vmatpush1.bf16.msra.mxu0 %v3268
    %4086 = vmatprep.subr.bf16.mxu0 %v3273
    %4087 = vmatpush1.bf16.msra.mxu0 %v3272
    %4088 = vmatprep.subr.bf16.mxu0 %v3277
    %4089 = vmatpush1.bf16.msra.mxu0 %v3276
    %4090 = vmatprep.subr.bf16.mxu0 %v3281
    %4091 = vmatpush1.bf16.msra.mxu0 %v3280
    %4092 = vmatprep.subr.bf16.mxu0 %v3285
    %4093 = vmatpush1.bf16.msra.mxu0 %v3284
    %4094 = vmatprep.subr.bf16.mxu0 %v3289
    %4095 = vmatpush1.bf16.msra.mxu0 %v3288
    %4096 = vmatprep.subr.bf16.mxu0 %v3293
    %4097 = vmatpush1.bf16.msra.mxu0 %v3292
    %4098 = vmatprep.subr.bf16.mxu0 %v3297
    %4099 = vmatpush1.bf16.msra.mxu0 %v3296
    %4100 = vmatprep.subr.bf16.mxu0 %v3301
    %4101 = vmatpush1.bf16.msra.mxu0 %v3300
    %4102 = vmatprep.mubr.bf16.mxu0 %v3628
    %4103 = vmatmul.mubr.bf16.gmra.mrb[0].mxu0 %v3627
    %v4104 = vpop.f32.mrb[0].mxu0
    %v4105 = vadd.f32 %v4064, %v4104
    %v4106 = vpop.f32.mrb[0].mxu0
    %v4107 = vadd.f32 %v4066, %v4106
    %v4108 = vpop.f32.mrb[0].mxu0
    %v4109 = vpop.f32.mrb[0].mxu0
    %4110 = vdwg.mxu0
    %4111 = vmatprep.subr.bf16.mxu0 %v3305
    %4112 = vmatpush1.bf16.msra.mxu0 %v3304
    %4113 = vmatprep.subr.bf16.mxu0 %v3309
    %4114 = vmatpush1.bf16.msra.mxu0 %v3308
    %4115 = vmatprep.subr.bf16.mxu0 %v3313
    %4116 = vmatpush1.bf16.msra.mxu0 %v3312
    %4117 = vmatprep.subr.bf16.mxu0 %v3317
    %4118 = vmatpush1.bf16.msra.mxu0 %v3316
    %4119 = vmatprep.subr.bf16.mxu0 %v3321
    %4120 = vmatpush1.bf16.msra.mxu0 %v3320
    %4121 = vmatprep.subr.bf16.mxu0 %v3325
    %4122 = vmatpush1.bf16.msra.mxu0 %v3324
    %4123 = vmatprep.subr.bf16.mxu0 %v3329
    %4124 = vmatpush1.bf16.msra.mxu0 %v3328
    %4125 = vmatprep.subr.bf16.mxu0 %v3333
    %4126 = vmatpush1.bf16.msra.mxu0 %v3332
    %4127 = vmatprep.subr.bf16.mxu0 %v3337
    %4128 = vmatpush1.bf16.msra.mxu0 %v3336
    %4129 = vmatprep.subr.bf16.mxu0 %v3341
    %4130 = vmatpush1.bf16.msra.mxu0 %v3340
    %4131 = vmatprep.subr.bf16.mxu0 %v3345
    %4132 = vmatpush1.bf16.msra.mxu0 %v3344
    %4133 = vmatprep.subr.bf16.mxu0 %v3349
    %4134 = vmatpush1.bf16.msra.mxu0 %v3348
    %4135 = vmatprep.subr.bf16.mxu0 %v3353
    %4136 = vmatpush1.bf16.msra.mxu0 %v3352
    %4137 = vmatprep.subr.bf16.mxu0 %v3357
    %4138 = vmatpush1.bf16.msra.mxu0 %v3356
    %4139 = vmatprep.subr.bf16.mxu0 %v3361
    %4140 = vmatpush1.bf16.msra.mxu0 %v3360
    %4141 = vmatprep.subr.bf16.mxu0 %v3365
    %4142 = vmatpush1.bf16.msra.mxu0 %v3364
    %4143 = vmatprep.mubr.bf16.mxu0 %v3630
    %4144 = vmatmul.mubr.bf16.gmra.mrb[0].mxu0 %v3629
    %v4145 = vpop.f32.mrb[0].mxu0
    %v4146 = vadd.f32 %v4105, %v4145
    %v4147 = vpop.f32.mrb[0].mxu0
    %v4148 = vadd.f32 %v4107, %v4147
    %v4149 = vpop.f32.mrb[0].mxu0
    %v4150 = vpop.f32.mrb[0].mxu0
    %4151 = vdwg.mxu0
    %4152 = vmatprep.subr.bf16.mxu0 %v3369
    %4153 = vmatpush1.bf16.msra.mxu0 %v3368
    %4154 = vmatprep.subr.bf16.mxu0 %v3373
    %4155 = vmatpush1.bf16.msra.mxu0 %v3372
    %4156 = vmatprep.subr.bf16.mxu0 %v3377
    %4157 = vmatpush1.bf16.msra.mxu0 %v3376
    %4158 = vmatprep.subr.bf16.mxu0 %v3381
    %4159 = vmatpush1.bf16.msra.mxu0 %v3380
    %4160 = vmatprep.subr.bf16.mxu0 %v3385
    %4161 = vmatpush1.bf16.msra.mxu0 %v3384
    %4162 = vmatprep.subr.bf16.mxu0 %v3389
    %4163 = vmatpush1.bf16.msra.mxu0 %v3388
    %4164 = vmatprep.subr.bf16.mxu0 %v3393
    %4165 = vmatpush1.bf16.msra.mxu0 %v3392
    %4166 = vmatprep.subr.bf16.mxu0 %v3397
    %4167 = vmatpush1.bf16.msra.mxu0 %v3396
    %4168 = vmatprep.subr.bf16.mxu0 %v3401
    %4169 = vmatpush1.bf16.msra.mxu0 %v3400
    %4170 = vmatprep.subr.bf16.mxu0 %v3405
    %4171 = vmatpush1.bf16.msra.mxu0 %v3404
    %4172 = vmatprep.subr.bf16.mxu0 %v3409
    %4173 = vmatpush1.bf16.msra.mxu0 %v3408
    %4174 = vmatprep.subr.bf16.mxu0 %v3413
    %4175 = vmatpush1.bf16.msra.mxu0 %v3412
    %4176 = vmatprep.subr.bf16.mxu0 %v3417
    %4177 = vmatpush1.bf16.msra.mxu0 %v3416
    %4178 = vmatprep.subr.bf16.mxu0 %v3421
    %4179 = vmatpush1.bf16.msra.mxu0 %v3420
    %4180 = vmatprep.subr.bf16.mxu0 %v3425
    %4181 = vmatpush1.bf16.msra.mxu0 %v3424
    %4182 = vmatprep.subr.bf16.mxu0 %v3429
    %4183 = vmatpush1.bf16.msra.mxu0 %v3428
    %4184 = vmatprep.mubr.bf16.mxu0 %v3632
    %4185 = vmatmul.mubr.bf16.gmra.mrb[0].mxu0 %v3631
    %v4186 = vpop.f32.mrb[0].mxu0
    %v4187 = vadd.f32 %v4146, %v4186
    %v4188 = vpop.f32.mrb[0].mxu0
    %v4189 = vadd.f32 %v4148, %v4188
    %v4190 = vpop.f32.mrb[0].mxu0
    %v4191 = vpop.f32.mrb[0].mxu0
    %4192 = vdwg.mxu0
    %4193 = vmatprep.subr.bf16.mxu0 %v3433
    %4194 = vmatpush1.bf16.msra.mxu0 %v3432
    %4195 = vmatprep.subr.bf16.mxu0 %v3437
    %4196 = vmatpush1.bf16.msra.mxu0 %v3436
    %4197 = vmatprep.subr.bf16.mxu0 %v3441
    %4198 = vmatpush1.bf16.msra.mxu0 %v3440
    %4199 = vmatprep.subr.bf16.mxu0 %v3445
    %4200 = vmatpush1.bf16.msra.mxu0 %v3444
    %4201 = vmatprep.subr.bf16.mxu0 %v3449
    %4202 = vmatpush1.bf16.msra.mxu0 %v3448
    %4203 = vmatprep.subr.bf16.mxu0 %v3453
    %4204 = vmatpush1.bf16.msra.mxu0 %v3452
    %4205 = vmatprep.subr.bf16.mxu0 %v3457
    %4206 = vmatpush1.bf16.msra.mxu0 %v3456
    %4207 = vmatprep.subr.bf16.mxu0 %v3461
    %4208 = vmatpush1.bf16.msra.mxu0 %v3460
    %4209 = vmatprep.subr.bf16.mxu0 %v3465
    %4210 = vmatpush1.bf16.msra.mxu0 %v3464
    %4211 = vmatprep.subr.bf16.mxu0 %v3469
    %4212 = vmatpush1.bf16.msra.mxu0 %v3468
    %4213 = vmatprep.subr.bf16.mxu0 %v3473
    %4214 = vmatpush1.bf16.msra.mxu0 %v3472
    %4215 = vmatprep.subr.bf16.mxu0 %v3477
    %4216 = vmatpush1.bf16.msra.mxu0 %v3476
    %4217 = vmatprep.subr.bf16.mxu0 %v3481
    %4218 = vmatpush1.bf16.msra.mxu0 %v3480
    %4219 = vmatprep.subr.bf16.mxu0 %v3485
    %4220 = vmatpush1.bf16.msra.mxu0 %v3484
    %4221 = vmatprep.subr.bf16.mxu0 %v3489
    %4222 = vmatpush1.bf16.msra.mxu0 %v3488
    %4223 = vmatprep.subr.bf16.mxu0 %v3493
    %4224 = vmatpush1.bf16.msra.mxu0 %v3492
    %4225 = vmatprep.mubr.bf16.mxu0 %v3634
    %4226 = vmatmul.mubr.bf16.gmra.mrb[0].mxu0 %v3633
    %v4227 = vpop.f32.mrb[0].mxu0
    %v4228 = vadd.f32 %v4187, %v4227
    %v4229 = vpop.f32.mrb[0].mxu0
    %v4230 = vadd.f32 %v4189, %v4229
    %v4231 = vpop.f32.mrb[0].mxu0
    %v4232 = vpop.f32.mrb[0].mxu0
    %4233 = vdwg.mxu0
    %4234 = vmatprep.subr.bf16.mxu0 %v3497
    %4235 = vmatpush1.bf16.msra.mxu0 %v3496
    %4236 = vmatprep.subr.bf16.mxu0 %v3501
    %4237 = vmatpush1.bf16.msra.mxu0 %v3500
    %4238 = vmatprep.subr.bf16.mxu0 %v3505
    %4239 = vmatpush1.bf16.msra.mxu0 %v3504
    %4240 = vmatprep.subr.bf16.mxu0 %v3509
    %4241 = vmatpush1.bf16.msra.mxu0 %v3508
    %4242 = vmatprep.subr.bf16.mxu0 %v3513
    %4243 = vmatpush1.bf16.msra.mxu0 %v3512
    %4244 = vmatprep.subr.bf16.mxu0 %v3517
    %4245 = vmatpush1.bf16.msra.mxu0 %v3516
    %4246 = vmatprep.subr.bf16.mxu0 %v3521
    %4247 = vmatpush1.bf16.msra.mxu0 %v3520
    %4248 = vmatprep.subr.bf16.mxu0 %v3525
    %4249 = vmatpush1.bf16.msra.mxu0 %v3524
    %4250 = vmatprep.subr.bf16.mxu0 %v3529
    %4251 = vmatpush1.bf16.msra.mxu0 %v3528
    %4252 = vmatprep.subr.bf16.mxu0 %v3533
    %4253 = vmatpush1.bf16.msra.mxu0 %v3532
    %4254 = vmatprep.subr.bf16.mxu0 %v3537
    %4255 = vmatpush1.bf16.msra.mxu0 %v3536
    %4256 = vmatprep.subr.bf16.mxu0 %v3541
    %4257 = vmatpush1.bf16.msra.mxu0 %v3540
    %4258 = vmatprep.subr.bf16.mxu0 %v3545
    %4259 = vmatpush1.bf16.msra.mxu0 %v3544
    %4260 = vmatprep.subr.bf16.mxu0 %v3549
    %4261 = vmatpush1.bf16.msra.mxu0 %v3548
    %4262 = vmatprep.subr.bf16.mxu0 %v3553
    %4263 = vmatpush1.bf16.msra.mxu0 %v3552
    %4264 = vmatprep.subr.bf16.mxu0 %v3557
    %4265 = vmatpush1.bf16.msra.mxu0 %v3556
    %4266 = vmatprep.mubr.bf16.mxu0 %v3636
    %4267 = vmatmul.mubr.bf16.gmra.mrb[0].mxu0 %v3635
    %v4268 = vpop.f32.mrb[0].mxu0
    %v4269 = vadd.f32 %v4228, %v4268
    %v4270 = vpop.f32.mrb[0].mxu0
    %v4271 = vadd.f32 %v4230, %v4270
    %v4272 = vpop.f32.mrb[0].mxu0
    %v4273 = vpop.f32.mrb[0].mxu0
    %4274 = vdwg.mxu0
    %4275 = vmatprep.subr.bf16.mxu0 %v3561
    %4276 = vmatpush1.bf16.msra.mxu0 %v3560
    %4277 = vmatprep.subr.bf16.mxu0 %v3565
    %4278 = vmatpush1.bf16.msra.mxu0 %v3564
    %4279 = vmatprep.subr.bf16.mxu0 %v3569
    %4280 = vmatpush1.bf16.msra.mxu0 %v3568
    %4281 = vmatprep.subr.bf16.mxu0 %v3573
    %4282 = vmatpush1.bf16.msra.mxu0 %v3572
    %4283 = vmatprep.subr.bf16.mxu0 %v3577
    %4284 = vmatpush1.bf16.msra.mxu0 %v3576
    %4285 = vmatprep.subr.bf16.mxu0 %v3581
    %4286 = vmatpush1.bf16.msra.mxu0 %v3580
    %4287 = vmatprep.subr.bf16.mxu0 %v3585
    %4288 = vmatpush1.bf16.msra.mxu0 %v3584
    %4289 = vmatprep.subr.bf16.mxu0 %v3589
    %4290 = vmatpush1.bf16.msra.mxu0 %v3588
    %4291 = vmatprep.subr.bf16.mxu0 %v3593
    %4292 = vmatpush1.bf16.msra.mxu0 %v3592
    %4293 = vmatprep.subr.bf16.mxu0 %v3597
    %4294 = vmatpush1.bf16.msra.mxu0 %v3596
    %4295 = vmatprep.subr.bf16.mxu0 %v3601
    %4296 = vmatpush1.bf16.msra.mxu0 %v3600
    %4297 = vmatprep.subr.bf16.mxu0 %v3605
    %4298 = vmatpush1.bf16.msra.mxu0 %v3604
    %4299 = vmatprep.subr.bf16.mxu0 %v3609
    %4300 = vmatpush1.bf16.msra.mxu0 %v3608
    %4301 = vmatprep.subr.bf16.mxu0 %v3613
    %4302 = vmatpush1.bf16.msra.mxu0 %v3612
    %4303 = vmatprep.subr.bf16.mxu0 %v3617
    %4304 = vmatpush1.bf16.msra.mxu0 %v3616
    %4305 = vmatprep.subr.bf16.mxu0 %v3621
    %4306 = vmatpush1.bf16.msra.mxu0 %v3620
    %4307 = vmatprep.mubr.bf16.mxu0 %v3638
    %4308 = vmatmul.mubr.bf16.gmra.mrb[0].mxu0 %v3637
    %v4309 = vpop.f32.mrb[0].mxu0
    %v4310 = vadd.f32 %v4269, %v4309
    %v4311 = vpop.f32.mrb[0].mxu0
    %v4312 = vadd.f32 %v4271, %v4311
    %v4313 = vpop.f32.mrb[0].mxu0
    %v4314 = vpop.f32.mrb[0].mxu0
    %4315 = vdwg.mxu0
    %v4316 = vmax.f32 %v3982, 0.0
    %v4317 = vmax.f32 %v3984, 0.0
    %v4318 = vmax.f32 %v4310, 0.0
    %v4319 = vmax.f32 %v4312, 0.0
    %s4320 = sshll.u32 %s319, 4
    %4321 = dma.done %s2480, %s4320
    %v4322 = vld [vmem:[#allocation8] sm:$0xff]
    %v4323 = vld [vmem:[#allocation8 + $0x8] sm:$0xff]
    %v4324 = vld [vmem:[#allocation8 + $0x10] sm:$0xff]
    %v4325 = vld [vmem:[#allocation8 + $0x18] sm:$0xff]
    %v4326 = vld [vmem:[#allocation8 + $0x20] sm:$0xff]
    %v4327 = vld [vmem:[#allocation8 + $0x28] sm:$0xff]
    %v4328 = vld [vmem:[#allocation8 + $0x30] sm:$0xff]
    %v4329 = vld [vmem:[#allocation8 + $0x38] sm:$0xff]
    %v4330 = vld [vmem:[#allocation8 + $0x40] sm:$0xff]
    %v4331 = vld [vmem:[#allocation8 + $0x48] sm:$0xff]
    %v4332 = vld [vmem:[#allocation8 + $0x50] sm:$0xff]
    %v4333 = vld [vmem:[#allocation8 + $0x58] sm:$0xff]
    %v4334 = vld [vmem:[#allocation8 + $0x60] sm:$0xff]
    %v4335 = vld [vmem:[#allocation8 + $0x68] sm:$0xff]
    %v4336 = vld [vmem:[#allocation8 + $0x70] sm:$0xff]
    %v4337 = vld [vmem:[#allocation8 + $0x78] sm:$0xff]
    %v4338 = vld [vmem:[#allocation8 + $0x80] sm:$0xff]
    %v4339 = vld [vmem:[#allocation8 + $0x88] sm:$0xff]
    %v4340 = vld [vmem:[#allocation8 + $0x90] sm:$0xff]
    %v4341 = vld [vmem:[#allocation8 + $0x98] sm:$0xff]
    %v4342 = vld [vmem:[#allocation8 + $0xa0] sm:$0xff]
    %v4343 = vld [vmem:[#allocation8 + $0xa8] sm:$0xff]
    %v4344 = vld [vmem:[#allocation8 + $0xb0] sm:$0xff]
    %v4345 = vld [vmem:[#allocation8 + $0xb8] sm:$0xff]
    %v4346 = vld [vmem:[#allocation8 + $0xc0] sm:$0xff]
    %v4347 = vld [vmem:[#allocation8 + $0xc8] sm:$0xff]
    %v4348 = vld [vmem:[#allocation8 + $0xd0] sm:$0xff]
    %v4349 = vld [vmem:[#allocation8 + $0xd8] sm:$0xff]
    %v4350 = vld [vmem:[#allocation8 + $0xe0] sm:$0xff]
    %v4351 = vld [vmem:[#allocation8 + $0xe8] sm:$0xff]
    %v4352 = vld [vmem:[#allocation8 + $0xf0] sm:$0xff]
    %v4353 = vld [vmem:[#allocation8 + $0xf8] sm:$0xff]
    %v4354 = vld [vmem:[#allocation8 + $0x100] sm:$0xff]
    %v4355 = vld [vmem:[#allocation8 + $0x108] sm:$0xff]
    %v4356 = vld [vmem:[#allocation8 + $0x110] sm:$0xff]
    %v4357 = vld [vmem:[#allocation8 + $0x118] sm:$0xff]
    %v4358 = vld [vmem:[#allocation8 + $0x120] sm:$0xff]
    %v4359 = vld [vmem:[#allocation8 + $0x128] sm:$0xff]
    %v4360 = vld [vmem:[#allocation8 + $0x130] sm:$0xff]
    %v4361 = vld [vmem:[#allocation8 + $0x138] sm:$0xff]
    %v4362 = vld [vmem:[#allocation8 + $0x140] sm:$0xff]
    %v4363 = vld [vmem:[#allocation8 + $0x148] sm:$0xff]
    %v4364 = vld [vmem:[#allocation8 + $0x150] sm:$0xff]
    %v4365 = vld [vmem:[#allocation8 + $0x158] sm:$0xff]
    %v4366 = vld [vmem:[#allocation8 + $0x160] sm:$0xff]
    %v4367 = vld [vmem:[#allocation8 + $0x168] sm:$0xff]
    %v4368 = vld [vmem:[#allocation8 + $0x170] sm:$0xff]
    %v4369 = vld [vmem:[#allocation8 + $0x178] sm:$0xff]
    %v4370 = vld [vmem:[#allocation8 + $0x180] sm:$0xff]
    %v4371 = vld [vmem:[#allocation8 + $0x188] sm:$0xff]
    %v4372 = vld [vmem:[#allocation8 + $0x190] sm:$0xff]
    %v4373 = vld [vmem:[#allocation8 + $0x198] sm:$0xff]
    %v4374 = vld [vmem:[#allocation8 + $0x1a0] sm:$0xff]
    %v4375 = vld [vmem:[#allocation8 + $0x1a8] sm:$0xff]
    %v4376 = vld [vmem:[#allocation8 + $0x1b0] sm:$0xff]
    %v4377 = vld [vmem:[#allocation8 + $0x1b8] sm:$0xff]
    %v4378 = vld [vmem:[#allocation8 + $0x1c0] sm:$0xff]
    %v4379 = vld [vmem:[#allocation8 + $0x1c8] sm:$0xff]
    %v4380 = vld [vmem:[#allocation8 + $0x1d0] sm:$0xff]
    %v4381 = vld [vmem:[#allocation8 + $0x1d8] sm:$0xff]
    %v4382 = vld [vmem:[#allocation8 + $0x1e0] sm:$0xff]
    %v4383 = vld [vmem:[#allocation8 + $0x1e8] sm:$0xff]
    %v4384 = vld [vmem:[#allocation8 + $0x1f0] sm:$0xff]
    %v4385 = vld [vmem:[#allocation8 + $0x1f8] sm:$0xff]
    %v4386 = vld [vmem:[#allocation8 + $0x200] sm:$0xff]
    %v4387 = vld [vmem:[#allocation8 + $0x208] sm:$0xff]
    %v4388 = vld [vmem:[#allocation8 + $0x210] sm:$0xff]
    %v4389 = vld [vmem:[#allocation8 + $0x218] sm:$0xff]
    %v4390 = vld [vmem:[#allocation8 + $0x220] sm:$0xff]
    %v4391 = vld [vmem:[#allocation8 + $0x228] sm:$0xff]
    %v4392 = vld [vmem:[#allocation8 + $0x230] sm:$0xff]
    %v4393 = vld [vmem:[#allocation8 + $0x238] sm:$0xff]
    %v4394 = vld [vmem:[#allocation8 + $0x240] sm:$0xff]
    %v4395 = vld [vmem:[#allocation8 + $0x248] sm:$0xff]
    %v4396 = vld [vmem:[#allocation8 + $0x250] sm:$0xff]
    %v4397 = vld [vmem:[#allocation8 + $0x258] sm:$0xff]
    %v4398 = vld [vmem:[#allocation8 + $0x260] sm:$0xff]
    %v4399 = vld [vmem:[#allocation8 + $0x268] sm:$0xff]
    %v4400 = vld [vmem:[#allocation8 + $0x270] sm:$0xff]
    %v4401 = vld [vmem:[#allocation8 + $0x278] sm:$0xff]
    %v4402 = vld [vmem:[#allocation8 + $0x280] sm:$0xff]
    %v4403 = vld [vmem:[#allocation8 + $0x288] sm:$0xff]
    %v4404 = vld [vmem:[#allocation8 + $0x290] sm:$0xff]
    %v4405 = vld [vmem:[#allocation8 + $0x298] sm:$0xff]
    %v4406 = vld [vmem:[#allocation8 + $0x2a0] sm:$0xff]
    %v4407 = vld [vmem:[#allocation8 + $0x2a8] sm:$0xff]
    %v4408 = vld [vmem:[#allocation8 + $0x2b0] sm:$0xff]
    %v4409 = vld [vmem:[#allocation8 + $0x2b8] sm:$0xff]
    %v4410 = vld [vmem:[#allocation8 + $0x2c0] sm:$0xff]
    %v4411 = vld [vmem:[#allocation8 + $0x2c8] sm:$0xff]
    %v4412 = vld [vmem:[#allocation8 + $0x2d0] sm:$0xff]
    %v4413 = vld [vmem:[#allocation8 + $0x2d8] sm:$0xff]
    %v4414 = vld [vmem:[#allocation8 + $0x2e0] sm:$0xff]
    %v4415 = vld [vmem:[#allocation8 + $0x2e8] sm:$0xff]
    %v4416 = vld [vmem:[#allocation8 + $0x2f0] sm:$0xff]
    %v4417 = vld [vmem:[#allocation8 + $0x2f8] sm:$0xff]
    %v4418 = vld [vmem:[#allocation8 + $0x300] sm:$0xff]
    %v4419 = vld [vmem:[#allocation8 + $0x308] sm:$0xff]
    %v4420 = vld [vmem:[#allocation8 + $0x310] sm:$0xff]
    %v4421 = vld [vmem:[#allocation8 + $0x318] sm:$0xff]
    %v4422 = vld [vmem:[#allocation8 + $0x320] sm:$0xff]
    %v4423 = vld [vmem:[#allocation8 + $0x328] sm:$0xff]
    %v4424 = vld [vmem:[#allocation8 + $0x330] sm:$0xff]
    %v4425 = vld [vmem:[#allocation8 + $0x338] sm:$0xff]
    %v4426 = vld [vmem:[#allocation8 + $0x340] sm:$0xff]
    %v4427 = vld [vmem:[#allocation8 + $0x348] sm:$0xff]
    %v4428 = vld [vmem:[#allocation8 + $0x350] sm:$0xff]
    %v4429 = vld [vmem:[#allocation8 + $0x358] sm:$0xff]
    %v4430 = vld [vmem:[#allocation8 + $0x360] sm:$0xff]
    %v4431 = vld [vmem:[#allocation8 + $0x368] sm:$0xff]
    %v4432 = vld [vmem:[#allocation8 + $0x370] sm:$0xff]
    %v4433 = vld [vmem:[#allocation8 + $0x378] sm:$0xff]
    %v4434 = vld [vmem:[#allocation8 + $0x380] sm:$0xff]
    %v4435 = vld [vmem:[#allocation8 + $0x388] sm:$0xff]
    %v4436 = vld [vmem:[#allocation8 + $0x390] sm:$0xff]
    %v4437 = vld [vmem:[#allocation8 + $0x398] sm:$0xff]
    %v4438 = vld [vmem:[#allocation8 + $0x3a0] sm:$0xff]
    %v4439 = vld [vmem:[#allocation8 + $0x3a8] sm:$0xff]
    %v4440 = vld [vmem:[#allocation8 + $0x3b0] sm:$0xff]
    %v4441 = vld [vmem:[#allocation8 + $0x3b8] sm:$0xff]
    %v4442 = vld [vmem:[#allocation8 + $0x3c0] sm:$0xff]
    %v4443 = vld [vmem:[#allocation8 + $0x3c8] sm:$0xff]
    %v4444 = vld [vmem:[#allocation8 + $0x3d0] sm:$0xff]
    %v4445 = vld [vmem:[#allocation8 + $0x3d8] sm:$0xff]
    %v4446 = vld [vmem:[#allocation8 + $0x3e0] sm:$0xff]
    %v4447 = vld [vmem:[#allocation8 + $0x3e8] sm:$0xff]
    %v4448 = vld [vmem:[#allocation8 + $0x3f0] sm:$0xff]
    %v4449 = vld [vmem:[#allocation8 + $0x3f8] sm:$0xff]
    %v4450 = vld [vmem:[%s1 + $0x2d] sm:$0xf]
    %v4451 = vpack.c.bf16 %v4316, %v4316
    %v4452 = vpack.c.bf16 %v4317, %v4317
    %v4453 = vpack.c.bf16 %v4318, %v4318
    %v4454 = vpack.c.bf16 %v4319, %v4319
    %v4456 = vlaneseq
    %v4457 = vshrl.u32 %v4456, 7
    %v4458 = vsub.s32 0, %v4457
    %v4459 = vrot.slane %v4450, %v4458
    %v4460 = vlaneseq
    %v4461 = vshrl.u32 %v4460, 7
    %v4462 = vsub.s32 1, %v4461
    %v4463 = vrot.slane %v4450, %v4462
    %v4464 = vlaneseq
    %v4465 = vshrl.u32 %v4464, 7
    %v4466 = vsub.s32 2, %v4465
    %v4467 = vrot.slane %v4450, %v4466
    %v4468 = vlaneseq
    %v4469 = vshrl.u32 %v4468, 7
    %v4470 = vsub.s32 3, %v4469
    %v4471 = vrot.slane %v4450, %v4470
    %4476 = vmatprep.subr.bf16.mxu0 %v4323
    %4477 = vmatpush1.bf16.msra.mxu0 %v4322
    %4478 = vmatprep.subr.bf16.mxu0 %v4327
    %4479 = vmatpush1.bf16.msra.mxu0 %v4326
    %4480 = vmatprep.subr.bf16.mxu0 %v4331
    %4481 = vmatpush1.bf16.msra.mxu0 %v4330
    %4482 = vmatprep.subr.bf16.mxu0 %v4335
    %4483 = vmatpush1.bf16.msra.mxu0 %v4334
    %4484 = vmatprep.subr.bf16.mxu0 %v4339
    %4485 = vmatpush1.bf16.msra.mxu0 %v4338
    %4486 = vmatprep.subr.bf16.mxu0 %v4343
    %4487 = vmatpush1.bf16.msra.mxu0 %v4342
    %4488 = vmatprep.subr.bf16.mxu0 %v4347
    %4489 = vmatpush1.bf16.msra.mxu0 %v4346
    %4490 = vmatprep.subr.bf16.mxu0 %v4351
    %4491 = vmatpush1.bf16.msra.mxu0 %v4350
    %4492 = vmatprep.subr.bf16.mxu0 %v4355
    %4493 = vmatpush1.bf16.msra.mxu0 %v4354
    %4494 = vmatprep.subr.bf16.mxu0 %v4359
    %4495 = vmatpush1.bf16.msra.mxu0 %v4358
    %4496 = vmatprep.subr.bf16.mxu0 %v4363
    %4497 = vmatpush1.bf16.msra.mxu0 %v4362
    %4498 = vmatprep.subr.bf16.mxu0 %v4367
    %4499 = vmatpush1.bf16.msra.mxu0 %v4366
    %4500 = vmatprep.subr.bf16.mxu0 %v4371
    %4501 = vmatpush1.bf16.msra.mxu0 %v4370
    %4502 = vmatprep.subr.bf16.mxu0 %v4375
    %4503 = vmatpush1.bf16.msra.mxu0 %v4374
    %4504 = vmatprep.subr.bf16.mxu0 %v4379
    %4505 = vmatpush1.bf16.msra.mxu0 %v4378
    %4506 = vmatprep.subr.bf16.mxu0 %v4383
    %4507 = vmatpush1.bf16.msra.mxu0 %v4382
    %4508 = vmatprep.mubr.bf16.mxu0 %v4452
    %4509 = vmatmul.mubr.bf16.gmra.mrb[0].mxu0 %v4451
    %v4510 = vpop.f32.mrb[0].mxu0
    %v4511 = vadd.f32 %v4459, %v4510
    %v4512 = vpop.f32.mrb[0].mxu0
    %v4513 = vadd.f32 %v4463, %v4512
    %v4514 = vpop.f32.mrb[0].mxu0
    %v4515 = vpop.f32.mrb[0].mxu0
    %4516 = vdwg.mxu0
    %4517 = vmatprep.subr.bf16.mxu0 %v4387
    %4518 = vmatpush1.bf16.msra.mxu0 %v4386
    %4519 = vmatprep.subr.bf16.mxu0 %v4391
    %4520 = vmatpush1.bf16.msra.mxu0 %v4390
    %4521 = vmatprep.subr.bf16.mxu0 %v4395
    %4522 = vmatpush1.bf16.msra.mxu0 %v4394
    %4523 = vmatprep.subr.bf16.mxu0 %v4399
    %4524 = vmatpush1.bf16.msra.mxu0 %v4398
    %4525 = vmatprep.subr.bf16.mxu0 %v4403
    %4526 = vmatpush1.bf16.msra.mxu0 %v4402
    %4527 = vmatprep.subr.bf16.mxu0 %v4407
    %4528 = vmatpush1.bf16.msra.mxu0 %v4406
    %4529 = vmatprep.subr.bf16.mxu0 %v4411
    %4530 = vmatpush1.bf16.msra.mxu0 %v4410
    %4531 = vmatprep.subr.bf16.mxu0 %v4415
    %4532 = vmatpush1.bf16.msra.mxu0 %v4414
    %4533 = vmatprep.subr.bf16.mxu0 %v4419
    %4534 = vmatpush1.bf16.msra.mxu0 %v4418
    %4535 = vmatprep.subr.bf16.mxu0 %v4423
    %4536 = vmatpush1.bf16.msra.mxu0 %v4422
    %4537 = vmatprep.subr.bf16.mxu0 %v4427
    %4538 = vmatpush1.bf16.msra.mxu0 %v4426
    %4539 = vmatprep.subr.bf16.mxu0 %v4431
    %4540 = vmatpush1.bf16.msra.mxu0 %v4430
    %4541 = vmatprep.subr.bf16.mxu0 %v4435
    %4542 = vmatpush1.bf16.msra.mxu0 %v4434
    %4543 = vmatprep.subr.bf16.mxu0 %v4439
    %4544 = vmatpush1.bf16.msra.mxu0 %v4438
    %4545 = vmatprep.subr.bf16.mxu0 %v4443
    %4546 = vmatpush1.bf16.msra.mxu0 %v4442
    %4547 = vmatprep.subr.bf16.mxu0 %v4447
    %4548 = vmatpush1.bf16.msra.mxu0 %v4446
    %4549 = vmatprep.mubr.bf16.mxu0 %v4454
    %4550 = vmatmul.mubr.bf16.gmra.mrb[0].mxu0 %v4453
    %v4551 = vpop.f32.mrb[0].mxu0
    %v4552 = vadd.f32 %v4511, %v4551
    %v4553 = vpop.f32.mrb[0].mxu0
    %v4554 = vadd.f32 %v4513, %v4553
    %v4555 = vpop.f32.mrb[0].mxu0
    %v4556 = vpop.f32.mrb[0].mxu0
    %4557 = vdwg.mxu0
    %4558 = vmatprep.subr.bf16.mxu0 %v4325
    %4559 = vmatpush1.bf16.msra.mxu0 %v4324
    %4560 = vmatprep.subr.bf16.mxu0 %v4329
    %4561 = vmatpush1.bf16.msra.mxu0 %v4328
    %4562 = vmatprep.subr.bf16.mxu0 %v4333
    %4563 = vmatpush1.bf16.msra.mxu0 %v4332
    %4564 = vmatprep.subr.bf16.mxu0 %v4337
    %4565 = vmatpush1.bf16.msra.mxu0 %v4336
    %4566 = vmatprep.subr.bf16.mxu0 %v4341
    %4567 = vmatpush1.bf16.msra.mxu0 %v4340
    %4568 = vmatprep.subr.bf16.mxu0 %v4345
    %4569 = vmatpush1.bf16.msra.mxu0 %v4344
    %4570 = vmatprep.subr.bf16.mxu0 %v4349
    %4571 = vmatpush1.bf16.msra.mxu0 %v4348
    %4572 = vmatprep.subr.bf16.mxu0 %v4353
    %4573 = vmatpush1.bf16.msra.mxu0 %v4352
    %4574 = vmatprep.subr.bf16.mxu0 %v4357
    %4575 = vmatpush1.bf16.msra.mxu0 %v4356
    %4576 = vmatprep.subr.bf16.mxu0 %v4361
    %4577 = vmatpush1.bf16.msra.mxu0 %v4360
    %4578 = vmatprep.subr.bf16.mxu0 %v4365
    %4579 = vmatpush1.bf16.msra.mxu0 %v4364
    %4580 = vmatprep.subr.bf16.mxu0 %v4369
    %4581 = vmatpush1.bf16.msra.mxu0 %v4368
    %4582 = vmatprep.subr.bf16.mxu0 %v4373
    %4583 = vmatpush1.bf16.msra.mxu0 %v4372
    %4584 = vmatprep.subr.bf16.mxu0 %v4377
    %4585 = vmatpush1.bf16.msra.mxu0 %v4376
    %4586 = vmatprep.subr.bf16.mxu0 %v4381
    %4587 = vmatpush1.bf16.msra.mxu0 %v4380
    %4588 = vmatprep.subr.bf16.mxu0 %v4385
    %4589 = vmatpush1.bf16.msra.mxu0 %v4384
    %4590 = vmatprep.mubr.bf16.mxu0 %v4452
    %4591 = vmatmul.mubr.bf16.gmra.mrb[0].mxu0 %v4451
    %v4592 = vpop.f32.mrb[0].mxu0
    %v4593 = vadd.f32 %v4467, %v4592
    %v4594 = vpop.f32.mrb[0].mxu0
    %v4595 = vadd.f32 %v4471, %v4594
    %v4596 = vpop.f32.mrb[0].mxu0
    %v4597 = vpop.f32.mrb[0].mxu0
    %4598 = vdwg.mxu0
    %4599 = vmatprep.subr.bf16.mxu0 %v4389
    %4600 = vmatpush1.bf16.msra.mxu0 %v4388
    %4601 = vmatprep.subr.bf16.mxu0 %v4393
    %4602 = vmatpush1.bf16.msra.mxu0 %v4392
    %4603 = vmatprep.subr.bf16.mxu0 %v4397
    %4604 = vmatpush1.bf16.msra.mxu0 %v4396
    %4605 = vmatprep.subr.bf16.mxu0 %v4401
    %4606 = vmatpush1.bf16.msra.mxu0 %v4400
    %4607 = vmatprep.subr.bf16.mxu0 %v4405
    %4608 = vmatpush1.bf16.msra.mxu0 %v4404
    %4609 = vmatprep.subr.bf16.mxu0 %v4409
    %4610 = vmatpush1.bf16.msra.mxu0 %v4408
    %4611 = vmatprep.subr.bf16.mxu0 %v4413
    %4612 = vmatpush1.bf16.msra.mxu0 %v4412
    %4613 = vmatprep.subr.bf16.mxu0 %v4417
    %4614 = vmatpush1.bf16.msra.mxu0 %v4416
    %4615 = vmatprep.subr.bf16.mxu0 %v4421
    %4616 = vmatpush1.bf16.msra.mxu0 %v4420
    %4617 = vmatprep.subr.bf16.mxu0 %v4425
    %4618 = vmatpush1.bf16.msra.mxu0 %v4424
    %4619 = vmatprep.subr.bf16.mxu0 %v4429
    %4620 = vmatpush1.bf16.msra.mxu0 %v4428
    %4621 = vmatprep.subr.bf16.mxu0 %v4433
    %4622 = vmatpush1.bf16.msra.mxu0 %v4432
    %4623 = vmatprep.subr.bf16.mxu0 %v4437
    %4624 = vmatpush1.bf16.msra.mxu0 %v4436
    %4625 = vmatprep.subr.bf16.mxu0 %v4441
    %4626 = vmatpush1.bf16.msra.mxu0 %v4440
    %4627 = vmatprep.subr.bf16.mxu0 %v4445
    %4628 = vmatpush1.bf16.msra.mxu0 %v4444
    %4629 = vmatprep.subr.bf16.mxu0 %v4449
    %4630 = vmatpush1.bf16.msra.mxu0 %v4448
    %4631 = vmatprep.mubr.bf16.mxu0 %v4454
    %4632 = vmatmul.mubr.bf16.gmra.mrb[0].mxu0 %v4453
    %v4633 = vpop.f32.mrb[0].mxu0
    %v4634 = vadd.f32 %v4593, %v4633
    %v4635 = vpop.f32.mrb[0].mxu0
    %v4636 = vadd.f32 %v4595, %v4635
    %v4637 = vpop.f32.mrb[0].mxu0
    %v4638 = vpop.f32.mrb[0].mxu0
    %4639 = vdwg.mxu0
    %v4640 = vmax.f32 %v4552, 0.0
    %v4641 = vmax.f32 %v4554, 0.0
    %v4642 = vmax.f32 %v4634, 0.0
    %v4643 = vmax.f32 %v4636, 0.0
    %s4644 = smul.u32 %s318, 2
    %s4645 = sshll.u32 %s4644, 4
    %4646 = dma.done %s3075, %s4645
    %v4647 = vld [vmem:[#allocation9] sm:$0xff]
    %v4648 = vld [vmem:[#allocation9 + $0x8] sm:$0xff]
    %v4649 = vld [vmem:[#allocation9 + $0x10] sm:$0xff]
    %v4650 = vld [vmem:[#allocation9 + $0x18] sm:$0xff]
    %v4651 = vld [vmem:[#allocation9 + $0x20] sm:$0xff]
    %v4652 = vld [vmem:[#allocation9 + $0x28] sm:$0xff]
    %v4653 = vld [vmem:[#allocation9 + $0x30] sm:$0xff]
    %v4654 = vld [vmem:[#allocation9 + $0x38] sm:$0xff]
    %v4655 = vld [vmem:[#allocation9 + $0x40] sm:$0xff]
    %v4656 = vld [vmem:[#allocation9 + $0x48] sm:$0xff]
    %v4657 = vld [vmem:[#allocation9 + $0x50] sm:$0xff]
    %v4658 = vld [vmem:[#allocation9 + $0x58] sm:$0xff]
    %v4659 = vld [vmem:[#allocation9 + $0x60] sm:$0xff]
    %v4660 = vld [vmem:[#allocation9 + $0x68] sm:$0xff]
    %v4661 = vld [vmem:[#allocation9 + $0x70] sm:$0xff]
    %v4662 = vld [vmem:[#allocation9 + $0x78] sm:$0xff]
    %v4663 = vld [vmem:[#allocation9 + $0x80] sm:$0xff]
    %v4664 = vld [vmem:[#allocation9 + $0x88] sm:$0xff]
    %v4665 = vld [vmem:[#allocation9 + $0x90] sm:$0xff]
    %v4666 = vld [vmem:[#allocation9 + $0x98] sm:$0xff]
    %v4667 = vld [vmem:[#allocation9 + $0xa0] sm:$0xff]
    %v4668 = vld [vmem:[#allocation9 + $0xa8] sm:$0xff]
    %v4669 = vld [vmem:[#allocation9 + $0xb0] sm:$0xff]
    %v4670 = vld [vmem:[#allocation9 + $0xb8] sm:$0xff]
    %v4671 = vld [vmem:[#allocation9 + $0xc0] sm:$0xff]
    %v4672 = vld [vmem:[#allocation9 + $0xc8] sm:$0xff]
    %v4673 = vld [vmem:[#allocation9 + $0xd0] sm:$0xff]
    %v4674 = vld [vmem:[#allocation9 + $0xd8] sm:$0xff]
    %v4675 = vld [vmem:[#allocation9 + $0xe0] sm:$0xff]
    %v4676 = vld [vmem:[#allocation9 + $0xe8] sm:$0xff]
    %v4677 = vld [vmem:[#allocation9 + $0xf0] sm:$0xff]
    %v4678 = vld [vmem:[#allocation9 + $0xf8] sm:$0xff]
    %v4679 = vld [vmem:[#allocation9 + $0x100] sm:$0xff]
    %v4680 = vld [vmem:[#allocation9 + $0x108] sm:$0xff]
    %v4681 = vld [vmem:[#allocation9 + $0x110] sm:$0xff]
    %v4682 = vld [vmem:[#allocation9 + $0x118] sm:$0xff]
    %v4683 = vld [vmem:[#allocation9 + $0x120] sm:$0xff]
    %v4684 = vld [vmem:[#allocation9 + $0x128] sm:$0xff]
    %v4685 = vld [vmem:[#allocation9 + $0x130] sm:$0xff]
    %v4686 = vld [vmem:[#allocation9 + $0x138] sm:$0xff]
    %v4687 = vld [vmem:[#allocation9 + $0x140] sm:$0xff]
    %v4688 = vld [vmem:[#allocation9 + $0x148] sm:$0xff]
    %v4689 = vld [vmem:[#allocation9 + $0x150] sm:$0xff]
    %v4690 = vld [vmem:[#allocation9 + $0x158] sm:$0xff]
    %v4691 = vld [vmem:[#allocation9 + $0x160] sm:$0xff]
    %v4692 = vld [vmem:[#allocation9 + $0x168] sm:$0xff]
    %v4693 = vld [vmem:[#allocation9 + $0x170] sm:$0xff]
    %v4694 = vld [vmem:[#allocation9 + $0x178] sm:$0xff]
    %v4695 = vld [vmem:[#allocation9 + $0x180] sm:$0xff]
    %v4696 = vld [vmem:[#allocation9 + $0x188] sm:$0xff]
    %v4697 = vld [vmem:[#allocation9 + $0x190] sm:$0xff]
    %v4698 = vld [vmem:[#allocation9 + $0x198] sm:$0xff]
    %v4699 = vld [vmem:[#allocation9 + $0x1a0] sm:$0xff]
    %v4700 = vld [vmem:[#allocation9 + $0x1a8] sm:$0xff]
    %v4701 = vld [vmem:[#allocation9 + $0x1b0] sm:$0xff]
    %v4702 = vld [vmem:[#allocation9 + $0x1b8] sm:$0xff]
    %v4703 = vld [vmem:[#allocation9 + $0x1c0] sm:$0xff]
    %v4704 = vld [vmem:[#allocation9 + $0x1c8] sm:$0xff]
    %v4705 = vld [vmem:[#allocation9 + $0x1d0] sm:$0xff]
    %v4706 = vld [vmem:[#allocation9 + $0x1d8] sm:$0xff]
    %v4707 = vld [vmem:[#allocation9 + $0x1e0] sm:$0xff]
    %v4708 = vld [vmem:[#allocation9 + $0x1e8] sm:$0xff]
    %v4709 = vld [vmem:[#allocation9 + $0x1f0] sm:$0xff]
    %v4710 = vld [vmem:[#allocation9 + $0x1f8] sm:$0xff]
    %v4711 = vld [vmem:[%s1 + $0x31] sm:$0x3]
    %v4712 = vpack.c.bf16 %v4640, %v4640
    %v4713 = vpack.c.bf16 %v4641, %v4641
    %v4714 = vpack.c.bf16 %v4642, %v4642
    %v4715 = vpack.c.bf16 %v4643, %v4643
    %v4717 = vlaneseq
    %v4718 = vshrl.u32 %v4717, 7
    %v4719 = vsub.s32 0, %v4718
    %v4720 = vrot.slane %v4711, %v4719
    %v4721 = vlaneseq
    %v4722 = vshrl.u32 %v4721, 7
    %v4723 = vsub.s32 1, %v4722
    %v4724 = vrot.slane %v4711, %v4723
    %4727 = vmatprep.subr.bf16.mxu0 %v4648
    %4728 = vmatpush1.bf16.msra.mxu0 %v4647
    %4729 = vmatprep.subr.bf16.mxu0 %v4650
    %4730 = vmatpush1.bf16.msra.mxu0 %v4649
    %4731 = vmatprep.subr.bf16.mxu0 %v4652
    %4732 = vmatpush1.bf16.msra.mxu0 %v4651
    %4733 = vmatprep.subr.bf16.mxu0 %v4654
    %4734 = vmatpush1.bf16.msra.mxu0 %v4653
    %4735 = vmatprep.subr.bf16.mxu0 %v4656
    %4736 = vmatpush1.bf16.msra.mxu0 %v4655
    %4737 = vmatprep.subr.bf16.mxu0 %v4658
    %4738 = vmatpush1.bf16.msra.mxu0 %v4657
    %4739 = vmatprep.subr.bf16.mxu0 %v4660
    %4740 = vmatpush1.bf16.msra.mxu0 %v4659
    %4741 = vmatprep.subr.bf16.mxu0 %v4662
    %4742 = vmatpush1.bf16.msra.mxu0 %v4661
    %4743 = vmatprep.subr.bf16.mxu0 %v4664
    %4744 = vmatpush1.bf16.msra.mxu0 %v4663
    %4745 = vmatprep.subr.bf16.mxu0 %v4666
    %4746 = vmatpush1.bf16.msra.mxu0 %v4665
    %4747 = vmatprep.subr.bf16.mxu0 %v4668
    %4748 = vmatpush1.bf16.msra.mxu0 %v4667
    %4749 = vmatprep.subr.bf16.mxu0 %v4670
    %4750 = vmatpush1.bf16.msra.mxu0 %v4669
    %4751 = vmatprep.subr.bf16.mxu0 %v4672
    %4752 = vmatpush1.bf16.msra.mxu0 %v4671
    %4753 = vmatprep.subr.bf16.mxu0 %v4674
    %4754 = vmatpush1.bf16.msra.mxu0 %v4673
    %4755 = vmatprep.subr.bf16.mxu0 %v4676
    %4756 = vmatpush1.bf16.msra.mxu0 %v4675
    %4757 = vmatprep.subr.bf16.mxu0 %v4678
    %4758 = vmatpush1.bf16.msra.mxu0 %v4677
    %4759 = vmatprep.mubr.bf16.mxu0 %v4713
    %4760 = vmatmul.mubr.bf16.gmra.mrb[0].mxu0 %v4712
    %v4761 = vpop.f32.mrb[0].mxu0
    %v4762 = vadd.f32 %v4720, %v4761
    %v4763 = vpop.f32.mrb[0].mxu0
    %v4764 = vadd.f32 %v4724, %v4763
    %v4765 = vpop.f32.mrb[0].mxu0
    %v4766 = vpop.f32.mrb[0].mxu0
    %4767 = vdwg.mxu0
    %4768 = vmatprep.subr.bf16.mxu0 %v4680
    %4769 = vmatpush1.bf16.msra.mxu0 %v4679
    %4770 = vmatprep.subr.bf16.mxu0 %v4682
    %4771 = vmatpush1.bf16.msra.mxu0 %v4681
    %4772 = vmatprep.subr.bf16.mxu0 %v4684
    %4773 = vmatpush1.bf16.msra.mxu0 %v4683
    %4774 = vmatprep.subr.bf16.mxu0 %v4686
    %4775 = vmatpush1.bf16.msra.mxu0 %v4685
    %4776 = vmatprep.subr.bf16.mxu0 %v4688
    %4777 = vmatpush1.bf16.msra.mxu0 %v4687
    %4778 = vmatprep.subr.bf16.mxu0 %v4690
    %4779 = vmatpush1.bf16.msra.mxu0 %v4689
    %4780 = vmatprep.subr.bf16.mxu0 %v4692
    %4781 = vmatpush1.bf16.msra.mxu0 %v4691
    %4782 = vmatprep.subr.bf16.mxu0 %v4694
    %4783 = vmatpush1.bf16.msra.mxu0 %v4693
    %4784 = vmatprep.subr.bf16.mxu0 %v4696
    %4785 = vmatpush1.bf16.msra.mxu0 %v4695
    %4786 = vmatprep.subr.bf16.mxu0 %v4698
    %4787 = vmatpush1.bf16.msra.mxu0 %v4697
    %4788 = vmatprep.subr.bf16.mxu0 %v4700
    %4789 = vmatpush1.bf16.msra.mxu0 %v4699
    %4790 = vmatprep.subr.bf16.mxu0 %v4702
    %4791 = vmatpush1.bf16.msra.mxu0 %v4701
    %4792 = vmatprep.subr.bf16.mxu0 %v4704
    %4793 = vmatpush1.bf16.msra.mxu0 %v4703
    %4794 = vmatprep.subr.bf16.mxu0 %v4706
    %4795 = vmatpush1.bf16.msra.mxu0 %v4705
    %4796 = vmatprep.subr.bf16.mxu0 %v4708
    %4797 = vmatpush1.bf16.msra.mxu0 %v4707
    %4798 = vmatprep.subr.bf16.mxu0 %v4710
    %4799 = vmatpush1.bf16.msra.mxu0 %v4709
    %4800 = vmatprep.mubr.bf16.mxu0 %v4715
    %4801 = vmatmul.mubr.bf16.gmra.mrb[0].mxu0 %v4714
    %v4802 = vpop.f32.mrb[0].mxu0
    %v4803 = vadd.f32 %v4762, %v4802
    %v4804 = vpop.f32.mrb[0].mxu0
    %v4805 = vadd.f32 %v4764, %v4804
    %v4806 = vpop.f32.mrb[0].mxu0
    %v4807 = vpop.f32.mrb[0].mxu0
    %4808 = vdwg.mxu0
    %4809 = vst [vmem:[#allocation14] sm:$0xff] %v4803
    %4810 = vst [vmem:[#allocation14 + $0x8] sm:$0xff] %v4805
    // Predicated region
    $region18: #{ae_forward.1} parent=1 // pred_check
      _
    $region19: #{ae_forward.1} parent=1 // pred_check_branch
      %4812 = sbr.rel (0) target = $region21
    $region20: #{ae_forward.1} parent=1 // pred_region
      %s4814 = ssub.s32 256, 256
      %4815 = vsyncadd [#allocation13], %s4814
      %s4817 = sshll.u32 [#allocation14], 4
      %s4818 = int_to_ptr.vmem [resolvable:$true] %s4817
      %4820 = dma.vmem_to_hbm [thread:$0]  %s4818, 256, %s10, [#allocation13]
    $region21: #{ae_forward.1} parent=1 // pred_fallthru
      _
    // Predicated region
    $region22: #{ae_forward.1} parent=1 // pred_check
      _
    $region23: #{ae_forward.1} parent=1 // pred_check_branch
      %4822 = sbr.rel (0) target = $region25
    $region24: #{ae_forward.1} parent=1 // pred_region
      %4823 = dma.done [#allocation13], 256
    $region25: #{ae_forward.1} parent=1 // pred_fallthru
      _
    %4824 = vsyncpa [#allocation12], 1
    %4825 = vsyncpa [#allocation13], 1
  %4826 = vsyncmov [#allocation10]
  %s4827 = vpop.sfrf %4826
  %p4828 = scmp.eq.s32.totalorder %s4827, 0
  %p4829 = pneg %p4828
  %4831 = shalt.err (%p4829)
  %s4832 = scalar_lea.sflag [#allocation10], 1
  %4833 = vsyncmov %s4832
  %s4834 = vpop.sfrf %4833
  %p4835 = scmp.eq.s32.totalorder %s4834, 0
  %p4836 = pneg %p4835
  %4838 = shalt.err (%p4836)
  %s4839 = scalar_lea.sflag [#allocation10], 2
  %4840 = vsyncmov %s4839
  %s4841 = vpop.sfrf %4840
  %p4842 = scmp.eq.s32.totalorder %s4841, 0
  %p4843 = pneg %p4842
  %4845 = shalt.err (%p4843)
  %s4846 = scalar_lea.sflag [#allocation10], 3
  %4847 = vsyncmov %s4846
  %s4848 = vpop.sfrf %4847
  %p4849 = scmp.eq.s32.totalorder %s4848, 0
  %p4850 = pneg %p4849
  %4852 = shalt.err (%p4850)
  %s4853 = scalar_lea.sflag [#allocation10], 4
  %4854 = vsyncmov %s4853
  %s4855 = vpop.sfrf %4854
  %p4856 = scmp.eq.s32.totalorder %s4855, 0
  %p4857 = pneg %p4856
  %4859 = shalt.err (%p4857)
  %s4860 = scalar_lea.sflag [#allocation10], 5
  %4861 = vsyncmov %s4860
  %s4862 = vpop.sfrf %4861
  %p4863 = scmp.eq.s32.totalorder %s4862, 0
  %p4864 = pneg %p4863
  %4866 = shalt.err (%p4864)
  %s4867 = scalar_lea.sflag [#allocation10], 6
  %4868 = vsyncmov %s4867
  %s4869 = vpop.sfrf %4868
  %p4870 = scmp.eq.s32.totalorder %s4869, 0
  %p4871 = pneg %p4870
  %4873 = shalt.err (%p4871)
  %s4874 = scalar_lea.sflag [#allocation10], 7
  %4875 = vsyncmov %s4874
  %s4876 = vpop.sfrf %4875
  %p4877 = scmp.eq.s32.totalorder %s4876, 0
  %p4878 = pneg %p4877
  %4880 = shalt.err (%p4878)

</llo_original>
